<compile_context>
chip_gen: v5e
topology: v5e:2x2
jax: 0.10.0
libtpu: 0.0.40
codegen_flags: <defaults>
</compile_context>

<pallas_src>
import functools

import jax
import jax.numpy as jnp
from jax import lax
from jax.experimental import pallas as pl
from jax.experimental.pallas import tpu as pltpu


# ----------------------------------------------------------------------------
# small in-kernel helpers
# ----------------------------------------------------------------------------
def _bf16(a):
    return a.astype(jnp.bfloat16)


def _layernorm(z, g, b, eps=1e-5):
    mu = jnp.mean(z, axis=-1, keepdims=True)
    var = jnp.mean(jnp.square(z - mu), axis=-1, keepdims=True)
    return (z - mu) * lax.rsqrt(var + eps) * g + b


def _mm(a, w_bf16):
    """(M, K) @ (K, N) -> (M, N): bf16 MXU inputs, f32 accumulation."""
    return jnp.dot(_bf16(a), w_bf16, preferred_element_type=jnp.float32)


def _bmm(a, b):      # (B, M, K) @ (B, K, N) -> (B, M, N)
    return lax.dot_general(_bf16(a), _bf16(b), (((2,), (1,)), ((0,), (0,))),
                           preferred_element_type=jnp.float32)


def _bmm_nt(a, b):   # (B, M, K) @ (B, N, K)^T -> (B, M, N)
    return lax.dot_general(_bf16(a), _bf16(b), (((2,), (2,)), ((0,), (0,))),
                           preferred_element_type=jnp.float32)


# ----------------------------------------------------------------------------
# Fused kernel: ConceptISA + CrossAttention head for one (batch block, branch)
# ----------------------------------------------------------------------------
def _ccf_kernel(x_ref, s0_ref,
                lnin_g_ref, lnin_b_ref, wkv_ref,
                lns_g_ref, lns_b_ref, wq_ref,
                wgru_ref, bgru_ref,
                lnm_g_ref, lnm_b_ref, w1_ref, b1_ref, w2_ref, b2_ref,
                pos_ref,
                cwq_ref, cwkv_ref, cwp_ref, cbp_ref,
                out_ref, attn_ref,
                *, n_slots, num_heads, num_iterations):
    Bb, N, D = x_ref.shape
    S_pad = s0_ref.shape[2]
    H = num_heads
    hd = D // H
    eps = 1e-8

    # ---- hoisted parameter loads (per grid step; weights arrive as bf16) ----
    g_in, b_in = lnin_g_ref[0], lnin_b_ref[0]
    g_s, b_s = lns_g_ref[0], lns_b_ref[0]
    g_m, b_m = lnm_g_ref[0], lnm_b_ref[0]
    b_gru = bgru_ref[0]
    bias1, bias2 = b1_ref[0], b2_ref[0]
    b_proj = cbp_ref[0]

    w_kv = wkv_ref[0]        # (D, 2D)   [w_k * D^-0.5 | w_v]
    w_q = wq_ref[0]          # (D, D)
    w_gru = wgru_ref[0]      # (2D, 4D)  fused GRU gates [rz | n_i | n_h]
    w_1 = w1_ref[0]          # (D, Hm)
    w_2 = w2_ref[0]          # (Hm, D)
    w_p = cwp_ref[0]         # (D, C)

    # masks for the padded slot rows (slot axis padded to a sublane multiple)
    isa_mask = jnp.where(
        lax.broadcasted_iota(jnp.int32, (1, S_pad, 1), 1) < n_slots, 0.0, -1e30)
    ct_mask = jnp.where(
        lax.broadcasted_iota(jnp.int32, (1, 1, S_pad), 2) < n_slots, 0.0, -1e30)

    # ---- token-side features: flattened 2-D matmuls, computed once ---------
    x_flat = x_ref[...].reshape(Bb * N, D).astype(jnp.float32)
    xn = _layernorm(x_flat, g_in, b_in)
    kv = _mm(xn, w_kv)                                   # (Bb*N, 2D)
    k3 = kv[:, :D].reshape(Bb, N, D)                     # scale already folded in
    v3 = kv[:, D:].reshape(Bb, N, D)

    # ---- ConceptISA: num_iterations (+1 implicit) slot-attention steps -----
    def isa_step(_, slots_flat):                         # slots_flat: (Bb*S_pad, D)
        sn = _layernorm(slots_flat, g_s, b_s)
        q = _mm(sn, w_q).reshape(Bb, S_pad, D)
        logits = _bmm_nt(q, k3) + isa_mask               # (Bb, S_pad, N)
        logits = logits - jnp.max(logits, axis=1, keepdims=True)
        e = jnp.exp(logits)
        attn = e * pl.reciprocal(jnp.sum(e, axis=1, keepdims=True), approx=True)
        a = attn + eps
        a = a / jnp.sum(a, axis=2, keepdims=True)        # exact (tiny denominators)
        upd_flat = _bmm(a, v3).reshape(Bb * S_pad, D)

        # fused GRUCell (PyTorch gate order r, z, n)
        xs = jnp.concatenate([upd_flat, slots_flat], axis=-1)      # (M, 2D)
        pre = _mm(xs, w_gru) + b_gru                                # (M, 4D)
        r = jax.nn.sigmoid(pre[:, :D])
        zg = jax.nn.sigmoid(pre[:, D:2 * D])
        ng = jnp.tanh(pre[:, 2 * D:3 * D] + r * pre[:, 3 * D:])
        new = (1.0 - zg) * ng + zg * slots_flat

        # residual MLP
        sm = _layernorm(new, g_m, b_m)
        h1 = jnp.maximum(_mm(sm, w_1) + bias1, 0.0)
        return new + _mm(h1, w_2) + bias2

    slots0 = s0_ref[0].astype(jnp.float32).reshape(Bb * S_pad, D)
    n_steps = num_iterations + 1
    slots_flat = lax.fori_loop(0, n_steps, isa_step, slots0,
                               unroll=bool(n_steps <= 2))

    # ---- CrossAttention (concept-transformer head) --------------------------
    concepts = slots_flat.reshape(Bb, S_pad, D) + pos_ref[0].astype(jnp.float32)
    concepts_flat = concepts.reshape(Bb * S_pad, D)

    attn_sum = jnp.zeros((Bb, N, S_pad), jnp.float32)
    ctx_parts = []
    for h in range(H):                                   # small static head loop
        q_h = _mm(x_flat, cwq_ref[0, h]).reshape(Bb, N, hd)         # scale folded
        kv_h = _mm(concepts_flat, cwkv_ref[0, h])                    # (Bb*S_pad, 2hd)
        k_h = kv_h[:, :hd].reshape(Bb, S_pad, hd)
        v_h = kv_h[:, hd:].reshape(Bb, S_pad, hd)
        lg = _bmm_nt(q_h, k_h) + ct_mask                             # (Bb, N, S_pad)
        lg = lg - jnp.max(lg, axis=-1, keepdims=True)
        e = jnp.exp(lg)
        attn_h = e * pl.reciprocal(jnp.sum(e, axis=-1, keepdims=True), approx=True)
        attn_sum = attn_sum + attn_h
        ctx_h = _bmm(attn_h, v_h)                                    # (Bb, N, hd)
        ctx_parts.append(jnp.mean(ctx_h, axis=1))                    # (Bb, hd)

    # class logits: project the token-mean context once (K = D)
    ctx_mean = jnp.concatenate(ctx_parts, axis=-1)                   # (Bb, D)
    out2 = _mm(ctx_mean, w_p) + b_proj                               # (Bb, C)
    out_ref[0, :, 0, :] = out2

    # head-mean attention map, stored transposed so tokens sit on the lane axis
    attn_ref[0] = jnp.swapaxes(attn_sum, 1, 2) * (1.0 / float(H))    # (Bb,S_pad,N)


# ----------------------------------------------------------------------------
# Batch-block / VMEM sizing (generation-aware)
# ----------------------------------------------------------------------------
def _pick_batch_block(B, N, D, S_pad, C, Hm, H, nb):
    try:
        phys = int(pltpu.get_tpu_info().vmem_capacity_bytes)
    except Exception:
        phys = 64 * 1024 * 1024                 # conservative (v7x per-core VMEM)
    vmem_limit = int(min(phys // 2, 100 * 1024 * 1024))
    budget = int(vmem_limit * 0.75)

    hd = D // H
    f32, bf16 = 4, 2
    # per-branch weights (double-buffered by the pipeline)
    w_bytes = 2 * (bf16 * (D * 2 * D + D * D + 2 * D * 4 * D + D * Hm + Hm * D
                           + H * D * 3 * hd + D * C)
                   + f32 * (6 * D + 4 * D + Hm + D + C + S_pad * D))

    def need(bb):
        io = 2 * f32 * bb * (N * D + S_pad * D + S_pad * N + C)   # dbl-buffered blocks
        live = f32 * bb * (N * (6 * D + 3 * S_pad) + S_pad * 12 * D)
        return io + live + w_bytes

    divisors = [d for d in range(B, 0, -1) if B % d == 0]
    bb = 1
    for d in divisors:
        if need(d) <= budget:
            bb = d
            break
    # keep the (small) parallel grid even so both v7x TensorCores get work
    if ((B // bb) * nb) % 2 == 1 and (B // bb) * nb < 8 and bb > 1:
        for d in divisors:
            if d < bb:
                bb = d
                break
    return bb, vmem_limit


# ----------------------------------------------------------------------------
# Wrapper: one pallas_call over grid (n_batch_blocks, n_branches)
# ----------------------------------------------------------------------------
def fused_branch_forward(x, s0, pos, isa, ct, *, num_heads, num_iterations):
    B, N, D = x.shape
    nb, _, S, _ = s0.shape
    C = ct["w_proj"].shape[2]
    Hm = isa["mlp_w1"].shape[2]
    H = num_heads
    hd = D // H
    S_pad = ((S + 7) // 8) * 8               # pad slot axis to a sublane multiple

    if S_pad != S:
        s0 = jnp.pad(s0, ((0, 0), (0, 0), (0, S_pad - S), (0, 0)))
        pos = jnp.pad(pos, ((0, 0), (0, S_pad - S), (0, 0)))

    bf16 = jnp.bfloat16

    # ---- fused / pre-scaled weights, built once at trace time --------------
    w_kv = jnp.concatenate([isa["w_k"] * (float(D) ** -0.5), isa["w_v"]],
                           axis=-1).astype(bf16)                     # (nb, D, 2D)

    Wi, Wh = isa["gru_w_ih"], isa["gru_w_hh"]
    bi, bh = isa["gru_b_ih"], isa["gru_b_hh"]
    zpad = jnp.zeros_like(Wi[..., :D])
    w_gru = jnp.concatenate(
        [jnp.concatenate([Wi[..., :2 * D], Wi[..., 2 * D:], zpad], axis=-1),
         jnp.concatenate([Wh[..., :2 * D], zpad, Wh[..., 2 * D:]], axis=-1)],
        axis=-2).astype(bf16)                                        # (nb, 2D, 4D)
    b_gru = jnp.concatenate(
        [bi[..., :2 * D] + bh[..., :2 * D], bi[..., 2 * D:], bh[..., 2 * D:]],
        axis=-1)                                                     # (nb, 1, 4D)

    def split_heads(w):                      # (nb, D, D) -> (nb, H, D, hd)
        return jnp.transpose(w.reshape(nb, D, H, hd), (0, 2, 1, 3))
    cwq = (split_heads(ct["w_q"]) * (float(hd) ** -0.5)).astype(bf16)   # (nb,H,D,hd)
    cwkv = jnp.concatenate([split_heads(ct["w_k"]), split_heads(ct["w_v"])],
                           axis=-1).astype(bf16)                        # (nb,H,D,2hd)

    Bb, vmem_limit = _pick_batch_block(B, N, D, S_pad, C, Hm, H, nb)
    n_bb = B // Bb

    kernel = functools.partial(_ccf_kernel, n_slots=S, num_heads=H,
                               num_iterations=num_iterations)
    wmap3 = lambda bb, br: (br, 0, 0)
    wmap4 = lambda bb, br: (br, 0, 0, 0)

    out_raw, attn_raw = pl.pallas_call(
        kernel,
        out_shape=(jax.ShapeDtypeStruct((nb, B, 1, C), jnp.float32),
                   jax.ShapeDtypeStruct((nb, B, S_pad, N), jnp.float32)),
        grid_spec=pltpu.PrefetchScalarGridSpec(
            num_scalar_prefetch=0,
            grid=(n_bb, nb),          # batch blocks outer -> x stays resident
            in_specs=[
                pl.BlockSpec((Bb, N, D), lambda bb, br: (bb, 0, 0)),        # x
                pl.BlockSpec((1, Bb, S_pad, D), lambda bb, br: (br, bb, 0, 0)),
                pl.BlockSpec((1, 1, D), wmap3),          # ln_in gamma
                pl.BlockSpec((1, 1, D), wmap3),          # ln_in beta
                pl.BlockSpec((1, D, 2 * D), wmap3),      # fused [w_k|w_v]
                pl.BlockSpec((1, 1, D), wmap3),          # ln_slots gamma
                pl.BlockSpec((1, 1, D), wmap3),          # ln_slots beta
                pl.BlockSpec((1, D, D), wmap3),          # slot w_q
                pl.BlockSpec((1, 2 * D, 4 * D), wmap3),  # fused GRU weight
                pl.BlockSpec((1, 1, 4 * D), wmap3),      # fused GRU bias
                pl.BlockSpec((1, 1, D), wmap3),          # ln_mlp gamma
                pl.BlockSpec((1, 1, D), wmap3),          # ln_mlp beta
                pl.BlockSpec((1, D, Hm), wmap3),         # mlp w1
                pl.BlockSpec((1, 1, Hm), wmap3),         # mlp b1
                pl.BlockSpec((1, Hm, D), wmap3),         # mlp w2
                pl.BlockSpec((1, 1, D), wmap3),          # mlp b2
                pl.BlockSpec((1, S_pad, D), wmap3),      # slot positional emb
                pl.BlockSpec((1, H, D, hd), wmap4),      # ct per-head w_q (scaled)
                pl.BlockSpec((1, H, D, 2 * hd), wmap4),  # ct per-head [w_k|w_v]
                pl.BlockSpec((1, D, C), wmap3),          # ct w_proj
                pl.BlockSpec((1, 1, C), wmap3),          # ct b_proj
            ],
            out_specs=[
                pl.BlockSpec((1, Bb, 1, C), lambda bb, br: (br, bb, 0, 0)),
                pl.BlockSpec((1, Bb, S_pad, N), lambda bb, br: (br, bb, 0, 0)),
            ]),
        compiler_params=pltpu.CompilerParams(
            dimension_semantics=("parallel", "parallel"),
            vmem_limit_bytes=vmem_limit),
    )(x, s0,
      isa["ln_in_g"], isa["ln_in_b"], w_kv,
      isa["ln_s_g"], isa["ln_s_b"], isa["w_q"].astype(bf16),
      w_gru, b_gru,
      isa["ln_m_g"], isa["ln_m_b"],
      isa["mlp_w1"].astype(bf16), isa["mlp_b1"],
      isa["mlp_w2"].astype(bf16), isa["mlp_b2"],
      pos,
      cwq, cwkv, ct["w_proj"].astype(bf16), ct["b_proj"])

    out_b = out_raw[:, :, 0, :]                          # (nb, B, C)
    attn_b = jnp.swapaxes(attn_raw, 2, 3)[..., :S]       # (nb, B, N, S)
    return out_b, attn_b


# ----------------------------------------------------------------------------
# Deterministic parameter construction (synthetic, no checkpoint)
# ----------------------------------------------------------------------------
def _xavier(key, shape):
    fan_in, fan_out = shape
    lim = (6.0 / (fan_in + fan_out)) ** 0.5
    return jax.random.uniform(key, shape, jnp.float32, -lim, lim)


def _isa_params(key, D):
    Hm = D  # mlp_hidden_size == embedding_dim
    ks = jax.random.split(key, 7)
    return dict(
        ln_in_g=jnp.ones((1, D), jnp.float32), ln_in_b=jnp.zeros((1, D), jnp.float32),
        w_k=_xavier(ks[0], (D, D)), w_v=_xavier(ks[1], (D, D)), w_q=_xavier(ks[2], (D, D)),
        ln_s_g=jnp.ones((1, D), jnp.float32), ln_s_b=jnp.zeros((1, D), jnp.float32),
        gru_w_ih=_xavier(ks[3], (D, 3 * D)), gru_w_hh=_xavier(ks[4], (D, 3 * D)),
        gru_b_ih=jnp.zeros((1, 3 * D), jnp.float32), gru_b_hh=jnp.zeros((1, 3 * D), jnp.float32),
        ln_m_g=jnp.ones((1, D), jnp.float32), ln_m_b=jnp.zeros((1, D), jnp.float32),
        mlp_w1=_xavier(ks[5], (D, Hm)), mlp_b1=jnp.zeros((1, Hm), jnp.float32),
        mlp_w2=_xavier(ks[6], (Hm, D)), mlp_b2=jnp.zeros((1, D), jnp.float32),
    )


def _cross_attn_params(key, D, num_classes):
    ks = jax.random.split(key, 4)
    return dict(
        w_q=_xavier(ks[0], (D, D)), w_k=_xavier(ks[1], (D, D)), w_v=_xavier(ks[2], (D, D)),
        w_proj=_xavier(ks[3], (D, num_classes)),
        b_proj=jnp.zeros((1, num_classes), jnp.float32),
    )


def init_model(key, *, embedding_dim, num_classes, n_unsup, n_concepts, n_spatial):
    D = embedding_dim
    ks = jax.random.split(key, 10)
    return dict(
        unsup_isa=_isa_params(ks[0], D),
        unsup_pos=jnp.zeros((1, 1, n_unsup * D), jnp.float32),
        unsup_ct=_cross_attn_params(ks[1], D, num_classes),   # defined, unused (as in ref)
        unsup_default_slots=_xavier(ks[2], (n_unsup, D)),
        concept_slots_init=_xavier(ks[3], (n_concepts, D)),
        concept_isa=_isa_params(ks[4], D),
        concept_pos=jnp.zeros((1, 1, n_concepts * D), jnp.float32),
        concept_ct=_cross_attn_params(ks[5], D, num_classes),
        spatial_slots_init=_xavier(ks[6], (n_spatial, D)),
        spatial_isa=_isa_params(ks[7], D),
        spatial_pos=jnp.zeros((1, 1, n_spatial * D), jnp.float32),  # never added (as in ref)
        spatial_ct=_cross_attn_params(ks[8], D, num_classes),
    )


# ----------------------------------------------------------------------------
# Forward pass (mirrors ConceptCentricTransformerSwinISA.forward, eval mode)
# ----------------------------------------------------------------------------
def forward(params, x, *, num_heads, num_iterations,
            n_unsup, n_concepts, n_spatial, sigma=0.0, noise_key=None):
    B, N, D = x.shape
    if noise_key is None:
        noise_key = jax.random.PRNGKey(1)
    k1, k2 = jax.random.split(noise_key)

    branches = []  # (tag, isa_params, ct_params, slots_init (B,S,D), pos (S,D))
    if n_unsup > 0:
        s0 = jnp.broadcast_to(params["unsup_default_slots"][None], (B, n_unsup, D))
        pos = params["unsup_pos"].reshape(n_unsup, D)
        # NOTE: reference forward uses self.concept_tranformer here (bug reproduced).
        branches.append(("unsup", params["unsup_isa"], params["concept_ct"], s0, pos))
    if n_concepts > 0:
        mu = jnp.broadcast_to(params["concept_slots_init"][None], (B, n_concepts, D))
        z = jax.random.normal(k1, mu.shape, jnp.float32)
        s0 = mu + z * sigma * mu
        pos = params["concept_pos"].reshape(n_concepts, D)
        branches.append(("concept", params["concept_isa"], params["concept_ct"], s0, pos))
    if n_spatial > 0:
        mu = jnp.broadcast_to(params["spatial_slots_init"][None], (B, n_spatial, D))
        z = jax.random.normal(k2, mu.shape, jnp.float32)
        s0 = mu + z * sigma * mu
        pos = jnp.zeros((n_spatial, D), jnp.float32)   # spatial pos not added in reference
        branches.append(("spatial", params["spatial_isa"], params["spatial_ct"], s0, pos))

    if not branches:
        return 0.0, None, None, None

    assert len({br[3].shape[1] for br in branches}) == 1, \
        "fused kernel requires equal slot counts per branch"

    isa_keys = ["ln_in_g", "ln_in_b", "w_k", "w_v", "ln_s_g", "ln_s_b", "w_q",
                "gru_w_ih", "gru_w_hh", "gru_b_ih", "gru_b_hh",
                "ln_m_g", "ln_m_b", "mlp_w1", "mlp_b1", "mlp_w2", "mlp_b2"]
    ct_keys = ["w_q", "w_k", "w_v", "w_proj", "b_proj"]
    isa_stacked = {k: jnp.stack([br[1][k] for br in branches]) for k in isa_keys}
    ct_stacked = {k: jnp.stack([br[2][k] for br in branches]) for k in ct_keys}
    s0_stacked = jnp.stack([br[3] for br in branches])      # (nb, B, S, D)
    pos_stacked = jnp.stack([br[4] for br in branches])     # (nb, S, D)

    out_b, attn_b = fused_branch_forward(
        x, s0_stacked, pos_stacked, isa_stacked, ct_stacked,
        num_heads=num_heads, num_iterations=num_iterations)

    out = jnp.sum(out_b, axis=0)                             # (B, num_classes)
    attn_by_tag = {br[0]: attn_b[i] for i, br in enumerate(branches)}
    unsup_attn = attn_by_tag.get("unsup")                    # (B, N, S) head-mean
    concept_attn = attn_by_tag.get("concept")
    spatial_attn = attn_by_tag.get("spatial")
    if concept_attn is not None:
        concept_attn = concept_attn.mean(axis=1)             # extra token-mean -> (B, S)
    return out, unsup_attn, concept_attn, spatial_attn


# ----------------------------------------------------------------------------
if __name__ == "__main__":
    # Small deterministic config consistent with the module's forward.
    B, N, D = 2, 64, 32
    num_classes, num_heads, num_iterations = 10, 2, 1
    n_unsup = n_concepts = n_spatial = 10

    key = jax.random.PRNGKey(0)
    k_params, k_x = jax.random.split(key)
    params = init_model(k_params, embedding_dim=D, num_classes=num_classes,
                        n_unsup=n_unsup, n_concepts=n_concepts, n_spatial=n_spatial)
    x = jax.random.normal(k_x, (B, N, D), jnp.float32)

    out, unsup_attn, concept_attn, spatial_attn = forward(
        params, x, num_heads=num_heads, num_iterations=num_iterations,
        n_unsup=n_unsup, n_concepts=n_concepts, n_spatial=n_spatial, sigma=0.0)

    jax.block_until_ready((out, unsup_attn, concept_attn, spatial_attn))
    assert out.shape == (B, num_classes)
    assert unsup_attn.shape == (B, N, n_unsup)
    assert concept_attn.shape == (B, n_concepts)
    assert spatial_attn.shape == (B, N, n_spatial)
    assert bool(jnp.all(jnp.isfinite(out)))
    assert bool(jnp.all(jnp.isfinite(unsup_attn)))
    assert bool(jnp.all(jnp.isfinite(concept_attn)))
    assert bool(jnp.all(jnp.isfinite(spatial_attn)))
    print("KERNEL_OK")
</pallas_src>

<mosaic_0001>
module attributes {stable_mosaic.version = 11 : i64} {
  func.func @_ccf_kernel(%arg0: i32, %arg1: i32, %arg2: memref<1x64x32xf32, #tpu.memory_space<vmem>>, %arg3: memref<1x1x16x32xf32, #tpu.memory_space<vmem>>, %arg4: memref<1x1x32xf32, #tpu.memory_space<vmem>>, %arg5: memref<1x1x32xf32, #tpu.memory_space<vmem>>, %arg6: memref<1x32x64xbf16, #tpu.memory_space<vmem>>, %arg7: memref<1x1x32xf32, #tpu.memory_space<vmem>>, %arg8: memref<1x1x32xf32, #tpu.memory_space<vmem>>, %arg9: memref<1x32x32xbf16, #tpu.memory_space<vmem>>, %arg10: memref<1x64x128xbf16, #tpu.memory_space<vmem>>, %arg11: memref<1x1x128xf32, #tpu.memory_space<vmem>>, %arg12: memref<1x1x32xf32, #tpu.memory_space<vmem>>, %arg13: memref<1x1x32xf32, #tpu.memory_space<vmem>>, %arg14: memref<1x32x32xbf16, #tpu.memory_space<vmem>>, %arg15: memref<1x1x32xf32, #tpu.memory_space<vmem>>, %arg16: memref<1x32x32xbf16, #tpu.memory_space<vmem>>, %arg17: memref<1x1x32xf32, #tpu.memory_space<vmem>>, %arg18: memref<1x16x32xf32, #tpu.memory_space<vmem>>, %arg19: memref<1x2x32x16xbf16, #tpu.memory_space<vmem>>, %arg20: memref<1x2x32x32xbf16, #tpu.memory_space<vmem>>, %arg21: memref<1x32x10xbf16, #tpu.memory_space<vmem>>, %arg22: memref<1x1x10xf32, #tpu.memory_space<vmem>>, %arg23: memref<1x1x1x10xf32, #tpu.memory_space<vmem>>, %arg24: memref<1x1x16x64xf32, #tpu.memory_space<vmem>>) attributes {dimension_semantics = [#tpu.dimension_semantics<parallel>, #tpu.dimension_semantics<parallel>], iteration_bounds = array<i64: 2, 3>, scalar_prefetch = 0 : i64, scratch_operands = 0 : i64, tpu.core_type = #tpu.core_type<tc>, window_params = [{transform_indices = @transform_0, window_bounds = array<i64: 1, 64, 32>}, {transform_indices = @transform_1, window_bounds = array<i64: 1, 1, 16, 32>}, {transform_indices = @transform_2, window_bounds = array<i64: 1, 1, 32>}, {transform_indices = @transform_3, window_bounds = array<i64: 1, 1, 32>}, {transform_indices = @transform_4, window_bounds = array<i64: 1, 32, 64>}, {transform_indices = @transform_5, window_bounds = array<i64: 1, 1, 32>}, {transform_indices = @transform_6, window_bounds = array<i64: 1, 1, 32>}, {transform_indices = @transform_7, window_bounds = array<i64: 1, 32, 32>}, {transform_indices = @transform_8, window_bounds = array<i64: 1, 64, 128>}, {transform_indices = @transform_9, window_bounds = array<i64: 1, 1, 128>}, {transform_indices = @transform_10, window_bounds = array<i64: 1, 1, 32>}, {transform_indices = @transform_11, window_bounds = array<i64: 1, 1, 32>}, {transform_indices = @transform_12, window_bounds = array<i64: 1, 32, 32>}, {transform_indices = @transform_13, window_bounds = array<i64: 1, 1, 32>}, {transform_indices = @transform_14, window_bounds = array<i64: 1, 32, 32>}, {transform_indices = @transform_15, window_bounds = array<i64: 1, 1, 32>}, {transform_indices = @transform_16, window_bounds = array<i64: 1, 16, 32>}, {transform_indices = @transform_17, window_bounds = array<i64: 1, 2, 32, 16>}, {transform_indices = @transform_18, window_bounds = array<i64: 1, 2, 32, 32>}, {transform_indices = @transform_19, window_bounds = array<i64: 1, 32, 10>}, {transform_indices = @transform_20, window_bounds = array<i64: 1, 1, 10>}, {transform_indices = @transform_21, window_bounds = array<i64: 1, 1, 1, 10>}, {transform_indices = @transform_22, window_bounds = array<i64: 1, 1, 16, 64>}]} {
    %c0 = arith.constant 0 : index
    %c0_0 = arith.constant 0 : index
    %c0_1 = arith.constant 0 : index
    %0 = vector.load %arg4[%c0, %c0_0, %c0_1] : memref<1x1x32xf32, #tpu.memory_space<vmem>>, vector<1x1x32xf32>
    %1 = vector.shape_cast %0 : vector<1x1x32xf32> to vector<1x32xf32>
    %c0_2 = arith.constant 0 : index
    %c0_3 = arith.constant 0 : index
    %c0_4 = arith.constant 0 : index
    %2 = vector.load %arg5[%c0_2, %c0_3, %c0_4] : memref<1x1x32xf32, #tpu.memory_space<vmem>>, vector<1x1x32xf32>
    %3 = vector.shape_cast %2 : vector<1x1x32xf32> to vector<1x32xf32>
    %c0_5 = arith.constant 0 : index
    %c0_6 = arith.constant 0 : index
    %c0_7 = arith.constant 0 : index
    %4 = vector.load %arg7[%c0_5, %c0_6, %c0_7] : memref<1x1x32xf32, #tpu.memory_space<vmem>>, vector<1x1x32xf32>
    %5 = vector.shape_cast %4 : vector<1x1x32xf32> to vector<1x32xf32>
    %c0_8 = arith.constant 0 : index
    %c0_9 = arith.constant 0 : index
    %c0_10 = arith.constant 0 : index
    %6 = vector.load %arg8[%c0_8, %c0_9, %c0_10] : memref<1x1x32xf32, #tpu.memory_space<vmem>>, vector<1x1x32xf32>
    %7 = vector.shape_cast %6 : vector<1x1x32xf32> to vector<1x32xf32>
    %c0_11 = arith.constant 0 : index
    %c0_12 = arith.constant 0 : index
    %c0_13 = arith.constant 0 : index
    %8 = vector.load %arg12[%c0_11, %c0_12, %c0_13] : memref<1x1x32xf32, #tpu.memory_space<vmem>>, vector<1x1x32xf32>
    %9 = vector.shape_cast %8 : vector<1x1x32xf32> to vector<1x32xf32>
    %c0_14 = arith.constant 0 : index
    %c0_15 = arith.constant 0 : index
    %c0_16 = arith.constant 0 : index
    %10 = vector.load %arg13[%c0_14, %c0_15, %c0_16] : memref<1x1x32xf32, #tpu.memory_space<vmem>>, vector<1x1x32xf32>
    %11 = vector.shape_cast %10 : vector<1x1x32xf32> to vector<1x32xf32>
    %c0_17 = arith.constant 0 : index
    %c0_18 = arith.constant 0 : index
    %c0_19 = arith.constant 0 : index
    %12 = vector.load %arg11[%c0_17, %c0_18, %c0_19] : memref<1x1x128xf32, #tpu.memory_space<vmem>>, vector<1x1x128xf32>
    %13 = vector.shape_cast %12 : vector<1x1x128xf32> to vector<1x128xf32>
    %c0_20 = arith.constant 0 : index
    %c0_21 = arith.constant 0 : index
    %c0_22 = arith.constant 0 : index
    %14 = vector.load %arg15[%c0_20, %c0_21, %c0_22] : memref<1x1x32xf32, #tpu.memory_space<vmem>>, vector<1x1x32xf32>
    %15 = vector.shape_cast %14 : vector<1x1x32xf32> to vector<1x32xf32>
    %c0_23 = arith.constant 0 : index
    %c0_24 = arith.constant 0 : index
    %c0_25 = arith.constant 0 : index
    %16 = vector.load %arg17[%c0_23, %c0_24, %c0_25] : memref<1x1x32xf32, #tpu.memory_space<vmem>>, vector<1x1x32xf32>
    %17 = vector.shape_cast %16 : vector<1x1x32xf32> to vector<1x32xf32>
    %c0_26 = arith.constant 0 : index
    %c0_27 = arith.constant 0 : index
    %c0_28 = arith.constant 0 : index
    %18 = vector.load %arg22[%c0_26, %c0_27, %c0_28] : memref<1x1x10xf32, #tpu.memory_space<vmem>>, vector<1x1x10xf32>
    %19 = vector.shape_cast %18 : vector<1x1x10xf32> to vector<1x10xf32>
    %c0_29 = arith.constant 0 : index
    %c0_30 = arith.constant 0 : index
    %c0_31 = arith.constant 0 : index
    %20 = vector.load %arg6[%c0_29, %c0_30, %c0_31] : memref<1x32x64xbf16, #tpu.memory_space<vmem>>, vector<1x32x64xbf16>
    %21 = vector.shape_cast %20 : vector<1x32x64xbf16> to vector<32x64xbf16>
    %c0_32 = arith.constant 0 : index
    %c0_33 = arith.constant 0 : index
    %c0_34 = arith.constant 0 : index
    %22 = vector.load %arg9[%c0_32, %c0_33, %c0_34] : memref<1x32x32xbf16, #tpu.memory_space<vmem>>, vector<1x32x32xbf16>
    %23 = vector.shape_cast %22 : vector<1x32x32xbf16> to vector<32x32xbf16>
    %c0_35 = arith.constant 0 : index
    %c0_36 = arith.constant 0 : index
    %c0_37 = arith.constant 0 : index
    %24 = vector.load %arg10[%c0_35, %c0_36, %c0_37] : memref<1x64x128xbf16, #tpu.memory_space<vmem>>, vector<1x64x128xbf16>
    %25 = vector.shape_cast %24 : vector<1x64x128xbf16> to vector<64x128xbf16>
    %c0_38 = arith.constant 0 : index
    %c0_39 = arith.constant 0 : index
    %c0_40 = arith.constant 0 : index
    %26 = vector.load %arg14[%c0_38, %c0_39, %c0_40] : memref<1x32x32xbf16, #tpu.memory_space<vmem>>, vector<1x32x32xbf16>
    %27 = vector.shape_cast %26 : vector<1x32x32xbf16> to vector<32x32xbf16>
    %c0_41 = arith.constant 0 : index
    %c0_42 = arith.constant 0 : index
    %c0_43 = arith.constant 0 : index
    %28 = vector.load %arg16[%c0_41, %c0_42, %c0_43] : memref<1x32x32xbf16, #tpu.memory_space<vmem>>, vector<1x32x32xbf16>
    %29 = vector.shape_cast %28 : vector<1x32x32xbf16> to vector<32x32xbf16>
    %c0_44 = arith.constant 0 : index
    %c0_45 = arith.constant 0 : index
    %c0_46 = arith.constant 0 : index
    %30 = vector.load %arg21[%c0_44, %c0_45, %c0_46] : memref<1x32x10xbf16, #tpu.memory_space<vmem>>, vector<1x32x10xbf16>
    %31 = vector.shape_cast %30 : vector<1x32x10xbf16> to vector<32x10xbf16>
    %32 = tpu.iota {dimensions = array<i32: 1>} : vector<1x16x1xi32>
    %c10_i32 = arith.constant 10 : i32
    %33 = vector.broadcast %c10_i32 : i32 to vector<1x16x1xi32>
    %34 = arith.cmpi slt, %32, %33 : vector<1x16x1xi32>
    %cst = arith.constant 0.000000e+00 : f32
    %cst_47 = arith.constant -1.000000e+30 : f32
    %35 = vector.broadcast %cst : f32 to vector<1x16x1xf32>
    %36 = vector.broadcast %cst_47 : f32 to vector<1x16x1xf32>
    %37 = arith.select %34, %35, %36 : vector<1x16x1xi1>, vector<1x16x1xf32>
    %38 = tpu.iota {dimensions = array<i32: 2>} : vector<1x1x16xi32>
    %c10_i32_48 = arith.constant 10 : i32
    %39 = vector.broadcast %c10_i32_48 : i32 to vector<1x1x16xi32>
    %40 = arith.cmpi slt, %38, %39 : vector<1x1x16xi32>
    %cst_49 = arith.constant 0.000000e+00 : f32
    %cst_50 = arith.constant -1.000000e+30 : f32
    %41 = vector.broadcast %cst_49 : f32 to vector<1x1x16xf32>
    %42 = vector.broadcast %cst_50 : f32 to vector<1x1x16xf32>
    %43 = arith.select %40, %41, %42 : vector<1x1x16xi1>, vector<1x1x16xf32>
    %c0_51 = arith.constant 0 : index
    %c0_52 = arith.constant 0 : index
    %c0_53 = arith.constant 0 : index
    %44 = vector.load %arg2[%c0_51, %c0_52, %c0_53] : memref<1x64x32xf32, #tpu.memory_space<vmem>>, vector<1x64x32xf32>
    %45 = vector.shape_cast %44 : vector<1x64x32xf32> to vector<64x32xf32>
    %cst_54 = arith.constant dense<0.000000e+00> : vector<64xf32>
    %46 = vector.multi_reduction <add>, %45, %cst_54 [1] : vector<64x32xf32> to vector<64xf32>
    %47 = vector.shape_cast %46 : vector<64xf32> to vector<64x1xf32>
    %cst_55 = arith.constant 3.200000e+01 : f32
    %48 = vector.broadcast %cst_55 : f32 to vector<64x1xf32>
    %49 = arith.divf %47, %48 : vector<64x1xf32>
    %50 = vector.broadcast %49 : vector<64x1xf32> to vector<64x32xf32>
    %51 = arith.subf %45, %50 : vector<64x32xf32>
    %52 = arith.mulf %51, %51 : vector<64x32xf32>
    %cst_56 = arith.constant dense<0.000000e+00> : vector<64xf32>
    %53 = vector.multi_reduction <add>, %52, %cst_56 [1] : vector<64x32xf32> to vector<64xf32>
    %54 = vector.shape_cast %53 : vector<64xf32> to vector<64x1xf32>
    %cst_57 = arith.constant 3.200000e+01 : f32
    %55 = vector.broadcast %cst_57 : f32 to vector<64x1xf32>
    %56 = arith.divf %54, %55 : vector<64x1xf32>
    %57 = vector.broadcast %49 : vector<64x1xf32> to vector<64x32xf32>
    %58 = arith.subf %45, %57 : vector<64x32xf32>
    %cst_58 = arith.constant 9.99999974E-6 : f32
    %59 = vector.broadcast %cst_58 : f32 to vector<64x1xf32>
    %60 = arith.addf %56, %59 : vector<64x1xf32>
    %61 = math.rsqrt %60 : vector<64x1xf32>
    %62 = vector.broadcast %61 : vector<64x1xf32> to vector<64x32xf32>
    %63 = arith.mulf %58, %62 : vector<64x32xf32>
    %64 = vector.broadcast %1 : vector<1x32xf32> to vector<64x32xf32>
    %65 = arith.mulf %63, %64 : vector<64x32xf32>
    %66 = vector.broadcast %3 : vector<1x32xf32> to vector<64x32xf32>
    %67 = arith.addf %65, %66 : vector<64x32xf32>
    %68 = arith.truncf %67 : vector<64x32xf32> to vector<64x32xbf16>
    %cst_59 = arith.constant dense<0.000000e+00> : vector<64x64xf32>
    %69 = tpu.matmul %68, %21, %cst_59 {dimension_numbers = #tpu.dot_dimension_numbers<[1], [0], [0], [1], [0, 0, 1, 1], [], []>} : vector<64x32xbf16>, vector<32x64xbf16>, vector<64x64xf32> -> vector<64x64xf32>
    %70 = vector.extract_strided_slice %69 {offsets = [0, 0], sizes = [64, 32], strides = [1, 1]} : vector<64x64xf32> to vector<64x32xf32>
    %71 = vector.shape_cast %70 : vector<64x32xf32> to vector<1x64x32xf32>
    %72 = vector.extract_strided_slice %69 {offsets = [0, 32], sizes = [64, 32], strides = [1, 1]} : vector<64x64xf32> to vector<64x32xf32>
    %73 = vector.shape_cast %72 : vector<64x32xf32> to vector<1x64x32xf32>
    %c0_60 = arith.constant 0 : index
    %c0_61 = arith.constant 0 : index
    %c0_62 = arith.constant 0 : index
    %c0_63 = arith.constant 0 : index
    %74 = vector.load %arg3[%c0_60, %c0_61, %c0_62, %c0_63] : memref<1x1x16x32xf32, #tpu.memory_space<vmem>>, vector<1x1x16x32xf32>
    %75 = vector.shape_cast %74 : vector<1x1x16x32xf32> to vector<1x16x32xf32>
    %76 = vector.shape_cast %75 : vector<1x16x32xf32> to vector<16x32xf32>
    %c0_i32 = arith.constant 0 : i32
    %cst_64 = arith.constant dense<0.000000e+00> : vector<16xf32>
    %77 = vector.multi_reduction <add>, %76, %cst_64 [1] : vector<16x32xf32> to vector<16xf32>
    %78 = vector.shape_cast %77 : vector<16xf32> to vector<16x1xf32>
    %cst_65 = arith.constant 3.200000e+01 : f32
    %79 = vector.broadcast %cst_65 : f32 to vector<16x1xf32>
    %80 = arith.divf %78, %79 : vector<16x1xf32>
    %81 = vector.broadcast %80 : vector<16x1xf32> to vector<16x32xf32>
    %82 = arith.subf %76, %81 : vector<16x32xf32>
    %83 = arith.mulf %82, %82 : vector<16x32xf32>
    %cst_66 = arith.constant dense<0.000000e+00> : vector<16xf32>
    %84 = vector.multi_reduction <add>, %83, %cst_66 [1] : vector<16x32xf32> to vector<16xf32>
    %85 = vector.shape_cast %84 : vector<16xf32> to vector<16x1xf32>
    %cst_67 = arith.constant 3.200000e+01 : f32
    %86 = vector.broadcast %cst_67 : f32 to vector<16x1xf32>
    %87 = arith.divf %85, %86 : vector<16x1xf32>
    %88 = vector.broadcast %80 : vector<16x1xf32> to vector<16x32xf32>
    %89 = arith.subf %76, %88 : vector<16x32xf32>
    %cst_68 = arith.constant 9.99999974E-6 : f32
    %90 = vector.broadcast %cst_68 : f32 to vector<16x1xf32>
    %91 = arith.addf %87, %90 : vector<16x1xf32>
    %92 = math.rsqrt %91 : vector<16x1xf32>
    %93 = vector.broadcast %92 : vector<16x1xf32> to vector<16x32xf32>
    %94 = arith.mulf %89, %93 : vector<16x32xf32>
    %95 = vector.broadcast %5 : vector<1x32xf32> to vector<16x32xf32>
    %96 = arith.mulf %94, %95 : vector<16x32xf32>
    %97 = vector.broadcast %7 : vector<1x32xf32> to vector<16x32xf32>
    %98 = arith.addf %96, %97 : vector<16x32xf32>
    %99 = arith.truncf %98 : vector<16x32xf32> to vector<16x32xbf16>
    %cst_69 = arith.constant dense<0.000000e+00> : vector<16x32xf32>
    %100 = tpu.matmul %99, %23, %cst_69 {dimension_numbers = #tpu.dot_dimension_numbers<[1], [0], [0], [1], [0, 0, 1, 1], [], []>} : vector<16x32xbf16>, vector<32x32xbf16>, vector<16x32xf32> -> vector<16x32xf32>
    %101 = vector.shape_cast %100 : vector<16x32xf32> to vector<1x16x32xf32>
    %102 = arith.truncf %101 : vector<1x16x32xf32> to vector<1x16x32xbf16>
    %103 = arith.truncf %71 : vector<1x64x32xf32> to vector<1x64x32xbf16>
    %cst_70 = arith.constant dense<0.000000e+00> : vector<1x16x64xf32>
    %104 = tpu.matmul %102, %103, %cst_70 {dimension_numbers = #tpu.dot_dimension_numbers<[2], [2], [1], [1], [0, 0, 0, 1, 1, 1], [0], [0]>} : vector<1x16x32xbf16>, vector<1x64x32xbf16>, vector<1x16x64xf32> -> vector<1x16x64xf32>
    %105 = vector.broadcast %37 : vector<1x16x1xf32> to vector<1x16x64xf32>
    %106 = arith.addf %104, %105 : vector<1x16x64xf32>
    %cst_71 = arith.constant dense<0xFF800000> : vector<1x64xf32>
    %107 = vector.multi_reduction <maximumf>, %106, %cst_71 [1] : vector<1x16x64xf32> to vector<1x64xf32>
    %108 = vector.shape_cast %107 : vector<1x64xf32> to vector<1x1x64xf32>
    %109 = vector.broadcast %108 : vector<1x1x64xf32> to vector<1x16x64xf32>
    %110 = arith.subf %106, %109 : vector<1x16x64xf32>
    %111 = math.exp %110 : vector<1x16x64xf32>
    %cst_72 = arith.constant dense<0.000000e+00> : vector<1x64xf32>
    %112 = vector.multi_reduction <add>, %111, %cst_72 [1] : vector<1x16x64xf32> to vector<1x64xf32>
    %113 = vector.shape_cast %112 : vector<1x64xf32> to vector<1x1x64xf32>
    %114 = tpu.reciprocal %113 {approx = true} : vector<1x1x64xf32> -> vector<1x1x64xf32>
    %115 = vector.broadcast %114 : vector<1x1x64xf32> to vector<1x16x64xf32>
    %116 = arith.mulf %111, %115 : vector<1x16x64xf32>
    %cst_73 = arith.constant 9.99999993E-9 : f32
    %117 = vector.broadcast %cst_73 : f32 to vector<1x16x64xf32>
    %118 = arith.addf %116, %117 : vector<1x16x64xf32>
    %cst_74 = arith.constant dense<0.000000e+00> : vector<1x16xf32>
    %119 = vector.multi_reduction <add>, %118, %cst_74 [2] : vector<1x16x64xf32> to vector<1x16xf32>
    %120 = vector.shape_cast %119 : vector<1x16xf32> to vector<1x16x1xf32>
    %121 = vector.broadcast %120 : vector<1x16x1xf32> to vector<1x16x64xf32>
    %122 = arith.divf %118, %121 : vector<1x16x64xf32>
    %123 = arith.truncf %122 : vector<1x16x64xf32> to vector<1x16x64xbf16>
    %124 = arith.truncf %73 : vector<1x64x32xf32> to vector<1x64x32xbf16>
    %cst_75 = arith.constant dense<0.000000e+00> : vector<1x16x32xf32>
    %125 = tpu.matmul %123, %124, %cst_75 {dimension_numbers = #tpu.dot_dimension_numbers<[2], [1], [1], [2], [0, 0, 0, 1, 1, 2], [0], [0]>} : vector<1x16x64xbf16>, vector<1x64x32xbf16>, vector<1x16x32xf32> -> vector<1x16x32xf32>
    %126 = vector.shape_cast %125 : vector<1x16x32xf32> to vector<16x32xf32>
    %127 = tpu.concatenate %126, %76 in 1 : vector<16x32xf32>, vector<16x32xf32> -> vector<16x64xf32>
    %128 = arith.truncf %127 : vector<16x64xf32> to vector<16x64xbf16>
    %cst_76 = arith.constant dense<0.000000e+00> : vector<16x128xf32>
    %129 = tpu.matmul %128, %25, %cst_76 {dimension_numbers = #tpu.dot_dimension_numbers<[1], [0], [0], [1], [0, 0, 1, 1], [], []>} : vector<16x64xbf16>, vector<64x128xbf16>, vector<16x128xf32> -> vector<16x128xf32>
    %130 = vector.broadcast %13 : vector<1x128xf32> to vector<16x128xf32>
    %131 = arith.addf %129, %130 : vector<16x128xf32>
    %132 = vector.extract_strided_slice %131 {offsets = [0, 0], sizes = [16, 32], strides = [1, 1]} : vector<16x128xf32> to vector<16x32xf32>
    %133 = arith.negf %132 : vector<16x32xf32>
    %134 = math.exp %133 : vector<16x32xf32>
    %cst_77 = arith.constant 1.000000e+00 : f32
    %135 = vector.broadcast %cst_77 : f32 to vector<16x32xf32>
    %136 = arith.addf %135, %134 : vector<16x32xf32>
    %137 = arith.divf %135, %136 : vector<16x32xf32>
    %138 = vector.extract_strided_slice %131 {offsets = [0, 32], sizes = [16, 32], strides = [1, 1]} : vector<16x128xf32> to vector<16x32xf32>
    %139 = arith.negf %138 : vector<16x32xf32>
    %140 = math.exp %139 : vector<16x32xf32>
    %cst_78 = arith.constant 1.000000e+00 : f32
    %141 = vector.broadcast %cst_78 : f32 to vector<16x32xf32>
    %142 = arith.addf %141, %140 : vector<16x32xf32>
    %143 = arith.divf %141, %142 : vector<16x32xf32>
    %144 = vector.extract_strided_slice %131 {offsets = [0, 64], sizes = [16, 32], strides = [1, 1]} : vector<16x128xf32> to vector<16x32xf32>
    %145 = vector.extract_strided_slice %131 {offsets = [0, 96], sizes = [16, 32], strides = [1, 1]} : vector<16x128xf32> to vector<16x32xf32>
    %146 = arith.mulf %137, %145 : vector<16x32xf32>
    %147 = arith.addf %144, %146 : vector<16x32xf32>
    %148 = math.tanh %147 : vector<16x32xf32>
    %cst_79 = arith.constant 1.000000e+00 : f32
    %149 = vector.broadcast %cst_79 : f32 to vector<16x32xf32>
    %150 = arith.subf %149, %143 : vector<16x32xf32>
    %151 = arith.mulf %150, %148 : vector<16x32xf32>
    %152 = arith.mulf %143, %76 : vector<16x32xf32>
    %153 = arith.addf %151, %152 : vector<16x32xf32>
    %cst_80 = arith.constant dense<0.000000e+00> : vector<16xf32>
    %154 = vector.multi_reduction <add>, %153, %cst_80 [1] : vector<16x32xf32> to vector<16xf32>
    %155 = vector.shape_cast %154 : vector<16xf32> to vector<16x1xf32>
    %cst_81 = arith.constant 3.200000e+01 : f32
    %156 = vector.broadcast %cst_81 : f32 to vector<16x1xf32>
    %157 = arith.divf %155, %156 : vector<16x1xf32>
    %158 = vector.broadcast %157 : vector<16x1xf32> to vector<16x32xf32>
    %159 = arith.subf %153, %158 : vector<16x32xf32>
    %160 = arith.mulf %159, %159 : vector<16x32xf32>
    %cst_82 = arith.constant dense<0.000000e+00> : vector<16xf32>
    %161 = vector.multi_reduction <add>, %160, %cst_82 [1] : vector<16x32xf32> to vector<16xf32>
    %162 = vector.shape_cast %161 : vector<16xf32> to vector<16x1xf32>
    %cst_83 = arith.constant 3.200000e+01 : f32
    %163 = vector.broadcast %cst_83 : f32 to vector<16x1xf32>
    %164 = arith.divf %162, %163 : vector<16x1xf32>
    %165 = vector.broadcast %157 : vector<16x1xf32> to vector<16x32xf32>
    %166 = arith.subf %153, %165 : vector<16x32xf32>
    %cst_84 = arith.constant 9.99999974E-6 : f32
    %167 = vector.broadcast %cst_84 : f32 to vector<16x1xf32>
    %168 = arith.addf %164, %167 : vector<16x1xf32>
    %169 = math.rsqrt %168 : vector<16x1xf32>
    %170 = vector.broadcast %169 : vector<16x1xf32> to vector<16x32xf32>
    %171 = arith.mulf %166, %170 : vector<16x32xf32>
    %172 = vector.broadcast %9 : vector<1x32xf32> to vector<16x32xf32>
    %173 = arith.mulf %171, %172 : vector<16x32xf32>
    %174 = vector.broadcast %11 : vector<1x32xf32> to vector<16x32xf32>
    %175 = arith.addf %173, %174 : vector<16x32xf32>
    %176 = arith.truncf %175 : vector<16x32xf32> to vector<16x32xbf16>
    %cst_85 = arith.constant dense<0.000000e+00> : vector<16x32xf32>
    %177 = tpu.matmul %176, %27, %cst_85 {dimension_numbers = #tpu.dot_dimension_numbers<[1], [0], [0], [1], [0, 0, 1, 1], [], []>} : vector<16x32xbf16>, vector<32x32xbf16>, vector<16x32xf32> -> vector<16x32xf32>
    %178 = vector.broadcast %15 : vector<1x32xf32> to vector<16x32xf32>
    %179 = arith.addf %177, %178 : vector<16x32xf32>
    %cst_86 = arith.constant 0.000000e+00 : f32
    %180 = vector.broadcast %cst_86 : f32 to vector<16x32xf32>
    %181 = arith.maximumf %179, %180 : vector<16x32xf32>
    %182 = arith.truncf %181 : vector<16x32xf32> to vector<16x32xbf16>
    %cst_87 = arith.constant dense<0.000000e+00> : vector<16x32xf32>
    %183 = tpu.matmul %182, %29, %cst_87 {dimension_numbers = #tpu.dot_dimension_numbers<[1], [0], [0], [1], [0, 0, 1, 1], [], []>} : vector<16x32xbf16>, vector<32x32xbf16>, vector<16x32xf32> -> vector<16x32xf32>
    %184 = arith.addf %153, %183 : vector<16x32xf32>
    %185 = vector.broadcast %17 : vector<1x32xf32> to vector<16x32xf32>
    %186 = arith.addf %184, %185 : vector<16x32xf32>
    %c1_i32 = arith.constant 1 : i32
    %cst_88 = arith.constant dense<0.000000e+00> : vector<16xf32>
    %187 = vector.multi_reduction <add>, %186, %cst_88 [1] : vector<16x32xf32> to vector<16xf32>
    %188 = vector.shape_cast %187 : vector<16xf32> to vector<16x1xf32>
    %cst_89 = arith.constant 3.200000e+01 : f32
    %189 = vector.broadcast %cst_89 : f32 to vector<16x1xf32>
    %190 = arith.divf %188, %189 : vector<16x1xf32>
    %191 = vector.broadcast %190 : vector<16x1xf32> to vector<16x32xf32>
    %192 = arith.subf %186, %191 : vector<16x32xf32>
    %193 = arith.mulf %192, %192 : vector<16x32xf32>
    %cst_90 = arith.constant dense<0.000000e+00> : vector<16xf32>
    %194 = vector.multi_reduction <add>, %193, %cst_90 [1] : vector<16x32xf32> to vector<16xf32>
    %195 = vector.shape_cast %194 : vector<16xf32> to vector<16x1xf32>
    %cst_91 = arith.constant 3.200000e+01 : f32
    %196 = vector.broadcast %cst_91 : f32 to vector<16x1xf32>
    %197 = arith.divf %195, %196 : vector<16x1xf32>
    %198 = vector.broadcast %190 : vector<16x1xf32> to vector<16x32xf32>
    %199 = arith.subf %186, %198 : vector<16x32xf32>
    %cst_92 = arith.constant 9.99999974E-6 : f32
    %200 = vector.broadcast %cst_92 : f32 to vector<16x1xf32>
    %201 = arith.addf %197, %200 : vector<16x1xf32>
    %202 = math.rsqrt %201 : vector<16x1xf32>
    %203 = vector.broadcast %202 : vector<16x1xf32> to vector<16x32xf32>
    %204 = arith.mulf %199, %203 : vector<16x32xf32>
    %205 = vector.broadcast %5 : vector<1x32xf32> to vector<16x32xf32>
    %206 = arith.mulf %204, %205 : vector<16x32xf32>
    %207 = vector.broadcast %7 : vector<1x32xf32> to vector<16x32xf32>
    %208 = arith.addf %206, %207 : vector<16x32xf32>
    %209 = arith.truncf %208 : vector<16x32xf32> to vector<16x32xbf16>
    %cst_93 = arith.constant dense<0.000000e+00> : vector<16x32xf32>
    %210 = tpu.matmul %209, %23, %cst_93 {dimension_numbers = #tpu.dot_dimension_numbers<[1], [0], [0], [1], [0, 0, 1, 1], [], []>} : vector<16x32xbf16>, vector<32x32xbf16>, vector<16x32xf32> -> vector<16x32xf32>
    %211 = vector.shape_cast %210 : vector<16x32xf32> to vector<1x16x32xf32>
    %212 = arith.truncf %211 : vector<1x16x32xf32> to vector<1x16x32xbf16>
    %213 = arith.truncf %71 : vector<1x64x32xf32> to vector<1x64x32xbf16>
    %cst_94 = arith.constant dense<0.000000e+00> : vector<1x16x64xf32>
    %214 = tpu.matmul %212, %213, %cst_94 {dimension_numbers = #tpu.dot_dimension_numbers<[2], [2], [1], [1], [0, 0, 0, 1, 1, 1], [0], [0]>} : vector<1x16x32xbf16>, vector<1x64x32xbf16>, vector<1x16x64xf32> -> vector<1x16x64xf32>
    %215 = vector.broadcast %37 : vector<1x16x1xf32> to vector<1x16x64xf32>
    %216 = arith.addf %214, %215 : vector<1x16x64xf32>
    %cst_95 = arith.constant dense<0xFF800000> : vector<1x64xf32>
    %217 = vector.multi_reduction <maximumf>, %216, %cst_95 [1] : vector<1x16x64xf32> to vector<1x64xf32>
    %218 = vector.shape_cast %217 : vector<1x64xf32> to vector<1x1x64xf32>
    %219 = vector.broadcast %218 : vector<1x1x64xf32> to vector<1x16x64xf32>
    %220 = arith.subf %216, %219 : vector<1x16x64xf32>
    %221 = math.exp %220 : vector<1x16x64xf32>
    %cst_96 = arith.constant dense<0.000000e+00> : vector<1x64xf32>
    %222 = vector.multi_reduction <add>, %221, %cst_96 [1] : vector<1x16x64xf32> to vector<1x64xf32>
    %223 = vector.shape_cast %222 : vector<1x64xf32> to vector<1x1x64xf32>
    %224 = tpu.reciprocal %223 {approx = true} : vector<1x1x64xf32> -> vector<1x1x64xf32>
    %225 = vector.broadcast %224 : vector<1x1x64xf32> to vector<1x16x64xf32>
    %226 = arith.mulf %221, %225 : vector<1x16x64xf32>
    %cst_97 = arith.constant 9.99999993E-9 : f32
    %227 = vector.broadcast %cst_97 : f32 to vector<1x16x64xf32>
    %228 = arith.addf %226, %227 : vector<1x16x64xf32>
    %cst_98 = arith.constant dense<0.000000e+00> : vector<1x16xf32>
    %229 = vector.multi_reduction <add>, %228, %cst_98 [2] : vector<1x16x64xf32> to vector<1x16xf32>
    %230 = vector.shape_cast %229 : vector<1x16xf32> to vector<1x16x1xf32>
    %231 = vector.broadcast %230 : vector<1x16x1xf32> to vector<1x16x64xf32>
    %232 = arith.divf %228, %231 : vector<1x16x64xf32>
    %233 = arith.truncf %232 : vector<1x16x64xf32> to vector<1x16x64xbf16>
    %234 = arith.truncf %73 : vector<1x64x32xf32> to vector<1x64x32xbf16>
    %cst_99 = arith.constant dense<0.000000e+00> : vector<1x16x32xf32>
    %235 = tpu.matmul %233, %234, %cst_99 {dimension_numbers = #tpu.dot_dimension_numbers<[2], [1], [1], [2], [0, 0, 0, 1, 1, 2], [0], [0]>} : vector<1x16x64xbf16>, vector<1x64x32xbf16>, vector<1x16x32xf32> -> vector<1x16x32xf32>
    %236 = vector.shape_cast %235 : vector<1x16x32xf32> to vector<16x32xf32>
    %237 = tpu.concatenate %236, %186 in 1 : vector<16x32xf32>, vector<16x32xf32> -> vector<16x64xf32>
    %238 = arith.truncf %237 : vector<16x64xf32> to vector<16x64xbf16>
    %cst_100 = arith.constant dense<0.000000e+00> : vector<16x128xf32>
    %239 = tpu.matmul %238, %25, %cst_100 {dimension_numbers = #tpu.dot_dimension_numbers<[1], [0], [0], [1], [0, 0, 1, 1], [], []>} : vector<16x64xbf16>, vector<64x128xbf16>, vector<16x128xf32> -> vector<16x128xf32>
    %240 = vector.broadcast %13 : vector<1x128xf32> to vector<16x128xf32>
    %241 = arith.addf %239, %240 : vector<16x128xf32>
    %242 = vector.extract_strided_slice %241 {offsets = [0, 0], sizes = [16, 32], strides = [1, 1]} : vector<16x128xf32> to vector<16x32xf32>
    %243 = arith.negf %242 : vector<16x32xf32>
    %244 = math.exp %243 : vector<16x32xf32>
    %cst_101 = arith.constant 1.000000e+00 : f32
    %245 = vector.broadcast %cst_101 : f32 to vector<16x32xf32>
    %246 = arith.addf %245, %244 : vector<16x32xf32>
    %247 = arith.divf %245, %246 : vector<16x32xf32>
    %248 = vector.extract_strided_slice %241 {offsets = [0, 32], sizes = [16, 32], strides = [1, 1]} : vector<16x128xf32> to vector<16x32xf32>
    %249 = arith.negf %248 : vector<16x32xf32>
    %250 = math.exp %249 : vector<16x32xf32>
    %cst_102 = arith.constant 1.000000e+00 : f32
    %251 = vector.broadcast %cst_102 : f32 to vector<16x32xf32>
    %252 = arith.addf %251, %250 : vector<16x32xf32>
    %253 = arith.divf %251, %252 : vector<16x32xf32>
    %254 = vector.extract_strided_slice %241 {offsets = [0, 64], sizes = [16, 32], strides = [1, 1]} : vector<16x128xf32> to vector<16x32xf32>
    %255 = vector.extract_strided_slice %241 {offsets = [0, 96], sizes = [16, 32], strides = [1, 1]} : vector<16x128xf32> to vector<16x32xf32>
    %256 = arith.mulf %247, %255 : vector<16x32xf32>
    %257 = arith.addf %254, %256 : vector<16x32xf32>
    %258 = math.tanh %257 : vector<16x32xf32>
    %cst_103 = arith.constant 1.000000e+00 : f32
    %259 = vector.broadcast %cst_103 : f32 to vector<16x32xf32>
    %260 = arith.subf %259, %253 : vector<16x32xf32>
    %261 = arith.mulf %260, %258 : vector<16x32xf32>
    %262 = arith.mulf %253, %186 : vector<16x32xf32>
    %263 = arith.addf %261, %262 : vector<16x32xf32>
    %cst_104 = arith.constant dense<0.000000e+00> : vector<16xf32>
    %264 = vector.multi_reduction <add>, %263, %cst_104 [1] : vector<16x32xf32> to vector<16xf32>
    %265 = vector.shape_cast %264 : vector<16xf32> to vector<16x1xf32>
    %cst_105 = arith.constant 3.200000e+01 : f32
    %266 = vector.broadcast %cst_105 : f32 to vector<16x1xf32>
    %267 = arith.divf %265, %266 : vector<16x1xf32>
    %268 = vector.broadcast %267 : vector<16x1xf32> to vector<16x32xf32>
    %269 = arith.subf %263, %268 : vector<16x32xf32>
    %270 = arith.mulf %269, %269 : vector<16x32xf32>
    %cst_106 = arith.constant dense<0.000000e+00> : vector<16xf32>
    %271 = vector.multi_reduction <add>, %270, %cst_106 [1] : vector<16x32xf32> to vector<16xf32>
    %272 = vector.shape_cast %271 : vector<16xf32> to vector<16x1xf32>
    %cst_107 = arith.constant 3.200000e+01 : f32
    %273 = vector.broadcast %cst_107 : f32 to vector<16x1xf32>
    %274 = arith.divf %272, %273 : vector<16x1xf32>
    %275 = vector.broadcast %267 : vector<16x1xf32> to vector<16x32xf32>
    %276 = arith.subf %263, %275 : vector<16x32xf32>
    %cst_108 = arith.constant 9.99999974E-6 : f32
    %277 = vector.broadcast %cst_108 : f32 to vector<16x1xf32>
    %278 = arith.addf %274, %277 : vector<16x1xf32>
    %279 = math.rsqrt %278 : vector<16x1xf32>
    %280 = vector.broadcast %279 : vector<16x1xf32> to vector<16x32xf32>
    %281 = arith.mulf %276, %280 : vector<16x32xf32>
    %282 = vector.broadcast %9 : vector<1x32xf32> to vector<16x32xf32>
    %283 = arith.mulf %281, %282 : vector<16x32xf32>
    %284 = vector.broadcast %11 : vector<1x32xf32> to vector<16x32xf32>
    %285 = arith.addf %283, %284 : vector<16x32xf32>
    %286 = arith.truncf %285 : vector<16x32xf32> to vector<16x32xbf16>
    %cst_109 = arith.constant dense<0.000000e+00> : vector<16x32xf32>
    %287 = tpu.matmul %286, %27, %cst_109 {dimension_numbers = #tpu.dot_dimension_numbers<[1], [0], [0], [1], [0, 0, 1, 1], [], []>} : vector<16x32xbf16>, vector<32x32xbf16>, vector<16x32xf32> -> vector<16x32xf32>
    %288 = vector.broadcast %15 : vector<1x32xf32> to vector<16x32xf32>
    %289 = arith.addf %287, %288 : vector<16x32xf32>
    %cst_110 = arith.constant 0.000000e+00 : f32
    %290 = vector.broadcast %cst_110 : f32 to vector<16x32xf32>
    %291 = arith.maximumf %289, %290 : vector<16x32xf32>
    %292 = arith.truncf %291 : vector<16x32xf32> to vector<16x32xbf16>
    %cst_111 = arith.constant dense<0.000000e+00> : vector<16x32xf32>
    %293 = tpu.matmul %292, %29, %cst_111 {dimension_numbers = #tpu.dot_dimension_numbers<[1], [0], [0], [1], [0, 0, 1, 1], [], []>} : vector<16x32xbf16>, vector<32x32xbf16>, vector<16x32xf32> -> vector<16x32xf32>
    %294 = arith.addf %263, %293 : vector<16x32xf32>
    %295 = vector.broadcast %17 : vector<1x32xf32> to vector<16x32xf32>
    %296 = arith.addf %294, %295 : vector<16x32xf32>
    %297 = vector.shape_cast %296 : vector<16x32xf32> to vector<1x16x32xf32>
    %c0_112 = arith.constant 0 : index
    %c0_113 = arith.constant 0 : index
    %c0_114 = arith.constant 0 : index
    %298 = vector.load %arg18[%c0_112, %c0_113, %c0_114] : memref<1x16x32xf32, #tpu.memory_space<vmem>>, vector<1x16x32xf32>
    %299 = vector.shape_cast %298 : vector<1x16x32xf32> to vector<16x32xf32>
    %300 = vector.shape_cast %299 : vector<16x32xf32> to vector<1x16x32xf32>
    %301 = arith.addf %297, %300 : vector<1x16x32xf32>
    %302 = vector.shape_cast %301 : vector<1x16x32xf32> to vector<16x32xf32>
    %cst_115 = arith.constant 0.000000e+00 : f32
    %303 = vector.broadcast %cst_115 : f32 to vector<1x64x16xf32>
    %c0_116 = arith.constant 0 : index
    %c0_117 = arith.constant 0 : index
    %c0_118 = arith.constant 0 : index
    %c0_119 = arith.constant 0 : index
    %304 = vector.load %arg19[%c0_116, %c0_117, %c0_118, %c0_119] : memref<1x2x32x16xbf16, #tpu.memory_space<vmem>>, vector<1x1x32x16xbf16>
    %305 = vector.shape_cast %304 : vector<1x1x32x16xbf16> to vector<32x16xbf16>
    %306 = arith.truncf %45 : vector<64x32xf32> to vector<64x32xbf16>
    %cst_120 = arith.constant dense<0.000000e+00> : vector<64x16xf32>
    %307 = tpu.matmul %306, %305, %cst_120 {dimension_numbers = #tpu.dot_dimension_numbers<[1], [0], [0], [1], [0, 0, 1, 1], [], []>} : vector<64x32xbf16>, vector<32x16xbf16>, vector<64x16xf32> -> vector<64x16xf32>
    %308 = vector.shape_cast %307 : vector<64x16xf32> to vector<1x64x16xf32>
    %c0_121 = arith.constant 0 : index
    %c0_122 = arith.constant 0 : index
    %c0_123 = arith.constant 0 : index
    %c0_124 = arith.constant 0 : index
    %309 = vector.load %arg20[%c0_121, %c0_122, %c0_123, %c0_124] : memref<1x2x32x32xbf16, #tpu.memory_space<vmem>>, vector<1x1x32x32xbf16>
    %310 = vector.shape_cast %309 : vector<1x1x32x32xbf16> to vector<32x32xbf16>
    %311 = arith.truncf %302 : vector<16x32xf32> to vector<16x32xbf16>
    %cst_125 = arith.constant dense<0.000000e+00> : vector<16x32xf32>
    %312 = tpu.matmul %311, %310, %cst_125 {dimension_numbers = #tpu.dot_dimension_numbers<[1], [0], [0], [1], [0, 0, 1, 1], [], []>} : vector<16x32xbf16>, vector<32x32xbf16>, vector<16x32xf32> -> vector<16x32xf32>
    %313 = vector.extract_strided_slice %312 {offsets = [0, 0], sizes = [16, 16], strides = [1, 1]} : vector<16x32xf32> to vector<16x16xf32>
    %314 = vector.shape_cast %313 : vector<16x16xf32> to vector<1x16x16xf32>
    %315 = vector.extract_strided_slice %312 {offsets = [0, 16], sizes = [16, 16], strides = [1, 1]} : vector<16x32xf32> to vector<16x16xf32>
    %316 = vector.shape_cast %315 : vector<16x16xf32> to vector<1x16x16xf32>
    %317 = arith.truncf %308 : vector<1x64x16xf32> to vector<1x64x16xbf16>
    %318 = arith.truncf %314 : vector<1x16x16xf32> to vector<1x16x16xbf16>
    %cst_126 = arith.constant dense<0.000000e+00> : vector<1x64x16xf32>
    %319 = tpu.matmul %317, %318, %cst_126 {dimension_numbers = #tpu.dot_dimension_numbers<[2], [2], [1], [1], [0, 0, 0, 1, 1, 1], [0], [0]>} : vector<1x64x16xbf16>, vector<1x16x16xbf16>, vector<1x64x16xf32> -> vector<1x64x16xf32>
    %320 = vector.broadcast %43 : vector<1x1x16xf32> to vector<1x64x16xf32>
    %321 = arith.addf %319, %320 : vector<1x64x16xf32>
    %cst_127 = arith.constant dense<0xFF800000> : vector<1x64xf32>
    %322 = vector.multi_reduction <maximumf>, %321, %cst_127 [2] : vector<1x64x16xf32> to vector<1x64xf32>
    %323 = vector.shape_cast %322 : vector<1x64xf32> to vector<1x64x1xf32>
    %324 = vector.broadcast %323 : vector<1x64x1xf32> to vector<1x64x16xf32>
    %325 = arith.subf %321, %324 : vector<1x64x16xf32>
    %326 = math.exp %325 : vector<1x64x16xf32>
    %cst_128 = arith.constant dense<0.000000e+00> : vector<1x64xf32>
    %327 = vector.multi_reduction <add>, %326, %cst_128 [2] : vector<1x64x16xf32> to vector<1x64xf32>
    %328 = vector.shape_cast %327 : vector<1x64xf32> to vector<1x64x1xf32>
    %329 = tpu.reciprocal %328 {approx = true} : vector<1x64x1xf32> -> vector<1x64x1xf32>
    %330 = vector.broadcast %329 : vector<1x64x1xf32> to vector<1x64x16xf32>
    %331 = arith.mulf %326, %330 : vector<1x64x16xf32>
    %332 = arith.addf %303, %331 : vector<1x64x16xf32>
    %333 = arith.truncf %331 : vector<1x64x16xf32> to vector<1x64x16xbf16>
    %334 = arith.truncf %316 : vector<1x16x16xf32> to vector<1x16x16xbf16>
    %cst_129 = arith.constant dense<0.000000e+00> : vector<1x64x16xf32>
    %335 = tpu.matmul %333, %334, %cst_129 {dimension_numbers = #tpu.dot_dimension_numbers<[2], [1], [1], [2], [0, 0, 0, 1, 1, 2], [0], [0]>} : vector<1x64x16xbf16>, vector<1x16x16xbf16>, vector<1x64x16xf32> -> vector<1x64x16xf32>
    %cst_130 = arith.constant dense<0.000000e+00> : vector<1x16xf32>
    %336 = vector.multi_reduction <add>, %335, %cst_130 [1] : vector<1x64x16xf32> to vector<1x16xf32>
    %cst_131 = arith.constant 6.400000e+01 : f32
    %337 = vector.broadcast %cst_131 : f32 to vector<1x16xf32>
    %338 = arith.divf %336, %337 : vector<1x16xf32>
    %c0_132 = arith.constant 0 : index
    %c1 = arith.constant 1 : index
    %c0_133 = arith.constant 0 : index
    %c0_134 = arith.constant 0 : index
    %339 = vector.load %arg19[%c0_132, %c1, %c0_133, %c0_134] : memref<1x2x32x16xbf16, #tpu.memory_space<vmem>>, vector<1x1x32x16xbf16>
    %340 = vector.shape_cast %339 : vector<1x1x32x16xbf16> to vector<32x16xbf16>
    %341 = arith.truncf %45 : vector<64x32xf32> to vector<64x32xbf16>
    %cst_135 = arith.constant dense<0.000000e+00> : vector<64x16xf32>
    %342 = tpu.matmul %341, %340, %cst_135 {dimension_numbers = #tpu.dot_dimension_numbers<[1], [0], [0], [1], [0, 0, 1, 1], [], []>} : vector<64x32xbf16>, vector<32x16xbf16>, vector<64x16xf32> -> vector<64x16xf32>
    %343 = vector.shape_cast %342 : vector<64x16xf32> to vector<1x64x16xf32>
    %c0_136 = arith.constant 0 : index
    %c1_137 = arith.constant 1 : index
    %c0_138 = arith.constant 0 : index
    %c0_139 = arith.constant 0 : index
    %344 = vector.load %arg20[%c0_136, %c1_137, %c0_138, %c0_139] : memref<1x2x32x32xbf16, #tpu.memory_space<vmem>>, vector<1x1x32x32xbf16>
    %345 = vector.shape_cast %344 : vector<1x1x32x32xbf16> to vector<32x32xbf16>
    %346 = arith.truncf %302 : vector<16x32xf32> to vector<16x32xbf16>
    %cst_140 = arith.constant dense<0.000000e+00> : vector<16x32xf32>
    %347 = tpu.matmul %346, %345, %cst_140 {dimension_numbers = #tpu.dot_dimension_numbers<[1], [0], [0], [1], [0, 0, 1, 1], [], []>} : vector<16x32xbf16>, vector<32x32xbf16>, vector<16x32xf32> -> vector<16x32xf32>
    %348 = vector.extract_strided_slice %347 {offsets = [0, 0], sizes = [16, 16], strides = [1, 1]} : vector<16x32xf32> to vector<16x16xf32>
    %349 = vector.shape_cast %348 : vector<16x16xf32> to vector<1x16x16xf32>
    %350 = vector.extract_strided_slice %347 {offsets = [0, 16], sizes = [16, 16], strides = [1, 1]} : vector<16x32xf32> to vector<16x16xf32>
    %351 = vector.shape_cast %350 : vector<16x16xf32> to vector<1x16x16xf32>
    %352 = arith.truncf %343 : vector<1x64x16xf32> to vector<1x64x16xbf16>
    %353 = arith.truncf %349 : vector<1x16x16xf32> to vector<1x16x16xbf16>
    %cst_141 = arith.constant dense<0.000000e+00> : vector<1x64x16xf32>
    %354 = tpu.matmul %352, %353, %cst_141 {dimension_numbers = #tpu.dot_dimension_numbers<[2], [2], [1], [1], [0, 0, 0, 1, 1, 1], [0], [0]>} : vector<1x64x16xbf16>, vector<1x16x16xbf16>, vector<1x64x16xf32> -> vector<1x64x16xf32>
    %355 = vector.broadcast %43 : vector<1x1x16xf32> to vector<1x64x16xf32>
    %356 = arith.addf %354, %355 : vector<1x64x16xf32>
    %cst_142 = arith.constant dense<0xFF800000> : vector<1x64xf32>
    %357 = vector.multi_reduction <maximumf>, %356, %cst_142 [2] : vector<1x64x16xf32> to vector<1x64xf32>
    %358 = vector.shape_cast %357 : vector<1x64xf32> to vector<1x64x1xf32>
    %359 = vector.broadcast %358 : vector<1x64x1xf32> to vector<1x64x16xf32>
    %360 = arith.subf %356, %359 : vector<1x64x16xf32>
    %361 = math.exp %360 : vector<1x64x16xf32>
    %cst_143 = arith.constant dense<0.000000e+00> : vector<1x64xf32>
    %362 = vector.multi_reduction <add>, %361, %cst_143 [2] : vector<1x64x16xf32> to vector<1x64xf32>
    %363 = vector.shape_cast %362 : vector<1x64xf32> to vector<1x64x1xf32>
    %364 = tpu.reciprocal %363 {approx = true} : vector<1x64x1xf32> -> vector<1x64x1xf32>
    %365 = vector.broadcast %364 : vector<1x64x1xf32> to vector<1x64x16xf32>
    %366 = arith.mulf %361, %365 : vector<1x64x16xf32>
    %367 = arith.addf %332, %366 : vector<1x64x16xf32>
    %368 = arith.truncf %366 : vector<1x64x16xf32> to vector<1x64x16xbf16>
    %369 = arith.truncf %351 : vector<1x16x16xf32> to vector<1x16x16xbf16>
    %cst_144 = arith.constant dense<0.000000e+00> : vector<1x64x16xf32>
    %370 = tpu.matmul %368, %369, %cst_144 {dimension_numbers = #tpu.dot_dimension_numbers<[2], [1], [1], [2], [0, 0, 0, 1, 1, 2], [0], [0]>} : vector<1x64x16xbf16>, vector<1x16x16xbf16>, vector<1x64x16xf32> -> vector<1x64x16xf32>
    %cst_145 = arith.constant dense<0.000000e+00> : vector<1x16xf32>
    %371 = vector.multi_reduction <add>, %370, %cst_145 [1] : vector<1x64x16xf32> to vector<1x16xf32>
    %cst_146 = arith.constant 6.400000e+01 : f32
    %372 = vector.broadcast %cst_146 : f32 to vector<1x16xf32>
    %373 = arith.divf %371, %372 : vector<1x16xf32>
    %374 = tpu.concatenate %338, %373 in 1 : vector<1x16xf32>, vector<1x16xf32> -> vector<1x32xf32>
    %375 = arith.truncf %374 : vector<1x32xf32> to vector<1x32xbf16>
    %cst_147 = arith.constant dense<0.000000e+00> : vector<1x10xf32>
    %376 = tpu.matmul %375, %31, %cst_147 {dimension_numbers = #tpu.dot_dimension_numbers<[1], [0], [0], [1], [0, 0, 1, 1], [], []>} : vector<1x32xbf16>, vector<32x10xbf16>, vector<1x10xf32> -> vector<1x10xf32>
    %377 = arith.addf %376, %19 : vector<1x10xf32>
    %c0_148 = arith.constant 0 : index
    %c0_149 = arith.constant 0 : index
    %c0_150 = arith.constant 0 : index
    %c0_151 = arith.constant 0 : index
    %378 = vector.load %arg23[%c0_148, %c0_149, %c0_150, %c0_151] : memref<1x1x1x10xf32, #tpu.memory_space<vmem>>, vector<1x1x1x10xf32>
    %379 = vector.shape_cast %378 : vector<1x1x1x10xf32> to vector<1x10xf32>
    %380 = vector.shape_cast %377 : vector<1x10xf32> to vector<1x1x1x10xf32>
    tpu.vector_store %arg23[%c0_148, %c0_149, %c0_150, %c0_151], %380 {strides = array<i32>} : memref<1x1x1x10xf32, #tpu.memory_space<vmem>>, vector<1x1x1x10xf32>,
    %381 = tpu.transpose %367, [0, 2, 1] : vector<1x64x16xf32> -> vector<1x16x64xf32>
    %cst_152 = arith.constant 5.000000e-01 : f32
    %382 = vector.broadcast %cst_152 : f32 to vector<1x16x64xf32>
    %383 = arith.mulf %381, %382 : vector<1x16x64xf32>
    %c0_153 = arith.constant 0 : index
    %c0_154 = arith.constant 0 : index
    %c0_155 = arith.constant 0 : index
    %c0_156 = arith.constant 0 : index
    %384 = vector.load %arg24[%c0_153, %c0_154, %c0_155, %c0_156] : memref<1x1x16x64xf32, #tpu.memory_space<vmem>>, vector<1x1x16x64xf32>
    %385 = vector.shape_cast %384 : vector<1x1x16x64xf32> to vector<1x16x64xf32>
    %386 = vector.shape_cast %383 : vector<1x16x64xf32> to vector<1x1x16x64xf32>
    tpu.vector_store %arg24[%c0_153, %c0_154, %c0_155, %c0_156], %386 {strides = array<i32>} : memref<1x1x16x64xf32, #tpu.memory_space<vmem>>, vector<1x1x16x64xf32>,
    return
  }
  func.func @transform_0(%arg0: i32, %arg1: i32) -> (i32, i32, i32) {
    %c0_i32 = arith.constant 0 : i32
    %c0_i32_0 = arith.constant 0 : i32
    %c0_i32_1 = arith.constant 0 : i32
    return %arg0, %c0_i32, %c0_i32_0 : i32, i32, i32
  }
  func.func @transform_1(%arg0: i32, %arg1: i32) -> (i32, i32, i32, i32) {
    %c0_i32 = arith.constant 0 : i32
    %c0_i32_0 = arith.constant 0 : i32
    %c0_i32_1 = arith.constant 0 : i32
    return %arg1, %arg0, %c0_i32, %c0_i32_0 : i32, i32, i32, i32
  }
  func.func @transform_2(%arg0: i32, %arg1: i32) -> (i32, i32, i32) {
    %c0_i32 = arith.constant 0 : i32
    %c0_i32_0 = arith.constant 0 : i32
    %c0_i32_1 = arith.constant 0 : i32
    return %arg1, %c0_i32, %c0_i32_0 : i32, i32, i32
  }
  func.func @transform_3(%arg0: i32, %arg1: i32) -> (i32, i32, i32) {
    %c0_i32 = arith.constant 0 : i32
    %c0_i32_0 = arith.constant 0 : i32
    %c0_i32_1 = arith.constant 0 : i32
    return %arg1, %c0_i32, %c0_i32_0 : i32, i32, i32
  }
  func.func @transform_4(%arg0: i32, %arg1: i32) -> (i32, i32, i32) {
    %c0_i32 = arith.constant 0 : i32
    %c0_i32_0 = arith.constant 0 : i32
    %c0_i32_1 = arith.constant 0 : i32
    return %arg1, %c0_i32, %c0_i32_0 : i32, i32, i32
  }
  func.func @transform_5(%arg0: i32, %arg1: i32) -> (i32, i32, i32) {
    %c0_i32 = arith.constant 0 : i32
    %c0_i32_0 = arith.constant 0 : i32
    %c0_i32_1 = arith.constant 0 : i32
    return %arg1, %c0_i32, %c0_i32_0 : i32, i32, i32
  }
  func.func @transform_6(%arg0: i32, %arg1: i32) -> (i32, i32, i32) {
    %c0_i32 = arith.constant 0 : i32
    %c0_i32_0 = arith.constant 0 : i32
    %c0_i32_1 = arith.constant 0 : i32
    return %arg1, %c0_i32, %c0_i32_0 : i32, i32, i32
  }
  func.func @transform_7(%arg0: i32, %arg1: i32) -> (i32, i32, i32) {
    %c0_i32 = arith.constant 0 : i32
    %c0_i32_0 = arith.constant 0 : i32
    %c0_i32_1 = arith.constant 0 : i32
    return %arg1, %c0_i32, %c0_i32_0 : i32, i32, i32
  }
  func.func @transform_8(%arg0: i32, %arg1: i32) -> (i32, i32, i32) {
    %c0_i32 = arith.constant 0 : i32
    %c0_i32_0 = arith.constant 0 : i32
    %c0_i32_1 = arith.constant 0 : i32
    return %arg1, %c0_i32, %c0_i32_0 : i32, i32, i32
  }
  func.func @transform_9(%arg0: i32, %arg1: i32) -> (i32, i32, i32) {
    %c0_i32 = arith.constant 0 : i32
    %c0_i32_0 = arith.constant 0 : i32
    %c0_i32_1 = arith.constant 0 : i32
    return %arg1, %c0_i32, %c0_i32_0 : i32, i32, i32
  }
  func.func @transform_10(%arg0: i32, %arg1: i32) -> (i32, i32, i32) {
    %c0_i32 = arith.constant 0 : i32
    %c0_i32_0 = arith.constant 0 : i32
    %c0_i32_1 = arith.constant 0 : i32
    return %arg1, %c0_i32, %c0_i32_0 : i32, i32, i32
  }
  func.func @transform_11(%arg0: i32, %arg1: i32) -> (i32, i32, i32) {
    %c0_i32 = arith.constant 0 : i32
    %c0_i32_0 = arith.constant 0 : i32
    %c0_i32_1 = arith.constant 0 : i32
    return %arg1, %c0_i32, %c0_i32_0 : i32, i32, i32
  }
  func.func @transform_12(%arg0: i32, %arg1: i32) -> (i32, i32, i32) {
    %c0_i32 = arith.constant 0 : i32
    %c0_i32_0 = arith.constant 0 : i32
    %c0_i32_1 = arith.constant 0 : i32
    return %arg1, %c0_i32, %c0_i32_0 : i32, i32, i32
  }
  func.func @transform_13(%arg0: i32, %arg1: i32) -> (i32, i32, i32) {
    %c0_i32 = arith.constant 0 : i32
    %c0_i32_0 = arith.constant 0 : i32
    %c0_i32_1 = arith.constant 0 : i32
    return %arg1, %c0_i32, %c0_i32_0 : i32, i32, i32
  }
  func.func @transform_14(%arg0: i32, %arg1: i32) -> (i32, i32, i32) {
    %c0_i32 = arith.constant 0 : i32
    %c0_i32_0 = arith.constant 0 : i32
    %c0_i32_1 = arith.constant 0 : i32
    return %arg1, %c0_i32, %c0_i32_0 : i32, i32, i32
  }
  func.func @transform_15(%arg0: i32, %arg1: i32) -> (i32, i32, i32) {
    %c0_i32 = arith.constant 0 : i32
    %c0_i32_0 = arith.constant 0 : i32
    %c0_i32_1 = arith.constant 0 : i32
    return %arg1, %c0_i32, %c0_i32_0 : i32, i32, i32
  }
  func.func @transform_16(%arg0: i32, %arg1: i32) -> (i32, i32, i32) {
    %c0_i32 = arith.constant 0 : i32
    %c0_i32_0 = arith.constant 0 : i32
    %c0_i32_1 = arith.constant 0 : i32
    return %arg1, %c0_i32, %c0_i32_0 : i32, i32, i32
  }
  func.func @transform_17(%arg0: i32, %arg1: i32) -> (i32, i32, i32, i32) {
    %c0_i32 = arith.constant 0 : i32
    %c0_i32_0 = arith.constant 0 : i32
    %c0_i32_1 = arith.constant 0 : i32
    %c0_i32_2 = arith.constant 0 : i32
    return %arg1, %c0_i32, %c0_i32_0, %c0_i32_1 : i32, i32, i32, i32
  }
  func.func @transform_18(%arg0: i32, %arg1: i32) -> (i32, i32, i32, i32) {
    %c0_i32 = arith.constant 0 : i32
    %c0_i32_0 = arith.constant 0 : i32
    %c0_i32_1 = arith.constant 0 : i32
    %c0_i32_2 = arith.constant 0 : i32
    return %arg1, %c0_i32, %c0_i32_0, %c0_i32_1 : i32, i32, i32, i32
  }
  func.func @transform_19(%arg0: i32, %arg1: i32) -> (i32, i32, i32) {
    %c0_i32 = arith.constant 0 : i32
    %c0_i32_0 = arith.constant 0 : i32
    %c0_i32_1 = arith.constant 0 : i32
    return %arg1, %c0_i32, %c0_i32_0 : i32, i32, i32
  }
  func.func @transform_20(%arg0: i32, %arg1: i32) -> (i32, i32, i32) {
    %c0_i32 = arith.constant 0 : i32
    %c0_i32_0 = arith.constant 0 : i32
    %c0_i32_1 = arith.constant 0 : i32
    return %arg1, %c0_i32, %c0_i32_0 : i32, i32, i32
  }
  func.func @transform_21(%arg0: i32, %arg1: i32) -> (i32, i32, i32, i32) {
    %c0_i32 = arith.constant 0 : i32
    %c0_i32_0 = arith.constant 0 : i32
    %c0_i32_1 = arith.constant 0 : i32
    return %arg1, %arg0, %c0_i32, %c0_i32_0 : i32, i32, i32, i32
  }
  func.func @transform_22(%arg0: i32, %arg1: i32) -> (i32, i32, i32, i32) {
    %c0_i32 = arith.constant 0 : i32
    %c0_i32_0 = arith.constant 0 : i32
    %c0_i32_1 = arith.constant 0 : i32
    return %arg1, %arg0, %c0_i32, %c0_i32_0 : i32, i32, i32, i32
  }
}

</mosaic_0001>

<llo_original>
// kernel: tpu_custom_call.1
$region0: #{tpu_custom_call.1}
  #allocation0 [shape = 'u32[]', space=smem, size = 0x4, offset = 0x4, fixed_abs, tag = 'smem constant byte address 0x4 - core index']
  #allocation1 [shape = 'u32[72,128]{1,0:T(1,128)}', space=vmem, size = 0x9000, scoped, tag = 'internal scratch']
  %s0 = inlined_call_operand.vmem [shape: f32[2,64,32], index: 0, kind: input, shape index: {}]
  %s1 = inlined_call_operand.vmem [shape: f32[3,2,16,32], index: 1, kind: input, shape index: {}]
  %s2 = inlined_call_operand.vmem [shape: f32[3,1,32], index: 2, kind: input, shape index: {}]
  %s3 = inlined_call_operand.vmem [shape: f32[3,1,32], index: 3, kind: input, shape index: {}]
  %s4 = inlined_call_operand.hbm [shape: bf16[3,32,64], index: 4, kind: input, shape index: {}]
  %s5 = inlined_call_operand.vmem [shape: f32[3,1,32], index: 5, kind: input, shape index: {}]
  %s6 = inlined_call_operand.vmem [shape: f32[3,1,32], index: 6, kind: input, shape index: {}]
  %s7 = inlined_call_operand.hbm [shape: bf16[3,32,32], index: 7, kind: input, shape index: {}]
  %s8 = inlined_call_operand.vmem [shape: bf16[3,64,128], index: 8, kind: input, shape index: {}]
  %s9 = inlined_call_operand.vmem [shape: f32[3,1,128], index: 9, kind: input, shape index: {}]
  %s10 = inlined_call_operand.vmem [shape: f32[3,1,32], index: 10, kind: input, shape index: {}]
  %s11 = inlined_call_operand.hbm [shape: f32[3,1,32], index: 11, kind: input, shape index: {}]
  %s12 = inlined_call_operand.hbm [shape: bf16[3,32,32], index: 12, kind: input, shape index: {}]
  %s13 = inlined_call_operand.hbm [shape: f32[3,1,32], index: 13, kind: input, shape index: {}]
  %s14 = inlined_call_operand.hbm [shape: bf16[3,32,32], index: 14, kind: input, shape index: {}]
  %s15 = inlined_call_operand.hbm [shape: f32[3,1,32], index: 15, kind: input, shape index: {}]
  %s16 = inlined_call_operand.hbm [shape: f32[3,16,32], index: 16, kind: input, shape index: {}]
  %s17 = inlined_call_operand.vmem [shape: bf16[3,2,32,16], index: 17, kind: input, shape index: {}]
  %s18 = inlined_call_operand.vmem [shape: bf16[3,2,32,32], index: 18, kind: input, shape index: {}]
  %s19 = inlined_call_operand.vmem [shape: bf16[3,32,10], index: 19, kind: input, shape index: {}]
  %s20 = inlined_call_operand.vmem [shape: f32[3,1,10], index: 20, kind: input, shape index: {}]
  %s21 = inlined_call_operand.hbm [shape: f32[3,2,1,10], index: 21, kind: output, shape index: {0}]
  %s22 = inlined_call_operand.hbm [shape: f32[3,2,16,64], index: 22, kind: output, shape index: {1}]
  %23 = xla_tuple %s21, %s22
  %s24 = sld [smem:[#allocation0]]
  $region157: #{tpu_custom_call.1} parent=0
    _
  %s26 = ssub.s32 1, %s24
  %s27 = scalar_select 0, %s26, %s24
  $region1: #{tpu_custom_call.1} parent=0
    #allocation2 [shape = 'u8[16384]{0}', space=vmem, size = 0x4000, scoped, tag = 'input window, operand 4']
    #allocation3 [shape = 's32[2]{0}', space=sflag, size = 0x8, scoped, tag = 'scoped memory for tpu_custom_call.1']
    #allocation4 [shape = 's32[2]{0}', space=sflag, size = 0x8, scoped, tag = 'scoped memory for tpu_custom_call.1']
    #allocation5 [shape = 'u8[16384]{0}', space=vmem, size = 0x4000, scoped, tag = 'input window, operand 7']
    #allocation6 [shape = 's32[2]{0}', space=sflag, size = 0x8, scoped, tag = 'scoped memory for tpu_custom_call.1']
    #allocation7 [shape = 'u8[1024]{0}', space=vmem, size = 0x400, scoped, tag = 'input window, operand 11']
    #allocation8 [shape = 'u8[16384]{0}', space=vmem, size = 0x4000, scoped, tag = 'input window, operand 12']
    #allocation9 [shape = 's32[2]{0}', space=sflag, size = 0x8, scoped, tag = 'scoped memory for tpu_custom_call.1']
    #allocation10 [shape = 'u8[1024]{0}', space=vmem, size = 0x400, scoped, tag = 'input window, operand 13']
    #allocation11 [shape = 'u8[16384]{0}', space=vmem, size = 0x4000, scoped, tag = 'input window, operand 14']
    #allocation12 [shape = 's32[2]{0}', space=sflag, size = 0x8, scoped, tag = 'scoped memory for tpu_custom_call.1']
    #allocation13 [shape = 'u8[1024]{0}', space=vmem, size = 0x400, scoped, tag = 'input window, operand 15']
    #allocation14 [shape = 'u8[16384]{0}', space=vmem, size = 0x4000, scoped, tag = 'input window, operand 16']
    #allocation15 [shape = 's32[2]{0}', space=sflag, size = 0x8, scoped, tag = 'scoped memory for tpu_custom_call.1']
    #allocation16 [shape = 'u8[1024]{0}', space=vmem, size = 0x400, scoped, tag = 'output window, operand 0']
    #allocation17 [shape = 'u8[16384]{0}', space=vmem, size = 0x4000, scoped, tag = 'output window, operand 1']
    #allocation18 [shape = 's32[2]{0}', space=sflag, size = 0x8, scoped, tag = 'scoped memory for tpu_custom_call.1']
    %28 = vsyncpa [#allocation3], 0
    %s29 = scalar_lea.sflag [#allocation3], 1
    %30 = vsyncpa %s29, 0
    %31 = vsyncpa [#allocation6], 0
    %s32 = scalar_lea.sflag [#allocation6], 1
    %33 = vsyncpa %s32, 0
    %34 = vsyncpa [#allocation9], 0
    %s35 = scalar_lea.sflag [#allocation9], 1
    %36 = vsyncpa %s35, 0
    %37 = vsyncpa [#allocation12], 0
    %s38 = scalar_lea.sflag [#allocation12], 1
    %39 = vsyncpa %s38, 0
    %40 = vsyncpa [#allocation15], 0
    %s41 = scalar_lea.sflag [#allocation15], 1
    %42 = vsyncpa %s41, 0
    %43 = vsyncpa [#allocation4], 0
    %s44 = scalar_lea.sflag [#allocation4], 1
    %45 = vsyncpa %s44, 0
    %46 = vsyncpa [#allocation18], 0
    %s47 = scalar_lea.sflag [#allocation18], 1
    %48 = vsyncpa %s47, 0
    loop: start=0, step=1, limit=8
    $region2: #{tpu_custom_call.1} parent=1 // loop_pre_header
      _
    $region3: #{tpu_custom_call.1} parent=1 // loop_header
      %s50 = sphi 0, %s54
      %p51 = scmp.ge.s32.totalorder %s50, 8
      %s57 = sphi 0, %s69
      %s58 = sphi 0, %s65
      %s59 = sphi 0, %s57
      %s60 = sphi 0, %s58
      %s61 = sphi 0, %s59
      %s62 = sphi 0, %s60
      %s72 = sphi 0, %s74
      %s75 = sphi 0, %s72
      %s76 = sphi 0, %s75
      %s92 = sphi 0, %s76
      %s100 = sphi 0, %s102
      %s103 = sphi 0, %s100
      %s104 = sphi 0, %s103
      %s120 = sphi 0, %s104
      %s126 = sphi 0, %s128
      %s129 = sphi 0, %s126
      %s130 = sphi 0, %s129
      %s146 = sphi 0, %s130
      %s152 = sphi 0, %s154
      %s155 = sphi 0, %s152
      %s156 = sphi 0, %s155
      %s172 = sphi 0, %s156
      %s178 = sphi 0, %s180
      %s181 = sphi 0, %s178
      %s182 = sphi 0, %s181
      %s198 = sphi 0, %s182
      %s204 = sphi 0, %s206
      %s207 = sphi 0, %s204
      %s208 = sphi 0, %s207
      %s224 = sphi 0, %s208
      %s230 = sphi 0, %s232
      %s233 = sphi 0, %s230
      %s234 = sphi 0, %s233
      %s250 = sphi 0, %s234
      %s256 = sphi 0, %s258
      %s259 = sphi 0, %s256
      %s260 = sphi 0, %s259
      %s276 = sphi 0, %s260
      %s282 = sphi 0, %s284
      %s285 = sphi 0, %s282
      %s286 = sphi 0, %s285
      %s302 = sphi 0, %s286
      %s308 = sphi 0, %s310
      %s311 = sphi 0, %s308
      %s312 = sphi 0, %s311
      %s328 = sphi 0, %s312
      %s334 = sphi 0, %s336
      %s337 = sphi 0, %s334
      %s338 = sphi 0, %s337
      %s354 = sphi 0, %s338
      %s360 = sphi 0, %s362
      %s363 = sphi 0, %s360
      %s364 = sphi 0, %s363
      %s380 = sphi 0, %s364
      %s386 = sphi 0, %s388
      %s389 = sphi 0, %s386
      %s390 = sphi 0, %s389
      %s406 = sphi 0, %s390
      %s412 = sphi 0, %s414
      %s415 = sphi 0, %s412
      %s416 = sphi 0, %s415
      %s432 = sphi 0, %s416
      %s438 = sphi 0, %s440
      %s441 = sphi 0, %s438
      %s442 = sphi 0, %s441
      %s458 = sphi 0, %s442
      %s464 = sphi 0, %s466
      %s467 = sphi 0, %s464
      %s468 = sphi 0, %s467
      %s484 = sphi 0, %s468
      %s490 = sphi 0, %s492
      %s493 = sphi 0, %s490
      %s494 = sphi 0, %s493
      %s510 = sphi 0, %s494
      %s516 = sphi 0, %s518
      %s519 = sphi 0, %s516
      %s520 = sphi 0, %s519
      %s536 = sphi 0, %s520
      %s542 = sphi 0, %s544
      %s545 = sphi 0, %s542
      %s546 = sphi 0, %s545
      %s562 = sphi 0, %s546
      %s568 = sphi 0, %s570
      %s571 = sphi 0, %s568
      %s572 = sphi 0, %s571
      %s588 = sphi 0, %s572
      %s594 = sphi 0, %s596
      %s597 = sphi 0, %s594
      %s598 = sphi 0, %s597
      %s614 = sphi 0, %s598
      %s622 = sphi 0, %s624
      %s625 = sphi 0, %s622
      %s626 = sphi 0, %s625
      %s642 = sphi 0, %s626
      %s650 = sphi 0, %s652
      %s653 = sphi 0, %s650
      %s654 = sphi 0, %s653
      %s670 = sphi 0, %s654
    $region4: #{tpu_custom_call.1} parent=1 // loop_header_branch
      %53 = sbr.rel (%p51) target = $region8
    $region5: #{tpu_custom_call.1} parent=1 // loop_body
      %s55 = ssub.s32 %s50, 1
      %s56 = ssub.s32 %s50, 2
      %s63 = sadd.s32 1, %s58
      %p64 = scmp.ge.s32.totalorder %s63, 3
      %s65 = scalar_select %p64, 0, %s63
      %s66 = sadd.s32 1, %s57
      %s67 = scalar_select %p64, %s66, %s57
      %p68 = scmp.ge.s32.totalorder %s67, 2
      %s69 = scalar_select %p68, 0, %s67
      %s70 = ssub.s32 %s57, %s69
      %p71 = scmp.eq.s32.totalorder %s70, 0
      %s73 = sadd.s32 %s72, 1
      %s74 = scalar_select %p71, %s72, %s73
      %p77 = pneg %p71
      %p78 = scmp.eq.s32.totalorder %s50, 5
      %p79 = por %p77, %p78
      %p80 = scmp.ne.s32.totalorder %s72, %s75
      %p81 = scmp.eq.s32.totalorder %s50, 0
      %p82 = por %p80, %p81
      %p83 = scmp.ne.s32.totalorder %s72, %s75
      %p84 = scmp.eq.s32.totalorder %s55, 5
      %p85 = por %p83, %p84
      %p86 = scmp.ne.s32.totalorder %s75, %s76
      %p87 = scmp.eq.s32.totalorder %s55, 0
      %p88 = por %p86, %p87
      %p89 = scmp.ne.s32.totalorder %s75, %s76
      %p90 = scmp.eq.s32.totalorder %s56, 5
      %p91 = por %p89, %p90
      %p93 = scmp.ne.s32.totalorder %s76, %s92
      %p94 = scmp.eq.s32.totalorder %s56, 0
      %p95 = por %p93, %p94
      %s96 = ssub.s32 %s58, %s65
      %s97 = ssub.s32 %s57, %s69
      %s98 = sor.u32 %s96, %s97
      %p99 = scmp.eq.s32.totalorder %s98, 0
      %s101 = sadd.s32 %s100, 1
      %s102 = scalar_select %p99, %s100, %s101
      %p105 = pneg %p99
      %p106 = scmp.eq.s32.totalorder %s50, 5
      %p107 = por %p105, %p106
      %p108 = scmp.ne.s32.totalorder %s100, %s103
      %p109 = scmp.eq.s32.totalorder %s50, 0
      %p110 = por %p108, %p109
      %p111 = scmp.ne.s32.totalorder %s100, %s103
      %p112 = scmp.eq.s32.totalorder %s55, 5
      %p113 = por %p111, %p112
      %p114 = scmp.ne.s32.totalorder %s103, %s104
      %p115 = scmp.eq.s32.totalorder %s55, 0
      %p116 = por %p114, %p115
      %p117 = scmp.ne.s32.totalorder %s103, %s104
      %p118 = scmp.eq.s32.totalorder %s56, 5
      %p119 = por %p117, %p118
      %p121 = scmp.ne.s32.totalorder %s104, %s120
      %p122 = scmp.eq.s32.totalorder %s56, 0
      %p123 = por %p121, %p122
      %s124 = ssub.s32 %s58, %s65
      %p125 = scmp.eq.s32.totalorder %s124, 0
      %s127 = sadd.s32 %s126, 1
      %s128 = scalar_select %p125, %s126, %s127
      %p131 = pneg %p125
      %p132 = scmp.eq.s32.totalorder %s50, 5
      %p133 = por %p131, %p132
      %p134 = scmp.ne.s32.totalorder %s126, %s129
      %p135 = scmp.eq.s32.totalorder %s50, 0
      %p136 = por %p134, %p135
      %p137 = scmp.ne.s32.totalorder %s126, %s129
      %p138 = scmp.eq.s32.totalorder %s55, 5
      %p139 = por %p137, %p138
      %p140 = scmp.ne.s32.totalorder %s129, %s130
      %p141 = scmp.eq.s32.totalorder %s55, 0
      %p142 = por %p140, %p141
      %p143 = scmp.ne.s32.totalorder %s129, %s130
      %p144 = scmp.eq.s32.totalorder %s56, 5
      %p145 = por %p143, %p144
      %p147 = scmp.ne.s32.totalorder %s130, %s146
      %p148 = scmp.eq.s32.totalorder %s56, 0
      %p149 = por %p147, %p148
      %s150 = ssub.s32 %s58, %s65
      %p151 = scmp.eq.s32.totalorder %s150, 0
      %s153 = sadd.s32 %s152, 1
      %s154 = scalar_select %p151, %s152, %s153
      %p157 = pneg %p151
      %p158 = scmp.eq.s32.totalorder %s50, 5
      %p159 = por %p157, %p158
      %p160 = scmp.ne.s32.totalorder %s152, %s155
      %p161 = scmp.eq.s32.totalorder %s50, 0
      %p162 = por %p160, %p161
      %p163 = scmp.ne.s32.totalorder %s152, %s155
      %p164 = scmp.eq.s32.totalorder %s55, 5
      %p165 = por %p163, %p164
      %p166 = scmp.ne.s32.totalorder %s155, %s156
      %p167 = scmp.eq.s32.totalorder %s55, 0
      %p168 = por %p166, %p167
      %p169 = scmp.ne.s32.totalorder %s155, %s156
      %p170 = scmp.eq.s32.totalorder %s56, 5
      %p171 = por %p169, %p170
      %p173 = scmp.ne.s32.totalorder %s156, %s172
      %p174 = scmp.eq.s32.totalorder %s56, 0
      %p175 = por %p173, %p174
      %s176 = ssub.s32 %s58, %s65
      %p177 = scmp.eq.s32.totalorder %s176, 0
      %s179 = sadd.s32 %s178, 1
      %s180 = scalar_select %p177, %s178, %s179
      %p183 = pneg %p177
      %p184 = scmp.eq.s32.totalorder %s50, 5
      %p185 = por %p183, %p184
      %p186 = scmp.ne.s32.totalorder %s178, %s181
      %p187 = scmp.eq.s32.totalorder %s50, 0
      %p188 = por %p186, %p187
      %p189 = scmp.ne.s32.totalorder %s178, %s181
      %p190 = scmp.eq.s32.totalorder %s55, 5
      %p191 = por %p189, %p190
      %p192 = scmp.ne.s32.totalorder %s181, %s182
      %p193 = scmp.eq.s32.totalorder %s55, 0
      %p194 = por %p192, %p193
      %p195 = scmp.ne.s32.totalorder %s181, %s182
      %p196 = scmp.eq.s32.totalorder %s56, 5
      %p197 = por %p195, %p196
      %p199 = scmp.ne.s32.totalorder %s182, %s198
      %p200 = scmp.eq.s32.totalorder %s56, 0
      %p201 = por %p199, %p200
      %s202 = ssub.s32 %s58, %s65
      %p203 = scmp.eq.s32.totalorder %s202, 0
      %s205 = sadd.s32 %s204, 1
      %s206 = scalar_select %p203, %s204, %s205
      %p209 = pneg %p203
      %p210 = scmp.eq.s32.totalorder %s50, 5
      %p211 = por %p209, %p210
      %p212 = scmp.ne.s32.totalorder %s204, %s207
      %p213 = scmp.eq.s32.totalorder %s50, 0
      %p214 = por %p212, %p213
      %p215 = scmp.ne.s32.totalorder %s204, %s207
      %p216 = scmp.eq.s32.totalorder %s55, 5
      %p217 = por %p215, %p216
      %p218 = scmp.ne.s32.totalorder %s207, %s208
      %p219 = scmp.eq.s32.totalorder %s55, 0
      %p220 = por %p218, %p219
      %p221 = scmp.ne.s32.totalorder %s207, %s208
      %p222 = scmp.eq.s32.totalorder %s56, 5
      %p223 = por %p221, %p222
      %p225 = scmp.ne.s32.totalorder %s208, %s224
      %p226 = scmp.eq.s32.totalorder %s56, 0
      %p227 = por %p225, %p226
      %s228 = ssub.s32 %s58, %s65
      %p229 = scmp.eq.s32.totalorder %s228, 0
      %s231 = sadd.s32 %s230, 1
      %s232 = scalar_select %p229, %s230, %s231
      %p235 = pneg %p229
      %p236 = scmp.eq.s32.totalorder %s50, 5
      %p237 = por %p235, %p236
      %p238 = scmp.ne.s32.totalorder %s230, %s233
      %p239 = scmp.eq.s32.totalorder %s50, 0
      %p240 = por %p238, %p239
      %p241 = scmp.ne.s32.totalorder %s230, %s233
      %p242 = scmp.eq.s32.totalorder %s55, 5
      %p243 = por %p241, %p242
      %p244 = scmp.ne.s32.totalorder %s233, %s234
      %p245 = scmp.eq.s32.totalorder %s55, 0
      %p246 = por %p244, %p245
      %p247 = scmp.ne.s32.totalorder %s233, %s234
      %p248 = scmp.eq.s32.totalorder %s56, 5
      %p249 = por %p247, %p248
      %p251 = scmp.ne.s32.totalorder %s234, %s250
      %p252 = scmp.eq.s32.totalorder %s56, 0
      %p253 = por %p251, %p252
      %s254 = ssub.s32 %s58, %s65
      %p255 = scmp.eq.s32.totalorder %s254, 0
      %s257 = sadd.s32 %s256, 1
      %s258 = scalar_select %p255, %s256, %s257
      %p261 = pneg %p255
      %p262 = scmp.eq.s32.totalorder %s50, 5
      %p263 = por %p261, %p262
      %p264 = scmp.ne.s32.totalorder %s256, %s259
      %p265 = scmp.eq.s32.totalorder %s50, 0
      %p266 = por %p264, %p265
      %p267 = scmp.ne.s32.totalorder %s256, %s259
      %p268 = scmp.eq.s32.totalorder %s55, 5
      %p269 = por %p267, %p268
      %p270 = scmp.ne.s32.totalorder %s259, %s260
      %p271 = scmp.eq.s32.totalorder %s55, 0
      %p272 = por %p270, %p271
      %p273 = scmp.ne.s32.totalorder %s259, %s260
      %p274 = scmp.eq.s32.totalorder %s56, 5
      %p275 = por %p273, %p274
      %p277 = scmp.ne.s32.totalorder %s260, %s276
      %p278 = scmp.eq.s32.totalorder %s56, 0
      %p279 = por %p277, %p278
      %s280 = ssub.s32 %s58, %s65
      %p281 = scmp.eq.s32.totalorder %s280, 0
      %s283 = sadd.s32 %s282, 1
      %s284 = scalar_select %p281, %s282, %s283
      %p287 = pneg %p281
      %p288 = scmp.eq.s32.totalorder %s50, 5
      %p289 = por %p287, %p288
      %p290 = scmp.ne.s32.totalorder %s282, %s285
      %p291 = scmp.eq.s32.totalorder %s50, 0
      %p292 = por %p290, %p291
      %p293 = scmp.ne.s32.totalorder %s282, %s285
      %p294 = scmp.eq.s32.totalorder %s55, 5
      %p295 = por %p293, %p294
      %p296 = scmp.ne.s32.totalorder %s285, %s286
      %p297 = scmp.eq.s32.totalorder %s55, 0
      %p298 = por %p296, %p297
      %p299 = scmp.ne.s32.totalorder %s285, %s286
      %p300 = scmp.eq.s32.totalorder %s56, 5
      %p301 = por %p299, %p300
      %p303 = scmp.ne.s32.totalorder %s286, %s302
      %p304 = scmp.eq.s32.totalorder %s56, 0
      %p305 = por %p303, %p304
      %s306 = ssub.s32 %s58, %s65
      %p307 = scmp.eq.s32.totalorder %s306, 0
      %s309 = sadd.s32 %s308, 1
      %s310 = scalar_select %p307, %s308, %s309
      %p313 = pneg %p307
      %p314 = scmp.eq.s32.totalorder %s50, 5
      %p315 = por %p313, %p314
      %p316 = scmp.ne.s32.totalorder %s308, %s311
      %p317 = scmp.eq.s32.totalorder %s50, 0
      %p318 = por %p316, %p317
      %p319 = scmp.ne.s32.totalorder %s308, %s311
      %p320 = scmp.eq.s32.totalorder %s55, 5
      %p321 = por %p319, %p320
      %p322 = scmp.ne.s32.totalorder %s311, %s312
      %p323 = scmp.eq.s32.totalorder %s55, 0
      %p324 = por %p322, %p323
      %p325 = scmp.ne.s32.totalorder %s311, %s312
      %p326 = scmp.eq.s32.totalorder %s56, 5
      %p327 = por %p325, %p326
      %p329 = scmp.ne.s32.totalorder %s312, %s328
      %p330 = scmp.eq.s32.totalorder %s56, 0
      %p331 = por %p329, %p330
      %s332 = ssub.s32 %s58, %s65
      %p333 = scmp.eq.s32.totalorder %s332, 0
      %s335 = sadd.s32 %s334, 1
      %s336 = scalar_select %p333, %s334, %s335
      %p339 = pneg %p333
      %p340 = scmp.eq.s32.totalorder %s50, 5
      %p341 = por %p339, %p340
      %p342 = scmp.ne.s32.totalorder %s334, %s337
      %p343 = scmp.eq.s32.totalorder %s50, 0
      %p344 = por %p342, %p343
      %p345 = scmp.ne.s32.totalorder %s334, %s337
      %p346 = scmp.eq.s32.totalorder %s55, 5
      %p347 = por %p345, %p346
      %p348 = scmp.ne.s32.totalorder %s337, %s338
      %p349 = scmp.eq.s32.totalorder %s55, 0
      %p350 = por %p348, %p349
      %p351 = scmp.ne.s32.totalorder %s337, %s338
      %p352 = scmp.eq.s32.totalorder %s56, 5
      %p353 = por %p351, %p352
      %p355 = scmp.ne.s32.totalorder %s338, %s354
      %p356 = scmp.eq.s32.totalorder %s56, 0
      %p357 = por %p355, %p356
      %s358 = ssub.s32 %s58, %s65
      %p359 = scmp.eq.s32.totalorder %s358, 0
      %s361 = sadd.s32 %s360, 1
      %s362 = scalar_select %p359, %s360, %s361
      %p365 = pneg %p359
      %p366 = scmp.eq.s32.totalorder %s50, 5
      %p367 = por %p365, %p366
      %p368 = scmp.ne.s32.totalorder %s360, %s363
      %p369 = scmp.eq.s32.totalorder %s50, 0
      %p370 = por %p368, %p369
      %p371 = scmp.ne.s32.totalorder %s360, %s363
      %p372 = scmp.eq.s32.totalorder %s55, 5
      %p373 = por %p371, %p372
      %p374 = scmp.ne.s32.totalorder %s363, %s364
      %p375 = scmp.eq.s32.totalorder %s55, 0
      %p376 = por %p374, %p375
      %p377 = scmp.ne.s32.totalorder %s363, %s364
      %p378 = scmp.eq.s32.totalorder %s56, 5
      %p379 = por %p377, %p378
      %p381 = scmp.ne.s32.totalorder %s364, %s380
      %p382 = scmp.eq.s32.totalorder %s56, 0
      %p383 = por %p381, %p382
      %s384 = ssub.s32 %s58, %s65
      %p385 = scmp.eq.s32.totalorder %s384, 0
      %s387 = sadd.s32 %s386, 1
      %s388 = scalar_select %p385, %s386, %s387
      %p391 = pneg %p385
      %p392 = scmp.eq.s32.totalorder %s50, 5
      %p393 = por %p391, %p392
      %p394 = scmp.ne.s32.totalorder %s386, %s389
      %p395 = scmp.eq.s32.totalorder %s50, 0
      %p396 = por %p394, %p395
      %p397 = scmp.ne.s32.totalorder %s386, %s389
      %p398 = scmp.eq.s32.totalorder %s55, 5
      %p399 = por %p397, %p398
      %p400 = scmp.ne.s32.totalorder %s389, %s390
      %p401 = scmp.eq.s32.totalorder %s55, 0
      %p402 = por %p400, %p401
      %p403 = scmp.ne.s32.totalorder %s389, %s390
      %p404 = scmp.eq.s32.totalorder %s56, 5
      %p405 = por %p403, %p404
      %p407 = scmp.ne.s32.totalorder %s390, %s406
      %p408 = scmp.eq.s32.totalorder %s56, 0
      %p409 = por %p407, %p408
      %s410 = ssub.s32 %s58, %s65
      %p411 = scmp.eq.s32.totalorder %s410, 0
      %s413 = sadd.s32 %s412, 1
      %s414 = scalar_select %p411, %s412, %s413
      %p417 = pneg %p411
      %p418 = scmp.eq.s32.totalorder %s50, 5
      %p419 = por %p417, %p418
      %p420 = scmp.ne.s32.totalorder %s412, %s415
      %p421 = scmp.eq.s32.totalorder %s50, 0
      %p422 = por %p420, %p421
      %p423 = scmp.ne.s32.totalorder %s412, %s415
      %p424 = scmp.eq.s32.totalorder %s55, 5
      %p425 = por %p423, %p424
      %p426 = scmp.ne.s32.totalorder %s415, %s416
      %p427 = scmp.eq.s32.totalorder %s55, 0
      %p428 = por %p426, %p427
      %p429 = scmp.ne.s32.totalorder %s415, %s416
      %p430 = scmp.eq.s32.totalorder %s56, 5
      %p431 = por %p429, %p430
      %p433 = scmp.ne.s32.totalorder %s416, %s432
      %p434 = scmp.eq.s32.totalorder %s56, 0
      %p435 = por %p433, %p434
      %s436 = ssub.s32 %s58, %s65
      %p437 = scmp.eq.s32.totalorder %s436, 0
      %s439 = sadd.s32 %s438, 1
      %s440 = scalar_select %p437, %s438, %s439
      %p443 = pneg %p437
      %p444 = scmp.eq.s32.totalorder %s50, 5
      %p445 = por %p443, %p444
      %p446 = scmp.ne.s32.totalorder %s438, %s441
      %p447 = scmp.eq.s32.totalorder %s50, 0
      %p448 = por %p446, %p447
      %p449 = scmp.ne.s32.totalorder %s438, %s441
      %p450 = scmp.eq.s32.totalorder %s55, 5
      %p451 = por %p449, %p450
      %p452 = scmp.ne.s32.totalorder %s441, %s442
      %p453 = scmp.eq.s32.totalorder %s55, 0
      %p454 = por %p452, %p453
      %p455 = scmp.ne.s32.totalorder %s441, %s442
      %p456 = scmp.eq.s32.totalorder %s56, 5
      %p457 = por %p455, %p456
      %p459 = scmp.ne.s32.totalorder %s442, %s458
      %p460 = scmp.eq.s32.totalorder %s56, 0
      %p461 = por %p459, %p460
      %s462 = ssub.s32 %s58, %s65
      %p463 = scmp.eq.s32.totalorder %s462, 0
      %s465 = sadd.s32 %s464, 1
      %s466 = scalar_select %p463, %s464, %s465
      %p469 = pneg %p463
      %p470 = scmp.eq.s32.totalorder %s50, 5
      %p471 = por %p469, %p470
      %p472 = scmp.ne.s32.totalorder %s464, %s467
      %p473 = scmp.eq.s32.totalorder %s50, 0
      %p474 = por %p472, %p473
      %p475 = scmp.ne.s32.totalorder %s464, %s467
      %p476 = scmp.eq.s32.totalorder %s55, 5
      %p477 = por %p475, %p476
      %p478 = scmp.ne.s32.totalorder %s467, %s468
      %p479 = scmp.eq.s32.totalorder %s55, 0
      %p480 = por %p478, %p479
      %p481 = scmp.ne.s32.totalorder %s467, %s468
      %p482 = scmp.eq.s32.totalorder %s56, 5
      %p483 = por %p481, %p482
      %p485 = scmp.ne.s32.totalorder %s468, %s484
      %p486 = scmp.eq.s32.totalorder %s56, 0
      %p487 = por %p485, %p486
      %s488 = ssub.s32 %s58, %s65
      %p489 = scmp.eq.s32.totalorder %s488, 0
      %s491 = sadd.s32 %s490, 1
      %s492 = scalar_select %p489, %s490, %s491
      %p495 = pneg %p489
      %p496 = scmp.eq.s32.totalorder %s50, 5
      %p497 = por %p495, %p496
      %p498 = scmp.ne.s32.totalorder %s490, %s493
      %p499 = scmp.eq.s32.totalorder %s50, 0
      %p500 = por %p498, %p499
      %p501 = scmp.ne.s32.totalorder %s490, %s493
      %p502 = scmp.eq.s32.totalorder %s55, 5
      %p503 = por %p501, %p502
      %p504 = scmp.ne.s32.totalorder %s493, %s494
      %p505 = scmp.eq.s32.totalorder %s55, 0
      %p506 = por %p504, %p505
      %p507 = scmp.ne.s32.totalorder %s493, %s494
      %p508 = scmp.eq.s32.totalorder %s56, 5
      %p509 = por %p507, %p508
      %p511 = scmp.ne.s32.totalorder %s494, %s510
      %p512 = scmp.eq.s32.totalorder %s56, 0
      %p513 = por %p511, %p512
      %s514 = ssub.s32 %s58, %s65
      %p515 = scmp.eq.s32.totalorder %s514, 0
      %s517 = sadd.s32 %s516, 1
      %s518 = scalar_select %p515, %s516, %s517
      %p521 = pneg %p515
      %p522 = scmp.eq.s32.totalorder %s50, 5
      %p523 = por %p521, %p522
      %p524 = scmp.ne.s32.totalorder %s516, %s519
      %p525 = scmp.eq.s32.totalorder %s50, 0
      %p526 = por %p524, %p525
      %p527 = scmp.ne.s32.totalorder %s516, %s519
      %p528 = scmp.eq.s32.totalorder %s55, 5
      %p529 = por %p527, %p528
      %p530 = scmp.ne.s32.totalorder %s519, %s520
      %p531 = scmp.eq.s32.totalorder %s55, 0
      %p532 = por %p530, %p531
      %p533 = scmp.ne.s32.totalorder %s519, %s520
      %p534 = scmp.eq.s32.totalorder %s56, 5
      %p535 = por %p533, %p534
      %p537 = scmp.ne.s32.totalorder %s520, %s536
      %p538 = scmp.eq.s32.totalorder %s56, 0
      %p539 = por %p537, %p538
      %s540 = ssub.s32 %s58, %s65
      %p541 = scmp.eq.s32.totalorder %s540, 0
      %s543 = sadd.s32 %s542, 1
      %s544 = scalar_select %p541, %s542, %s543
      %p547 = pneg %p541
      %p548 = scmp.eq.s32.totalorder %s50, 5
      %p549 = por %p547, %p548
      %p550 = scmp.ne.s32.totalorder %s542, %s545
      %p551 = scmp.eq.s32.totalorder %s50, 0
      %p552 = por %p550, %p551
      %p553 = scmp.ne.s32.totalorder %s542, %s545
      %p554 = scmp.eq.s32.totalorder %s55, 5
      %p555 = por %p553, %p554
      %p556 = scmp.ne.s32.totalorder %s545, %s546
      %p557 = scmp.eq.s32.totalorder %s55, 0
      %p558 = por %p556, %p557
      %p559 = scmp.ne.s32.totalorder %s545, %s546
      %p560 = scmp.eq.s32.totalorder %s56, 5
      %p561 = por %p559, %p560
      %p563 = scmp.ne.s32.totalorder %s546, %s562
      %p564 = scmp.eq.s32.totalorder %s56, 0
      %p565 = por %p563, %p564
      %s566 = ssub.s32 %s58, %s65
      %p567 = scmp.eq.s32.totalorder %s566, 0
      %s569 = sadd.s32 %s568, 1
      %s570 = scalar_select %p567, %s568, %s569
      %p573 = pneg %p567
      %p574 = scmp.eq.s32.totalorder %s50, 5
      %p575 = por %p573, %p574
      %p576 = scmp.ne.s32.totalorder %s568, %s571
      %p577 = scmp.eq.s32.totalorder %s50, 0
      %p578 = por %p576, %p577
      %p579 = scmp.ne.s32.totalorder %s568, %s571
      %p580 = scmp.eq.s32.totalorder %s55, 5
      %p581 = por %p579, %p580
      %p582 = scmp.ne.s32.totalorder %s571, %s572
      %p583 = scmp.eq.s32.totalorder %s55, 0
      %p584 = por %p582, %p583
      %p585 = scmp.ne.s32.totalorder %s571, %s572
      %p586 = scmp.eq.s32.totalorder %s56, 5
      %p587 = por %p585, %p586
      %p589 = scmp.ne.s32.totalorder %s572, %s588
      %p590 = scmp.eq.s32.totalorder %s56, 0
      %p591 = por %p589, %p590
      %s592 = ssub.s32 %s58, %s65
      %p593 = scmp.eq.s32.totalorder %s592, 0
      %s595 = sadd.s32 %s594, 1
      %s596 = scalar_select %p593, %s594, %s595
      %p599 = pneg %p593
      %p600 = scmp.eq.s32.totalorder %s50, 5
      %p601 = por %p599, %p600
      %p602 = scmp.ne.s32.totalorder %s594, %s597
      %p603 = scmp.eq.s32.totalorder %s50, 0
      %p604 = por %p602, %p603
      %p605 = scmp.ne.s32.totalorder %s594, %s597
      %p606 = scmp.eq.s32.totalorder %s55, 5
      %p607 = por %p605, %p606
      %p608 = scmp.ne.s32.totalorder %s597, %s598
      %p609 = scmp.eq.s32.totalorder %s55, 0
      %p610 = por %p608, %p609
      %p611 = scmp.ne.s32.totalorder %s597, %s598
      %p612 = scmp.eq.s32.totalorder %s56, 5
      %p613 = por %p611, %p612
      %p615 = scmp.ne.s32.totalorder %s598, %s614
      %p616 = scmp.eq.s32.totalorder %s56, 0
      %p617 = por %p615, %p616
      %s618 = ssub.s32 %s58, %s65
      %s619 = ssub.s32 %s57, %s69
      %s620 = sor.u32 %s618, %s619
      %p621 = scmp.eq.s32.totalorder %s620, 0
      %s623 = sadd.s32 %s622, 1
      %s624 = scalar_select %p621, %s622, %s623
      %p627 = pneg %p621
      %p628 = scmp.eq.s32.totalorder %s50, 5
      %p629 = por %p627, %p628
      %p630 = scmp.ne.s32.totalorder %s622, %s625
      %p631 = scmp.eq.s32.totalorder %s50, 0
      %p632 = por %p630, %p631
      %p633 = scmp.ne.s32.totalorder %s622, %s625
      %p634 = scmp.eq.s32.totalorder %s55, 5
      %p635 = por %p633, %p634
      %p636 = scmp.ne.s32.totalorder %s625, %s626
      %p637 = scmp.eq.s32.totalorder %s55, 0
      %p638 = por %p636, %p637
      %p639 = scmp.ne.s32.totalorder %s625, %s626
      %p640 = scmp.eq.s32.totalorder %s56, 5
      %p641 = por %p639, %p640
      %p643 = scmp.ne.s32.totalorder %s626, %s642
      %p644 = scmp.eq.s32.totalorder %s56, 0
      %p645 = por %p643, %p644
      %s646 = ssub.s32 %s58, %s65
      %s647 = ssub.s32 %s57, %s69
      %s648 = sor.u32 %s646, %s647
      %p649 = scmp.eq.s32.totalorder %s648, 0
      %s651 = sadd.s32 %s650, 1
      %s652 = scalar_select %p649, %s650, %s651
      %p655 = pneg %p649
      %p656 = scmp.eq.s32.totalorder %s50, 5
      %p657 = por %p655, %p656
      %p658 = scmp.ne.s32.totalorder %s650, %s653
      %p659 = scmp.eq.s32.totalorder %s50, 0
      %p660 = por %p658, %p659
      %p661 = scmp.ne.s32.totalorder %s650, %s653
      %p662 = scmp.eq.s32.totalorder %s55, 5
      %p663 = por %p661, %p662
      %p664 = scmp.ne.s32.totalorder %s653, %s654
      %p665 = scmp.eq.s32.totalorder %s55, 0
      %p666 = por %p664, %p665
      %p667 = scmp.ne.s32.totalorder %s653, %s654
      %p668 = scmp.eq.s32.totalorder %s56, 5
      %p669 = por %p667, %p668
      %p671 = scmp.ne.s32.totalorder %s654, %s670
      %p672 = scmp.eq.s32.totalorder %s56, 0
      %p673 = por %p671, %p672
      %p674 = scmp.le.s32.totalorder 1, %s50
      %p675 = scmp.lt.s32.totalorder %s50, 7
      %p676 = pnand %p674, %p675
      %p677 = pneg %p676
      // Predicated region
      $region9: #{tpu_custom_call.1} parent=5 // pred_check
        _
      $region10: #{tpu_custom_call.1} parent=5 // pred_check_branch
        %679 = sbr.rel (%p676) target = $region12
      $region11: #{tpu_custom_call.1} parent=5 // pred_region
        %s680 = ssub.s32 %s50, 1
      $region12: #{tpu_custom_call.1} parent=5 // pred_fallthru
        _
      %p681 = scmp.lt.s32.totalorder %s50, 6
      // Predicated region
      $region13: #{tpu_custom_call.1} parent=5 // pred_check
        %p682 = pneg %p681
      $region14: #{tpu_custom_call.1} parent=5 // pred_check_branch
        %684 = sbr.rel (%p682) target = $region16
      $region15: #{tpu_custom_call.1} parent=5 // pred_region
        // Predicated region
        $region17: #{tpu_custom_call.1} parent=15 // pred_check
          %p685 = pneg %p82
        $region18: #{tpu_custom_call.1} parent=15 // pred_check_branch
          %687 = sbr.rel (%p685) target = $region20
        $region19: #{tpu_custom_call.1} parent=15 // pred_region
          %p688 = scmp.lt.s32.totalorder %s57, 1
          %s689 = scalar_select %p688, %s57, 1
          %s690 = smul.addr %s689, 8
          %s691 = smul.addr %s690, 8
          %s692 = scalar_lea.vmem %s0, %s691
        $region20: #{tpu_custom_call.1} parent=15 // pred_fallthru
          _
        // Predicated region
        $region21: #{tpu_custom_call.1} parent=15 // pred_check
          %p693 = pneg %p110
        $region22: #{tpu_custom_call.1} parent=15 // pred_check_branch
          %695 = sbr.rel (%p693) target = $region24
        $region23: #{tpu_custom_call.1} parent=15 // pred_region
          %p696 = scmp.lt.s32.totalorder %s58, 2
          %s697 = scalar_select %p696, %s58, 2
          %p698 = scmp.lt.s32.totalorder %s57, 1
          %s699 = scalar_select %p698, %s57, 1
          %s700 = smul.addr %s699, 2
          %s701 = smul.addr %s697, 4
          %s702 = sadd.s32 %s700, %s701
          %s703 = smul.addr %s702, 8
          %s704 = scalar_lea.vmem %s1, %s703
        $region24: #{tpu_custom_call.1} parent=15 // pred_fallthru
          _
        // Predicated region
        $region25: #{tpu_custom_call.1} parent=15 // pred_check
          %p705 = pneg %p136
        $region26: #{tpu_custom_call.1} parent=15 // pred_check_branch
          %707 = sbr.rel (%p705) target = $region28
        $region27: #{tpu_custom_call.1} parent=15 // pred_region
          %p708 = scmp.lt.s32.totalorder %s58, 2
          %s709 = scalar_select %p708, %s58, 2
          %s710 = scalar_lea.vmem %s2, %s709
        $region28: #{tpu_custom_call.1} parent=15 // pred_fallthru
          _
        // Predicated region
        $region29: #{tpu_custom_call.1} parent=15 // pred_check
          %p711 = pneg %p162
        $region30: #{tpu_custom_call.1} parent=15 // pred_check_branch
          %713 = sbr.rel (%p711) target = $region32
        $region31: #{tpu_custom_call.1} parent=15 // pred_region
          %p714 = scmp.lt.s32.totalorder %s58, 2
          %s715 = scalar_select %p714, %s58, 2
          %s716 = scalar_lea.vmem %s3, %s715
        $region32: #{tpu_custom_call.1} parent=15 // pred_fallthru
          _
        // Predicated region
        $region33: #{tpu_custom_call.1} parent=15 // pred_check
          %p717 = pneg %p188
        $region34: #{tpu_custom_call.1} parent=15 // pred_check_branch
          %719 = sbr.rel (%p717) target = $region36
        $region35: #{tpu_custom_call.1} parent=15 // pred_region
          %s720 = sand.u32 %s178, 1
          %s721 = scalar_lea.sflag [#allocation3], %s720
          %s722 = sand.u32 %s178, 1
          %s723 = smul.addr %s722, 16
          %s724 = scalar_lea.vmem [#allocation2], %s723
          %726 = vsyncadd %s721, 0
          %s727 = smul.addr %s58, 4
          %s728 = smul.addr %s727, 4
          %s729 = scalar_lea.hbm %s4, %s728
          %s730 = sshll.u32 %s729, 4
          %s731 = int_to_ptr.hbm [resolvable:$true] %s730
          %s732 = sshll.u32 %s724, 4
          %s733 = int_to_ptr.vmem [resolvable:$true] %s732
          %738 = dma.hbm_to_vmem [thread:$0]  %s731, 256, %s733, %s721, 64, 64, 4
        $region36: #{tpu_custom_call.1} parent=15 // pred_fallthru
          _
        // Predicated region
        $region37: #{tpu_custom_call.1} parent=15 // pred_check
          %p739 = pneg %p214
        $region38: #{tpu_custom_call.1} parent=15 // pred_check_branch
          %741 = sbr.rel (%p739) target = $region40
        $region39: #{tpu_custom_call.1} parent=15 // pred_region
          %p742 = scmp.lt.s32.totalorder %s58, 2
          %s743 = scalar_select %p742, %s58, 2
          %s744 = scalar_lea.vmem %s5, %s743
        $region40: #{tpu_custom_call.1} parent=15 // pred_fallthru
          _
        // Predicated region
        $region41: #{tpu_custom_call.1} parent=15 // pred_check
          %p745 = pneg %p240
        $region42: #{tpu_custom_call.1} parent=15 // pred_check_branch
          %747 = sbr.rel (%p745) target = $region44
        $region43: #{tpu_custom_call.1} parent=15 // pred_region
          %p748 = scmp.lt.s32.totalorder %s58, 2
          %s749 = scalar_select %p748, %s58, 2
          %s750 = scalar_lea.vmem %s6, %s749
        $region44: #{tpu_custom_call.1} parent=15 // pred_fallthru
          _
        // Predicated region
        $region45: #{tpu_custom_call.1} parent=15 // pred_check
          %p751 = pneg %p266
        $region46: #{tpu_custom_call.1} parent=15 // pred_check_branch
          %753 = sbr.rel (%p751) target = $region48
        $region47: #{tpu_custom_call.1} parent=15 // pred_region
          %s754 = sand.u32 %s50, 1
          %s755 = scalar_lea.sflag [#allocation6], %s754
          %s756 = sand.u32 %s256, 1
          %s757 = smul.addr %s756, 16
          %s758 = scalar_lea.vmem [#allocation5], %s757
          %760 = vsyncadd %s755, 0
          %s761 = smul.addr %s58, 4
          %s762 = smul.addr %s761, 4
          %s763 = scalar_lea.hbm %s7, %s762
          %s764 = sshll.u32 %s763, 4
          %s765 = int_to_ptr.hbm [resolvable:$true] %s764
          %s766 = sshll.u32 %s758, 4
          %s767 = int_to_ptr.vmem [resolvable:$true] %s766
          %772 = dma.hbm_to_vmem [thread:$0]  %s765, 256, %s767, %s755, 64, 64, 4
        $region48: #{tpu_custom_call.1} parent=15 // pred_fallthru
          _
        // Predicated region
        $region49: #{tpu_custom_call.1} parent=15 // pred_check
          %p773 = pneg %p292
        $region50: #{tpu_custom_call.1} parent=15 // pred_check_branch
          %775 = sbr.rel (%p773) target = $region52
        $region51: #{tpu_custom_call.1} parent=15 // pred_region
          %p776 = scmp.lt.s32.totalorder %s58, 2
          %s777 = scalar_select %p776, %s58, 2
          %s778 = smul.addr %s777, 8
          %s779 = smul.addr %s778, 4
          %s780 = scalar_lea.vmem %s8, %s779
        $region52: #{tpu_custom_call.1} parent=15 // pred_fallthru
          _
        // Predicated region
        $region53: #{tpu_custom_call.1} parent=15 // pred_check
          %p781 = pneg %p318
        $region54: #{tpu_custom_call.1} parent=15 // pred_check_branch
          %783 = sbr.rel (%p781) target = $region56
        $region55: #{tpu_custom_call.1} parent=15 // pred_region
          %p784 = scmp.lt.s32.totalorder %s58, 2
          %s785 = scalar_select %p784, %s58, 2
          %s786 = scalar_lea.vmem %s9, %s785
        $region56: #{tpu_custom_call.1} parent=15 // pred_fallthru
          _
        // Predicated region
        $region57: #{tpu_custom_call.1} parent=15 // pred_check
          %p787 = pneg %p344
        $region58: #{tpu_custom_call.1} parent=15 // pred_check_branch
          %789 = sbr.rel (%p787) target = $region60
        $region59: #{tpu_custom_call.1} parent=15 // pred_region
          %p790 = scmp.lt.s32.totalorder %s58, 2
          %s791 = scalar_select %p790, %s58, 2
          %s792 = scalar_lea.vmem %s10, %s791
        $region60: #{tpu_custom_call.1} parent=15 // pred_fallthru
          _
        // Predicated region
        $region61: #{tpu_custom_call.1} parent=15 // pred_check
          %p793 = pneg %p370
        $region62: #{tpu_custom_call.1} parent=15 // pred_check_branch
          %795 = sbr.rel (%p793) target = $region64
        $region63: #{tpu_custom_call.1} parent=15 // pred_region
          %s796 = sand.u32 %s50, 1
          %s797 = scalar_lea.sflag [#allocation6], %s796
          %s798 = sand.u32 %s360, 1
          %s799 = scalar_lea.vmem [#allocation7], %s798
          %801 = vsyncadd %s797, 0
          %s802 = scalar_lea.hbm %s11, %s58
          %s804 = sshll.u32 %s802, 4
          %s805 = int_to_ptr.hbm [resolvable:$true] %s804
          %s806 = sshll.u32 %s799, 4
          %s807 = int_to_ptr.vmem [resolvable:$true] %s806
          %809 = dma.hbm_to_vmem [thread:$0]  %s805, 16, %s807, %s797
        $region64: #{tpu_custom_call.1} parent=15 // pred_fallthru
          _
        // Predicated region
        $region65: #{tpu_custom_call.1} parent=15 // pred_check
          %p810 = pneg %p396
        $region66: #{tpu_custom_call.1} parent=15 // pred_check_branch
          %812 = sbr.rel (%p810) target = $region68
        $region67: #{tpu_custom_call.1} parent=15 // pred_region
          %s813 = sand.u32 %s50, 1
          %s814 = scalar_lea.sflag [#allocation9], %s813
          %s815 = sand.u32 %s386, 1
          %s816 = smul.addr %s815, 16
          %s817 = scalar_lea.vmem [#allocation8], %s816
          %819 = vsyncadd %s814, 0
          %s820 = smul.addr %s58, 4
          %s821 = smul.addr %s820, 4
          %s822 = scalar_lea.hbm %s12, %s821
          %s823 = sshll.u32 %s822, 4
          %s824 = int_to_ptr.hbm [resolvable:$true] %s823
          %s825 = sshll.u32 %s817, 4
          %s826 = int_to_ptr.vmem [resolvable:$true] %s825
          %831 = dma.hbm_to_vmem [thread:$0]  %s824, 256, %s826, %s814, 64, 64, 4
        $region68: #{tpu_custom_call.1} parent=15 // pred_fallthru
          _
        // Predicated region
        $region69: #{tpu_custom_call.1} parent=15 // pred_check
          %p832 = pneg %p422
        $region70: #{tpu_custom_call.1} parent=15 // pred_check_branch
          %834 = sbr.rel (%p832) target = $region72
        $region71: #{tpu_custom_call.1} parent=15 // pred_region
          %s835 = sand.u32 %s50, 1
          %s836 = scalar_lea.sflag [#allocation9], %s835
          %s837 = sand.u32 %s412, 1
          %s838 = scalar_lea.vmem [#allocation10], %s837
          %840 = vsyncadd %s836, 0
          %s841 = scalar_lea.hbm %s13, %s58
          %s843 = sshll.u32 %s841, 4
          %s844 = int_to_ptr.hbm [resolvable:$true] %s843
          %s845 = sshll.u32 %s838, 4
          %s846 = int_to_ptr.vmem [resolvable:$true] %s845
          %848 = dma.hbm_to_vmem [thread:$0]  %s844, 16, %s846, %s836
        $region72: #{tpu_custom_call.1} parent=15 // pred_fallthru
          _
        // Predicated region
        $region73: #{tpu_custom_call.1} parent=15 // pred_check
          %p849 = pneg %p448
        $region74: #{tpu_custom_call.1} parent=15 // pred_check_branch
          %851 = sbr.rel (%p849) target = $region76
        $region75: #{tpu_custom_call.1} parent=15 // pred_region
          %s852 = sand.u32 %s50, 1
          %s853 = scalar_lea.sflag [#allocation12], %s852
          %s854 = sand.u32 %s438, 1
          %s855 = smul.addr %s854, 16
          %s856 = scalar_lea.vmem [#allocation11], %s855
          %858 = vsyncadd %s853, 0
          %s859 = smul.addr %s58, 4
          %s860 = smul.addr %s859, 4
          %s861 = scalar_lea.hbm %s14, %s860
          %s862 = sshll.u32 %s861, 4
          %s863 = int_to_ptr.hbm [resolvable:$true] %s862
          %s864 = sshll.u32 %s856, 4
          %s865 = int_to_ptr.vmem [resolvable:$true] %s864
          %870 = dma.hbm_to_vmem [thread:$0]  %s863, 256, %s865, %s853, 64, 64, 4
        $region76: #{tpu_custom_call.1} parent=15 // pred_fallthru
          _
        // Predicated region
        $region77: #{tpu_custom_call.1} parent=15 // pred_check
          %p871 = pneg %p474
        $region78: #{tpu_custom_call.1} parent=15 // pred_check_branch
          %873 = sbr.rel (%p871) target = $region80
        $region79: #{tpu_custom_call.1} parent=15 // pred_region
          %s874 = sand.u32 %s50, 1
          %s875 = scalar_lea.sflag [#allocation12], %s874
          %s876 = sand.u32 %s464, 1
          %s877 = scalar_lea.vmem [#allocation13], %s876
          %879 = vsyncadd %s875, 0
          %s880 = scalar_lea.hbm %s15, %s58
          %s882 = sshll.u32 %s880, 4
          %s883 = int_to_ptr.hbm [resolvable:$true] %s882
          %s884 = sshll.u32 %s877, 4
          %s885 = int_to_ptr.vmem [resolvable:$true] %s884
          %887 = dma.hbm_to_vmem [thread:$0]  %s883, 16, %s885, %s875
        $region80: #{tpu_custom_call.1} parent=15 // pred_fallthru
          _
        // Predicated region
        $region81: #{tpu_custom_call.1} parent=15 // pred_check
          %p888 = pneg %p500
        $region82: #{tpu_custom_call.1} parent=15 // pred_check_branch
          %890 = sbr.rel (%p888) target = $region84
        $region83: #{tpu_custom_call.1} parent=15 // pred_region
          %s891 = sand.u32 %s490, 1
          %s892 = scalar_lea.sflag [#allocation15], %s891
          %s893 = sand.u32 %s490, 1
          %s894 = smul.addr %s893, 16
          %s895 = scalar_lea.vmem [#allocation14], %s894
          %897 = vsyncadd %s892, 0
          %s898 = smul.addr %s58, 2
          %s899 = smul.addr %s898, 8
          %s900 = scalar_lea.hbm %s16, %s899
          %s901 = sshll.u32 %s900, 4
          %s902 = int_to_ptr.hbm [resolvable:$true] %s901
          %s903 = sshll.u32 %s895, 4
          %s904 = int_to_ptr.vmem [resolvable:$true] %s903
          %909 = dma.hbm_to_vmem [thread:$0]  %s902, 256, %s904, %s892, 128, 128, 8
        $region84: #{tpu_custom_call.1} parent=15 // pred_fallthru
          _
        // Predicated region
        $region85: #{tpu_custom_call.1} parent=15 // pred_check
          %p910 = pneg %p526
        $region86: #{tpu_custom_call.1} parent=15 // pred_check_branch
          %912 = sbr.rel (%p910) target = $region88
        $region87: #{tpu_custom_call.1} parent=15 // pred_region
          %p913 = scmp.lt.s32.totalorder %s58, 2
          %s914 = scalar_select %p913, %s58, 2
          %s915 = smul.addr %s914, 8
          %s916 = smul.addr %s915, 4
          %s917 = scalar_lea.vmem %s17, %s916
        $region88: #{tpu_custom_call.1} parent=15 // pred_fallthru
          _
        // Predicated region
        $region89: #{tpu_custom_call.1} parent=15 // pred_check
          %p918 = pneg %p552
        $region90: #{tpu_custom_call.1} parent=15 // pred_check_branch
          %920 = sbr.rel (%p918) target = $region92
        $region91: #{tpu_custom_call.1} parent=15 // pred_region
          %p921 = scmp.lt.s32.totalorder %s58, 2
          %s922 = scalar_select %p921, %s58, 2
          %s923 = smul.addr %s922, 8
          %s924 = smul.addr %s923, 4
          %s925 = scalar_lea.vmem %s18, %s924
        $region92: #{tpu_custom_call.1} parent=15 // pred_fallthru
          _
        // Predicated region
        $region93: #{tpu_custom_call.1} parent=15 // pred_check
          %p926 = pneg %p578
        $region94: #{tpu_custom_call.1} parent=15 // pred_check_branch
          %928 = sbr.rel (%p926) target = $region96
        $region95: #{tpu_custom_call.1} parent=15 // pred_region
          %p929 = scmp.lt.s32.totalorder %s58, 2
          %s930 = scalar_select %p929, %s58, 2
          %s931 = smul.addr %s930, 4
          %s932 = smul.addr %s931, 4
          %s933 = scalar_lea.vmem %s19, %s932
        $region96: #{tpu_custom_call.1} parent=15 // pred_fallthru
          _
        // Predicated region
        $region97: #{tpu_custom_call.1} parent=15 // pred_check
          %p934 = pneg %p604
        $region98: #{tpu_custom_call.1} parent=15 // pred_check_branch
          %936 = sbr.rel (%p934) target = $region100
        $region99: #{tpu_custom_call.1} parent=15 // pred_region
          %p937 = scmp.lt.s32.totalorder %s58, 2
          %s938 = scalar_select %p937, %s58, 2
          %s939 = scalar_lea.vmem %s20, %s938
        $region100: #{tpu_custom_call.1} parent=15 // pred_fallthru
          _
      $region16: #{tpu_custom_call.1} parent=5 // pred_fallthru
        _
      %p940 = scmp.le.s32.totalorder 1, %s50
      %p941 = scmp.lt.s32.totalorder %s50, 7
      %p942 = pnand %p940, %p941
      %p943 = pneg %p942
      // Predicated region
      $region101: #{tpu_custom_call.1} parent=5 // pred_check
        _
      $region102: #{tpu_custom_call.1} parent=5 // pred_check_branch
        %945 = sbr.rel (%p942) target = $region104
      $region103: #{tpu_custom_call.1} parent=5 // pred_region
        %s946 = ssub.s32 %s50, 1
        %s947 = sand.u32 %s181, 1
        %s948 = scalar_lea.sflag [#allocation3], %s947
        %s949 = sand.u32 %s181, 1
        %s950 = smul.addr %s949, 16
        %s951 = scalar_lea.vmem [#allocation2], %s950
        // Predicated region
        $region105: #{tpu_custom_call.1} parent=103 // pred_check
          %p952 = pneg %p194
        $region106: #{tpu_custom_call.1} parent=103 // pred_check_branch
          %954 = sbr.rel (%p952) target = $region108
        $region107: #{tpu_custom_call.1} parent=103 // pred_region
          %956 = dma.done %s948, 256
        $region108: #{tpu_custom_call.1} parent=103 // pred_fallthru
          _
        %s957 = sand.u32 %s55, 1
        %s958 = scalar_lea.sflag [#allocation6], %s957
        %s959 = sand.u32 %s259, 1
        %s960 = smul.addr %s959, 16
        %s961 = scalar_lea.vmem [#allocation5], %s960
        // Predicated region
        $region109: #{tpu_custom_call.1} parent=103 // pred_check
          %p962 = pneg %p272
        $region110: #{tpu_custom_call.1} parent=103 // pred_check_branch
          %964 = sbr.rel (%p962) target = $region112
        $region111: #{tpu_custom_call.1} parent=103 // pred_region
          %966 = dma.done %s958, 256
        $region112: #{tpu_custom_call.1} parent=103 // pred_fallthru
          _
        %s967 = sand.u32 %s55, 1
        %s968 = scalar_lea.sflag [#allocation6], %s967
        %s969 = sand.u32 %s363, 1
        %s970 = scalar_lea.vmem [#allocation7], %s969
        // Predicated region
        $region113: #{tpu_custom_call.1} parent=103 // pred_check
          %p971 = pneg %p376
        $region114: #{tpu_custom_call.1} parent=103 // pred_check_branch
          %973 = sbr.rel (%p971) target = $region116
        $region115: #{tpu_custom_call.1} parent=103 // pred_region
          %975 = dma.done %s968, 16
        $region116: #{tpu_custom_call.1} parent=103 // pred_fallthru
          _
        %s976 = sand.u32 %s55, 1
        %s977 = scalar_lea.sflag [#allocation9], %s976
        %s978 = sand.u32 %s389, 1
        %s979 = smul.addr %s978, 16
        %s980 = scalar_lea.vmem [#allocation8], %s979
        // Predicated region
        $region117: #{tpu_custom_call.1} parent=103 // pred_check
          %p981 = pneg %p402
        $region118: #{tpu_custom_call.1} parent=103 // pred_check_branch
          %983 = sbr.rel (%p981) target = $region120
        $region119: #{tpu_custom_call.1} parent=103 // pred_region
          %985 = dma.done %s977, 256
        $region120: #{tpu_custom_call.1} parent=103 // pred_fallthru
          _
        %s986 = sand.u32 %s55, 1
        %s987 = scalar_lea.sflag [#allocation9], %s986
        %s988 = sand.u32 %s415, 1
        %s989 = scalar_lea.vmem [#allocation10], %s988
        // Predicated region
        $region121: #{tpu_custom_call.1} parent=103 // pred_check
          %p990 = pneg %p428
        $region122: #{tpu_custom_call.1} parent=103 // pred_check_branch
          %992 = sbr.rel (%p990) target = $region124
        $region123: #{tpu_custom_call.1} parent=103 // pred_region
          %994 = dma.done %s987, 16
        $region124: #{tpu_custom_call.1} parent=103 // pred_fallthru
          _
        %s995 = sand.u32 %s55, 1
        %s996 = scalar_lea.sflag [#allocation12], %s995
        %s997 = sand.u32 %s441, 1
        %s998 = smul.addr %s997, 16
        %s999 = scalar_lea.vmem [#allocation11], %s998
        // Predicated region
        $region125: #{tpu_custom_call.1} parent=103 // pred_check
          %p1000 = pneg %p454
        $region126: #{tpu_custom_call.1} parent=103 // pred_check_branch
          %1002 = sbr.rel (%p1000) target = $region128
        $region127: #{tpu_custom_call.1} parent=103 // pred_region
          %1004 = dma.done %s996, 256
        $region128: #{tpu_custom_call.1} parent=103 // pred_fallthru
          _
        %s1005 = sand.u32 %s55, 1
        %s1006 = scalar_lea.sflag [#allocation12], %s1005
        %s1007 = sand.u32 %s467, 1
        %s1008 = scalar_lea.vmem [#allocation13], %s1007
        // Predicated region
        $region129: #{tpu_custom_call.1} parent=103 // pred_check
          %p1009 = pneg %p480
        $region130: #{tpu_custom_call.1} parent=103 // pred_check_branch
          %1011 = sbr.rel (%p1009) target = $region132
        $region131: #{tpu_custom_call.1} parent=103 // pred_region
          %1013 = dma.done %s1006, 16
        $region132: #{tpu_custom_call.1} parent=103 // pred_fallthru
          _
        %s1014 = sand.u32 %s493, 1
        %s1015 = scalar_lea.sflag [#allocation15], %s1014
        %s1016 = sand.u32 %s493, 1
        %s1017 = smul.addr %s1016, 16
        %s1018 = scalar_lea.vmem [#allocation14], %s1017
        // Predicated region
        $region133: #{tpu_custom_call.1} parent=103 // pred_check
          %p1019 = pneg %p506
        $region134: #{tpu_custom_call.1} parent=103 // pred_check_branch
          %1021 = sbr.rel (%p1019) target = $region136
        $region135: #{tpu_custom_call.1} parent=103 // pred_region
          %1023 = dma.done %s1015, 256
        $region136: #{tpu_custom_call.1} parent=103 // pred_fallthru
          _
        %p1024 = scmp.lt.s32.totalorder %s59, 1
        %s1025 = scalar_select %p1024, %s59, 1
        %s1026 = smul.addr %s1025, 8
        %s1027 = smul.addr %s1026, 8
        %s1028 = scalar_lea.vmem %s0, %s1027
        %p1029 = pneg %p88
        %p1030 = pneg %p85
        %p1031 = scmp.lt.s32.totalorder %s60, 2
        %s1032 = scalar_select %p1031, %s60, 2
        %p1033 = scmp.lt.s32.totalorder %s59, 1
        %s1034 = scalar_select %p1033, %s59, 1
        %s1035 = smul.addr %s1034, 2
        %s1036 = smul.addr %s1032, 4
        %s1037 = sadd.s32 %s1035, %s1036
        %s1038 = smul.addr %s1037, 8
        %s1039 = scalar_lea.vmem %s1, %s1038
        %p1040 = pneg %p116
        %p1041 = pneg %p113
        %p1042 = scmp.lt.s32.totalorder %s60, 2
        %s1043 = scalar_select %p1042, %s60, 2
        %s1044 = scalar_lea.vmem %s2, %s1043
        %p1045 = pneg %p142
        %p1046 = pneg %p139
        %p1047 = scmp.lt.s32.totalorder %s60, 2
        %s1048 = scalar_select %p1047, %s60, 2
        %s1049 = scalar_lea.vmem %s3, %s1048
        %p1050 = pneg %p168
        %p1051 = pneg %p165
        %s1052 = sand.u32 %s181, 1
        %s1053 = scalar_lea.sflag [#allocation3], %s1052
        %s1054 = sand.u32 %s181, 1
        %s1055 = smul.addr %s1054, 16
        %s1056 = scalar_lea.vmem [#allocation2], %s1055
        %p1057 = pneg %p194
        %p1058 = pneg %p191
        %p1059 = scmp.lt.s32.totalorder %s60, 2
        %s1060 = scalar_select %p1059, %s60, 2
        %s1061 = scalar_lea.vmem %s5, %s1060
        %p1062 = pneg %p220
        %p1063 = pneg %p217
        %p1064 = scmp.lt.s32.totalorder %s60, 2
        %s1065 = scalar_select %p1064, %s60, 2
        %s1066 = scalar_lea.vmem %s6, %s1065
        %p1067 = pneg %p246
        %p1068 = pneg %p243
        %s1069 = sand.u32 %s55, 1
        %s1070 = scalar_lea.sflag [#allocation6], %s1069
        %s1071 = sand.u32 %s259, 1
        %s1072 = smul.addr %s1071, 16
        %s1073 = scalar_lea.vmem [#allocation5], %s1072
        %p1074 = pneg %p272
        %p1075 = pneg %p269
        %p1076 = scmp.lt.s32.totalorder %s60, 2
        %s1077 = scalar_select %p1076, %s60, 2
        %s1078 = smul.addr %s1077, 8
        %s1079 = smul.addr %s1078, 4
        %s1080 = scalar_lea.vmem %s8, %s1079
        %p1081 = pneg %p298
        %p1082 = pneg %p295
        %p1083 = scmp.lt.s32.totalorder %s60, 2
        %s1084 = scalar_select %p1083, %s60, 2
        %s1085 = scalar_lea.vmem %s9, %s1084
        %p1086 = pneg %p324
        %p1087 = pneg %p321
        %p1088 = scmp.lt.s32.totalorder %s60, 2
        %s1089 = scalar_select %p1088, %s60, 2
        %s1090 = scalar_lea.vmem %s10, %s1089
        %p1091 = pneg %p350
        %p1092 = pneg %p347
        %s1093 = sand.u32 %s55, 1
        %s1094 = scalar_lea.sflag [#allocation6], %s1093
        %s1095 = sand.u32 %s363, 1
        %s1096 = scalar_lea.vmem [#allocation7], %s1095
        %p1097 = pneg %p376
        %p1098 = pneg %p373
        %s1099 = sand.u32 %s55, 1
        %s1100 = scalar_lea.sflag [#allocation9], %s1099
        %s1101 = sand.u32 %s389, 1
        %s1102 = smul.addr %s1101, 16
        %s1103 = scalar_lea.vmem [#allocation8], %s1102
        %p1104 = pneg %p402
        %p1105 = pneg %p399
        %s1106 = sand.u32 %s55, 1
        %s1107 = scalar_lea.sflag [#allocation9], %s1106
        %s1108 = sand.u32 %s415, 1
        %s1109 = scalar_lea.vmem [#allocation10], %s1108
        %p1110 = pneg %p428
        %p1111 = pneg %p425
        %s1112 = sand.u32 %s55, 1
        %s1113 = scalar_lea.sflag [#allocation12], %s1112
        %s1114 = sand.u32 %s441, 1
        %s1115 = smul.addr %s1114, 16
        %s1116 = scalar_lea.vmem [#allocation11], %s1115
        %p1117 = pneg %p454
        %p1118 = pneg %p451
        %s1119 = sand.u32 %s55, 1
        %s1120 = scalar_lea.sflag [#allocation12], %s1119
        %s1121 = sand.u32 %s467, 1
        %s1122 = scalar_lea.vmem [#allocation13], %s1121
        %p1123 = pneg %p480
        %p1124 = pneg %p477
        %s1125 = sand.u32 %s493, 1
        %s1126 = scalar_lea.sflag [#allocation15], %s1125
        %s1127 = sand.u32 %s493, 1
        %s1128 = smul.addr %s1127, 16
        %s1129 = scalar_lea.vmem [#allocation14], %s1128
        %p1130 = pneg %p506
        %p1131 = pneg %p503
        %p1132 = scmp.lt.s32.totalorder %s60, 2
        %s1133 = scalar_select %p1132, %s60, 2
        %s1134 = smul.addr %s1133, 8
        %s1135 = smul.addr %s1134, 4
        %s1136 = scalar_lea.vmem %s17, %s1135
        %p1137 = pneg %p532
        %p1138 = pneg %p529
        %p1139 = scmp.lt.s32.totalorder %s60, 2
        %s1140 = scalar_select %p1139, %s60, 2
        %s1141 = smul.addr %s1140, 8
        %s1142 = smul.addr %s1141, 4
        %s1143 = scalar_lea.vmem %s18, %s1142
        %p1144 = pneg %p558
        %p1145 = pneg %p555
        %p1146 = scmp.lt.s32.totalorder %s60, 2
        %s1147 = scalar_select %p1146, %s60, 2
        %s1148 = smul.addr %s1147, 4
        %s1149 = smul.addr %s1148, 4
        %s1150 = scalar_lea.vmem %s19, %s1149
        %p1151 = pneg %p584
        %p1152 = pneg %p581
        %p1153 = scmp.lt.s32.totalorder %s60, 2
        %s1154 = scalar_select %p1153, %s60, 2
        %s1155 = scalar_lea.vmem %s20, %s1154
        %p1156 = pneg %p610
        %p1157 = pneg %p607
        %p1158 = pneg %p638
        %p1159 = pneg %p635
        %s1160 = sand.u32 %s625, 1
        %s1161 = scalar_lea.sflag [#allocation4], %s1160
        %s1162 = sand.u32 %s625, 1
        %s1163 = scalar_lea.vmem [#allocation16], %s1162
        %p1164 = pneg %p666
        %p1165 = pneg %p663
        %s1166 = sand.u32 %s653, 1
        %s1167 = scalar_lea.sflag [#allocation18], %s1166
        %s1168 = sand.u32 %s653, 1
        %s1169 = smul.addr %s1168, 16
        %s1170 = scalar_lea.vmem [#allocation17], %s1169
        %p1171 = scmp.lt.s32.totalorder %s59, 1
        %s1172 = scalar_select %p1171, %s59, 1
        %s1173 = smul.addr %s1172, 8
        %s1174 = smul.addr %s1173, 8
        %s1175 = scalar_lea.vmem %s0, %s1174
        %p1176 = scmp.lt.s32.totalorder %s60, 2
        %s1177 = scalar_select %p1176, %s60, 2
        %p1178 = scmp.lt.s32.totalorder %s59, 1
        %s1179 = scalar_select %p1178, %s59, 1
        %s1180 = smul.addr %s1179, 2
        %s1181 = smul.addr %s1177, 4
        %s1182 = sadd.s32 %s1180, %s1181
        %s1183 = smul.addr %s1182, 8
        %s1184 = scalar_lea.vmem %s1, %s1183
        %p1185 = scmp.lt.s32.totalorder %s60, 2
        %s1186 = scalar_select %p1185, %s60, 2
        %s1187 = scalar_lea.vmem %s2, %s1186
        %p1188 = scmp.lt.s32.totalorder %s60, 2
        %s1189 = scalar_select %p1188, %s60, 2
        %s1190 = scalar_lea.vmem %s3, %s1189
        %p1191 = scmp.lt.s32.totalorder %s60, 2
        %s1192 = scalar_select %p1191, %s60, 2
        %s1193 = scalar_lea.vmem %s5, %s1192
        %p1194 = scmp.lt.s32.totalorder %s60, 2
        %s1195 = scalar_select %p1194, %s60, 2
        %s1196 = scalar_lea.vmem %s6, %s1195
        %p1197 = scmp.lt.s32.totalorder %s60, 2
        %s1198 = scalar_select %p1197, %s60, 2
        %s1199 = smul.addr %s1198, 8
        %s1200 = smul.addr %s1199, 4
        %s1201 = scalar_lea.vmem %s8, %s1200
        %p1202 = scmp.lt.s32.totalorder %s60, 2
        %s1203 = scalar_select %p1202, %s60, 2
        %s1204 = scalar_lea.vmem %s9, %s1203
        %p1205 = scmp.lt.s32.totalorder %s60, 2
        %s1206 = scalar_select %p1205, %s60, 2
        %s1207 = scalar_lea.vmem %s10, %s1206
        %p1208 = scmp.lt.s32.totalorder %s60, 2
        %s1209 = scalar_select %p1208, %s60, 2
        %s1210 = smul.addr %s1209, 8
        %s1211 = smul.addr %s1210, 4
        %s1212 = scalar_lea.vmem %s17, %s1211
        %p1213 = scmp.lt.s32.totalorder %s60, 2
        %s1214 = scalar_select %p1213, %s60, 2
        %s1215 = smul.addr %s1214, 8
        %s1216 = smul.addr %s1215, 4
        %s1217 = scalar_lea.vmem %s18, %s1216
        %p1218 = scmp.lt.s32.totalorder %s60, 2
        %s1219 = scalar_select %p1218, %s60, 2
        %s1220 = smul.addr %s1219, 4
        %s1221 = smul.addr %s1220, 4
        %s1222 = scalar_lea.vmem %s19, %s1221
        %p1223 = scmp.lt.s32.totalorder %s60, 2
        %s1224 = scalar_select %p1223, %s60, 2
        %s1225 = scalar_lea.vmem %s20, %s1224
        %v1227 = vld [vmem:[%s1187] sm:$0x1]
        %v1228 = vld [vmem:[%s1190] sm:$0x1]
        %v1229 = vld [vmem:[%s1193] sm:$0x1]
        %v1230 = vld [vmem:[%s1196] sm:$0x1]
        %v1231 = vld [vmem:[%s1207] sm:$0x1]
        %v1232 = vld [vmem:[%s970] sm:$0x1]
        %v1233 = vld [vmem:[%s1204] sm:$0x1]
        %v1234 = vld [vmem:[%s989] sm:$0x1]
        %v1235 = vld [vmem:[%s1008] sm:$0x1]
        %v1236 = vld [vmem:[%s1225] sm:$0x1]
        %v1237 = vld [vmem:[%s951] sm:$0xf]
        %v1238 = vld [vmem:[%s951 + $0x4] sm:$0xf]
        %v1239 = vld [vmem:[%s951 + $0x8] sm:$0xf]
        %v1240 = vld [vmem:[%s951 + $0xc] sm:$0xf]
        %v1241 = vld [vmem:[%s961] sm:$0xf]
        %v1242 = vld [vmem:[%s961 + $0x4] sm:$0xf]
        %v1243 = vld [vmem:[%s961 + $0x8] sm:$0xf]
        %v1244 = vld [vmem:[%s961 + $0xc] sm:$0xf]
        %v1245 = vld [vmem:[%s1201] sm:$0xf]
        %v1246 = vld [vmem:[%s1201 + $0x4] sm:$0xf]
        %v1247 = vld [vmem:[%s1201 + $0x8] sm:$0xf]
        %v1248 = vld [vmem:[%s1201 + $0xc] sm:$0xf]
        %v1249 = vld [vmem:[%s1201 + $0x10] sm:$0xf]
        %v1250 = vld [vmem:[%s1201 + $0x14] sm:$0xf]
        %v1251 = vld [vmem:[%s1201 + $0x18] sm:$0xf]
        %v1252 = vld [vmem:[%s1201 + $0x1c] sm:$0xf]
        %v1253 = vld [vmem:[%s980] sm:$0xf]
        %v1254 = vld [vmem:[%s980 + $0x4] sm:$0xf]
        %v1255 = vld [vmem:[%s980 + $0x8] sm:$0xf]
        %v1256 = vld [vmem:[%s980 + $0xc] sm:$0xf]
        %v1257 = vld [vmem:[%s999] sm:$0xf]
        %v1258 = vld [vmem:[%s999 + $0x4] sm:$0xf]
        %v1259 = vld [vmem:[%s999 + $0x8] sm:$0xf]
        %v1260 = vld [vmem:[%s999 + $0xc] sm:$0xf]
        %v1261 = vld [vmem:[%s1222] sm:$0xf]
        %v1262 = vld [vmem:[%s1222 + $0x4] sm:$0xf]
        %v1263 = vld [vmem:[%s1222 + $0x8] sm:$0xf]
        %v1264 = vld [vmem:[%s1222 + $0xc] sm:$0xf]
        %v1265 = vlaneseq
        %v1266 = vshrl.u32 %v1265, 7
        %v1267 = vadd.s32 %v1266, 8
        %vm1268 = vcmp.lt.s32.totalorder %v1266, 10
        %vm1269 = vcmp.lt.s32.totalorder %v1267, 10
        %v1270 = vsel %vm1268, 0.0, -1e+30
        %v1271 = vsel %vm1269, 0.0, -1e+30
        %v1272 = vlaneseq
        %v1273 = vand.u32 %v1272, 127
        %vm1274 = vcmp.lt.s32.totalorder %v1273, 10
        %v1275 = vsel %vm1274, 0.0, -1e+30
        %v1276 = vld [vmem:[%s1175] sm:$0xff]
        %v1277 = vld [vmem:[%s1175 + $0x8] sm:$0xff]
        %v1278 = vld [vmem:[%s1175 + $0x10] sm:$0xff]
        %v1279 = vld [vmem:[%s1175 + $0x18] sm:$0xff]
        %v1280 = vld [vmem:[%s1175 + $0x20] sm:$0xff]
        %v1281 = vld [vmem:[%s1175 + $0x28] sm:$0xff]
        %v1282 = vld [vmem:[%s1175 + $0x30] sm:$0xff]
        %v1283 = vld [vmem:[%s1175 + $0x38] sm:$0xff]
        %vm1284 = vcmask 261120
        %v1285 = vsel %vm1284, %v1276, 0.0
        %1286 = vadd.xlane.f32.xlu0 %v1285
        %v1287 = vpop.xlane.xlu0 %1286
        %v1288 = vsel %vm1284, %v1277, 0.0
        %1289 = vadd.xlane.f32.xlu0 %v1288
        %v1290 = vpop.xlane.xlu0 %1289
        %v1291 = vsel %vm1284, %v1278, 0.0
        %1292 = vadd.xlane.f32.xlu0 %v1291
        %v1293 = vpop.xlane.xlu0 %1292
        %v1294 = vsel %vm1284, %v1279, 0.0
        %1295 = vadd.xlane.f32.xlu0 %v1294
        %v1296 = vpop.xlane.xlu0 %1295
        %v1297 = vsel %vm1284, %v1280, 0.0
        %1298 = vadd.xlane.f32.xlu0 %v1297
        %v1299 = vpop.xlane.xlu0 %1298
        %v1300 = vsel %vm1284, %v1281, 0.0
        %1301 = vadd.xlane.f32.xlu0 %v1300
        %v1302 = vpop.xlane.xlu0 %1301
        %v1303 = vsel %vm1284, %v1282, 0.0
        %1304 = vadd.xlane.f32.xlu0 %v1303
        %v1305 = vpop.xlane.xlu0 %1304
        %v1306 = vsel %vm1284, %v1283, 0.0
        %1307 = vadd.xlane.f32.xlu0 %v1306
        %v1308 = vpop.xlane.xlu0 %1307
        %v1309 = vrcp.pop 32.0
        %v1310 = vmul.f32 32.0, %v1309
        %v1311 = vsub.f32 1.0, %v1310
        %v1312 = vmul.f32 %v1309, %v1311
        %v1313 = vadd.f32 %v1309, %v1312
        %vm1314 = vweird.f32 %v1309
        %v1315 = vsel %vm1314, %v1309, %v1313
        %v1316 = vmul.f32 %v1287, %v1315
        %v1317 = vmul.f32 %v1290, %v1315
        %v1318 = vmul.f32 %v1293, %v1315
        %v1319 = vmul.f32 %v1296, %v1315
        %v1320 = vmul.f32 %v1299, %v1315
        %v1321 = vmul.f32 %v1302, %v1315
        %v1322 = vmul.f32 %v1305, %v1315
        %v1323 = vmul.f32 %v1308, %v1315
        %v1324 = vsub.f32 %v1276, %v1316
        %v1325 = vsub.f32 %v1277, %v1317
        %v1326 = vsub.f32 %v1278, %v1318
        %v1327 = vsub.f32 %v1279, %v1319
        %v1328 = vsub.f32 %v1280, %v1320
        %v1329 = vsub.f32 %v1281, %v1321
        %v1330 = vsub.f32 %v1282, %v1322
        %v1331 = vsub.f32 %v1283, %v1323
        %v1332 = vmul.f32 %v1324, %v1324
        %v1333 = vmul.f32 %v1325, %v1325
        %v1334 = vmul.f32 %v1326, %v1326
        %v1335 = vmul.f32 %v1327, %v1327
        %v1336 = vmul.f32 %v1328, %v1328
        %v1337 = vmul.f32 %v1329, %v1329
        %v1338 = vmul.f32 %v1330, %v1330
        %v1339 = vmul.f32 %v1331, %v1331
        %v1340 = vsel %vm1284, %v1332, 0.0
        %1341 = vadd.xlane.f32.xlu0 %v1340
        %v1342 = vpop.xlane.xlu0 %1341
        %v1343 = vsel %vm1284, %v1333, 0.0
        %1344 = vadd.xlane.f32.xlu0 %v1343
        %v1345 = vpop.xlane.xlu0 %1344
        %v1346 = vsel %vm1284, %v1334, 0.0
        %1347 = vadd.xlane.f32.xlu0 %v1346
        %v1348 = vpop.xlane.xlu0 %1347
        %v1349 = vsel %vm1284, %v1335, 0.0
        %1350 = vadd.xlane.f32.xlu0 %v1349
        %v1351 = vpop.xlane.xlu0 %1350
        %v1352 = vsel %vm1284, %v1336, 0.0
        %1353 = vadd.xlane.f32.xlu0 %v1352
        %v1354 = vpop.xlane.xlu0 %1353
        %v1355 = vsel %vm1284, %v1337, 0.0
        %1356 = vadd.xlane.f32.xlu0 %v1355
        %v1357 = vpop.xlane.xlu0 %1356
        %v1358 = vsel %vm1284, %v1338, 0.0
        %1359 = vadd.xlane.f32.xlu0 %v1358
        %v1360 = vpop.xlane.xlu0 %1359
        %v1361 = vsel %vm1284, %v1339, 0.0
        %1362 = vadd.xlane.f32.xlu0 %v1361
        %v1363 = vpop.xlane.xlu0 %1362
        %v1364 = vmul.f32 %v1342, %v1315
        %v1365 = vmul.f32 %v1345, %v1315
        %v1366 = vmul.f32 %v1348, %v1315
        %v1367 = vmul.f32 %v1351, %v1315
        %v1368 = vmul.f32 %v1354, %v1315
        %v1369 = vmul.f32 %v1357, %v1315
        %v1370 = vmul.f32 %v1360, %v1315
        %v1371 = vmul.f32 %v1363, %v1315
        %v1372 = vadd.f32 %v1364, 1e-05
        %v1373 = vadd.f32 %v1365, 1e-05
        %v1374 = vadd.f32 %v1366, 1e-05
        %v1375 = vadd.f32 %v1367, 1e-05
        %v1376 = vadd.f32 %v1368, 1e-05
        %v1377 = vadd.f32 %v1369, 1e-05
        %v1378 = vadd.f32 %v1370, 1e-05
        %v1379 = vadd.f32 %v1371, 1e-05
        %v1380 = vrsqrt.pop %v1372
        %v1381 = vmul.f32 %v1380, %v1372
        %v1382 = vmul.f32 %v1381, %v1380
        %v1383 = vmul.f32 0.5, %v1382
        %v1384 = vsub.f32 1.5, %v1383
        %v1385 = vmul.f32 %v1380, %v1384
        %vm1386 = vweird.f32 %v1372
        %vm1387 = vweird.f32 %v1380
        %vm1388 = vmor %vm1386, %vm1387
        %v1389 = vsel %vm1388, %v1380, %v1385
        %v1390 = vrsqrt.pop %v1373
        %v1391 = vmul.f32 %v1390, %v1373
        %v1392 = vmul.f32 %v1391, %v1390
        %v1393 = vmul.f32 0.5, %v1392
        %v1394 = vsub.f32 1.5, %v1393
        %v1395 = vmul.f32 %v1390, %v1394
        %vm1396 = vweird.f32 %v1373
        %vm1397 = vweird.f32 %v1390
        %vm1398 = vmor %vm1396, %vm1397
        %v1399 = vsel %vm1398, %v1390, %v1395
        %v1400 = vrsqrt.pop %v1374
        %v1401 = vmul.f32 %v1400, %v1374
        %v1402 = vmul.f32 %v1401, %v1400
        %v1403 = vmul.f32 0.5, %v1402
        %v1404 = vsub.f32 1.5, %v1403
        %v1405 = vmul.f32 %v1400, %v1404
        %vm1406 = vweird.f32 %v1374
        %vm1407 = vweird.f32 %v1400
        %vm1408 = vmor %vm1406, %vm1407
        %v1409 = vsel %vm1408, %v1400, %v1405
        %v1410 = vrsqrt.pop %v1375
        %v1411 = vmul.f32 %v1410, %v1375
        %v1412 = vmul.f32 %v1411, %v1410
        %v1413 = vmul.f32 0.5, %v1412
        %v1414 = vsub.f32 1.5, %v1413
        %v1415 = vmul.f32 %v1410, %v1414
        %vm1416 = vweird.f32 %v1375
        %vm1417 = vweird.f32 %v1410
        %vm1418 = vmor %vm1416, %vm1417
        %v1419 = vsel %vm1418, %v1410, %v1415
        %v1420 = vrsqrt.pop %v1376
        %v1421 = vmul.f32 %v1420, %v1376
        %v1422 = vmul.f32 %v1421, %v1420
        %v1423 = vmul.f32 0.5, %v1422
        %v1424 = vsub.f32 1.5, %v1423
        %v1425 = vmul.f32 %v1420, %v1424
        %vm1426 = vweird.f32 %v1376
        %vm1427 = vweird.f32 %v1420
        %vm1428 = vmor %vm1426, %vm1427
        %v1429 = vsel %vm1428, %v1420, %v1425
        %v1430 = vrsqrt.pop %v1377
        %v1431 = vmul.f32 %v1430, %v1377
        %v1432 = vmul.f32 %v1431, %v1430
        %v1433 = vmul.f32 0.5, %v1432
        %v1434 = vsub.f32 1.5, %v1433
        %v1435 = vmul.f32 %v1430, %v1434
        %vm1436 = vweird.f32 %v1377
        %vm1437 = vweird.f32 %v1430
        %vm1438 = vmor %vm1436, %vm1437
        %v1439 = vsel %vm1438, %v1430, %v1435
        %v1440 = vrsqrt.pop %v1378
        %v1441 = vmul.f32 %v1440, %v1378
        %v1442 = vmul.f32 %v1441, %v1440
        %v1443 = vmul.f32 0.5, %v1442
        %v1444 = vsub.f32 1.5, %v1443
        %v1445 = vmul.f32 %v1440, %v1444
        %vm1446 = vweird.f32 %v1378
        %vm1447 = vweird.f32 %v1440
        %vm1448 = vmor %vm1446, %vm1447
        %v1449 = vsel %vm1448, %v1440, %v1445
        %v1450 = vrsqrt.pop %v1379
        %v1451 = vmul.f32 %v1450, %v1379
        %v1452 = vmul.f32 %v1451, %v1450
        %v1453 = vmul.f32 0.5, %v1452
        %v1454 = vsub.f32 1.5, %v1453
        %v1455 = vmul.f32 %v1450, %v1454
        %vm1456 = vweird.f32 %v1379
        %vm1457 = vweird.f32 %v1450
        %vm1458 = vmor %vm1456, %vm1457
        %v1459 = vsel %vm1458, %v1450, %v1455
        %v1460 = vmul.f32 %v1324, %v1389
        %v1461 = vmul.f32 %v1325, %v1399
        %v1462 = vmul.f32 %v1326, %v1409
        %v1463 = vmul.f32 %v1327, %v1419
        %v1464 = vmul.f32 %v1328, %v1429
        %v1465 = vmul.f32 %v1329, %v1439
        %v1466 = vmul.f32 %v1330, %v1449
        %v1467 = vmul.f32 %v1331, %v1459
        %v1469 = vperm.slane %v1227, 0
        %v1471 = vmul.f32 %v1460, %v1469
        %v1472 = vmul.f32 %v1461, %v1469
        %v1473 = vmul.f32 %v1462, %v1469
        %v1474 = vmul.f32 %v1463, %v1469
        %v1475 = vmul.f32 %v1464, %v1469
        %v1476 = vmul.f32 %v1465, %v1469
        %v1477 = vmul.f32 %v1466, %v1469
        %v1478 = vmul.f32 %v1467, %v1469
        %v1480 = vperm.slane %v1228, 0
        %v1482 = vadd.f32 %v1471, %v1480
        %v1483 = vadd.f32 %v1472, %v1480
        %v1484 = vadd.f32 %v1473, %v1480
        %v1485 = vadd.f32 %v1474, %v1480
        %v1486 = vadd.f32 %v1475, %v1480
        %v1487 = vadd.f32 %v1476, %v1480
        %v1488 = vadd.f32 %v1477, %v1480
        %v1489 = vadd.f32 %v1478, %v1480
        %v1490 = vpack.c.bf16 %v1483, %v1482
        %v1491 = vpack.c.bf16 %v1485, %v1484
        %v1492 = vpack.c.bf16 %v1487, %v1486
        %v1493 = vpack.c.bf16 %v1489, %v1488
        %v1498 = vunpack.c.l.b16 %v1237
        %v1499 = vunpack.c.l.b16 %v1238
        %v1500 = vunpack.c.l.b16 %v1239
        %v1501 = vunpack.c.l.b16 %v1240
        %v1502 = vpack.c.b16 %v1499, %v1498
        %v1503 = vpack.c.b16 %v1501, %v1500
        %v1507 = vsel %vm1284, %v1490, 0
        %v1510 = vsel %vm1284, %v1491, 0
        %v1513 = vsel %vm1284, %v1492, 0
        %v1516 = vsel %vm1284, %v1493, 0
        %1518 = vmatpush.bf16.msra.mxu0 0
        %1519 = vmatpush.bf16.msra.mxu0 0
        %1520 = vmatpush.bf16.msra.mxu0 0
        %1521 = vmatpush.bf16.msra.mxu0 0
        %1522 = vmatpush.bf16.msra.mxu0 0
        %1523 = vmatpush.bf16.msra.mxu0 0
        %1524 = vmatpush.bf16.msra.mxu0 %v1503
        %1525 = vmatpush.bf16.msra.mxu0 %v1502
        %1526 = vmatmul.bf16.gmra.mxu0 %v1507
        %v1527 = vpop.f32.mrf.mxu0
        %v1528 = vadd.f32 0.0, %v1527
        %v1529 = vpop.f32.mrf.mxu0
        %v1530 = vadd.f32 0.0, %v1529
        %1531 = vmatmul.bf16.gmra.mxu0 %v1510
        %v1532 = vpop.f32.mrf.mxu0
        %v1533 = vadd.f32 0.0, %v1532
        %v1534 = vpop.f32.mrf.mxu0
        %v1535 = vadd.f32 0.0, %v1534
        %1536 = vmatmul.bf16.gmra.mxu0 %v1513
        %v1537 = vpop.f32.mrf.mxu0
        %v1538 = vadd.f32 0.0, %v1537
        %v1539 = vpop.f32.mrf.mxu0
        %v1540 = vadd.f32 0.0, %v1539
        %1541 = vmatmul.bf16.gmra.mxu0 %v1516
        %v1542 = vpop.f32.mrf.mxu0
        %v1543 = vadd.f32 0.0, %v1542
        %v1544 = vpop.f32.mrf.mxu0
        %v1545 = vadd.f32 0.0, %v1544
        %1546 = vdwg.mxu0
        %v1547 = vld [vmem:[%s1184] sm:$0xff]
        %v1548 = vld [vmem:[%s1184 + $0x8] sm:$0xff]
        %v1549 = vsel %vm1284, %v1547, 0.0
        %1550 = vadd.xlane.f32.xlu0 %v1549
        %v1551 = vpop.xlane.xlu0 %1550
        %v1552 = vsel %vm1284, %v1548, 0.0
        %1553 = vadd.xlane.f32.xlu0 %v1552
        %v1554 = vpop.xlane.xlu0 %1553
        %v1555 = vmul.f32 %v1551, %v1315
        %v1556 = vmul.f32 %v1554, %v1315
        %v1557 = vsub.f32 %v1547, %v1555
        %v1558 = vsub.f32 %v1548, %v1556
        %v1559 = vmul.f32 %v1557, %v1557
        %v1560 = vmul.f32 %v1558, %v1558
        %v1561 = vsel %vm1284, %v1559, 0.0
        %1562 = vadd.xlane.f32.xlu0 %v1561
        %v1563 = vpop.xlane.xlu0 %1562
        %v1564 = vsel %vm1284, %v1560, 0.0
        %1565 = vadd.xlane.f32.xlu0 %v1564
        %v1566 = vpop.xlane.xlu0 %1565
        %v1567 = vmul.f32 %v1563, %v1315
        %v1568 = vmul.f32 %v1566, %v1315
        %v1569 = vadd.f32 %v1567, 1e-05
        %v1570 = vadd.f32 %v1568, 1e-05
        %v1571 = vrsqrt.pop %v1569
        %v1572 = vmul.f32 %v1571, %v1569
        %v1573 = vmul.f32 %v1572, %v1571
        %v1574 = vmul.f32 0.5, %v1573
        %v1575 = vsub.f32 1.5, %v1574
        %v1576 = vmul.f32 %v1571, %v1575
        %vm1577 = vweird.f32 %v1569
        %vm1578 = vweird.f32 %v1571
        %vm1579 = vmor %vm1577, %vm1578
        %v1580 = vsel %vm1579, %v1571, %v1576
        %v1581 = vrsqrt.pop %v1570
        %v1582 = vmul.f32 %v1581, %v1570
        %v1583 = vmul.f32 %v1582, %v1581
        %v1584 = vmul.f32 0.5, %v1583
        %v1585 = vsub.f32 1.5, %v1584
        %v1586 = vmul.f32 %v1581, %v1585
        %vm1587 = vweird.f32 %v1570
        %vm1588 = vweird.f32 %v1581
        %vm1589 = vmor %vm1587, %vm1588
        %v1590 = vsel %vm1589, %v1581, %v1586
        %v1591 = vmul.f32 %v1557, %v1580
        %v1592 = vmul.f32 %v1558, %v1590
        %v1594 = vperm.slane %v1229, 0
        %v1596 = vmul.f32 %v1591, %v1594
        %v1597 = vmul.f32 %v1592, %v1594
        %v1599 = vperm.slane %v1230, 0
        %v1601 = vadd.f32 %v1596, %v1599
        %v1602 = vadd.f32 %v1597, %v1599
        %v1603 = vpack.c.bf16 %v1602, %v1601
        %v1608 = vunpack.c.l.b16 %v1241
        %v1609 = vunpack.c.l.b16 %v1242
        %v1610 = vunpack.c.l.b16 %v1243
        %v1611 = vunpack.c.l.b16 %v1244
        %v1612 = vpack.c.b16 %v1609, %v1608
        %v1613 = vpack.c.b16 %v1611, %v1610
        %v1617 = vsel %vm1284, %v1603, 0
        %1619 = vmatpush.bf16.msra.mxu0 0
        %1620 = vmatpush.bf16.msra.mxu0 0
        %1621 = vmatpush.bf16.msra.mxu0 0
        %1622 = vmatpush.bf16.msra.mxu0 0
        %1623 = vmatpush.bf16.msra.mxu0 0
        %1624 = vmatpush.bf16.msra.mxu0 0
        %1625 = vmatpush.bf16.msra.mxu0 %v1613
        %1626 = vmatpush.bf16.msra.mxu0 %v1612
        %1627 = vmatmul.bf16.gmra.mxu0 %v1617
        %v1628 = vpop.f32.mrf.mxu0
        %v1629 = vadd.f32 0.0, %v1628
        %v1630 = vpop.f32.mrf.mxu0
        %v1631 = vadd.f32 0.0, %v1630
        %1632 = vdwg.mxu0
        %v1633 = vpack.c.bf16 %v1629, %v1629
        %v1634 = vpack.c.bf16 %v1631, %v1631
        %v1635 = vpack.c.bf16 %v1528, %v1528
        %v1636 = vpack.c.bf16 %v1530, %v1530
        %v1637 = vpack.c.bf16 %v1533, %v1533
        %v1638 = vpack.c.bf16 %v1535, %v1535
        %v1639 = vpack.c.bf16 %v1538, %v1538
        %v1640 = vpack.c.bf16 %v1540, %v1540
        %v1641 = vpack.c.bf16 %v1543, %v1543
        %v1642 = vpack.c.bf16 %v1545, %v1545
        %v1645 = vunpack.c.l.b16 %v1633
        %v1646 = vunpack.c.l.b16 %v1634
        %v1647 = vpack.c.b16 %v1646, %v1645
        %v1656 = vunpack.c.l.b16 %v1635
        %v1657 = vunpack.c.l.b16 %v1636
        %v1658 = vunpack.c.l.b16 %v1637
        %v1659 = vunpack.c.l.b16 %v1638
        %v1660 = vunpack.c.l.b16 %v1639
        %v1661 = vunpack.c.l.b16 %v1640
        %v1662 = vunpack.c.l.b16 %v1641
        %v1663 = vunpack.c.l.b16 %v1642
        %v1664 = vpack.c.b16 %v1657, %v1656
        %v1665 = vpack.c.b16 %v1659, %v1658
        %v1666 = vpack.c.b16 %v1661, %v1660
        %v1667 = vpack.c.b16 %v1663, %v1662
        %v1669 = vsel %vm1284, %v1647, 0
        %v1672 = vsel %vm1284, %v1664, 0
        %v1675 = vsel %vm1284, %v1665, 0
        %v1678 = vsel %vm1284, %v1666, 0
        %v1681 = vsel %vm1284, %v1667, 0
        %1683 = vmatpush.bf16.xpose.msra.mxu0 0
        %1684 = vmatpush.bf16.xpose.msra.mxu0 0
        %1685 = vmatpush.bf16.xpose.msra.mxu0 0
        %1686 = vmatpush.bf16.xpose.msra.mxu0 0
        %1687 = vmatpush.bf16.xpose.msra.mxu0 %v1681
        %1688 = vmatpush.bf16.xpose.msra.mxu0 %v1678
        %1689 = vmatpush.bf16.xpose.msra.mxu0 %v1675
        %1690 = vmatpush.bf16.xpose.msra.mxu0 %v1672
        %1691 = vmatmul.bf16.gmra.mxu0 %v1669
        %v1692 = vpop.f32.mrf.mxu0
        %v1693 = vadd.f32 %v1270, %v1692
        %v1694 = vpop.f32.mrf.mxu0
        %v1695 = vadd.f32 %v1271, %v1694
        %1696 = vdwg.mxu0
        %vm1697 = vcmask 523264
        %v1698 = vsel %vm1697, %v1693, -inf
        %v1699 = vsel %vm1697, %v1695, -inf
        %v1700 = vmax.f32 %v1698, %v1699
        %v1701 = vrot.slane %v1700, 4
        %v1702 = vmax.f32 %v1700, %v1701
        %v1703 = vrot.slane %v1702, 2
        %v1704 = vmax.f32 %v1702, %v1703
        %v1705 = vrot.slane %v1704, 1
        %v1706 = vmax.f32 %v1704, %v1705
        %v1707 = vsub.f32 %v1693, %v1706
        %v1708 = vsub.f32 %v1695, %v1706
        %v1709 = vmul.f32 %v1707, 1.442695
        %v1710 = vpow.pop %v1709
        %v1711 = vmul.f32 %v1708, 1.442695
        %v1712 = vpow.pop %v1711
        %v1713 = vsel %vm1697, %v1710, 0.0
        %v1714 = vsel %vm1697, %v1712, 0.0
        %v1715 = vadd.f32 %v1713, %v1714
        %v1716 = vrot.slane %v1715, 4
        %v1717 = vadd.f32 %v1715, %v1716
        %v1718 = vrot.slane %v1717, 2
        %v1719 = vadd.f32 %v1717, %v1718
        %v1720 = vrot.slane %v1719, 1
        %v1721 = vadd.f32 %v1719, %v1720
        %v1722 = vrcp.pop %v1721
        %v1723 = vmul.f32 %v1710, %v1722
        %v1724 = vmul.f32 %v1712, %v1722
        %v1725 = vadd.f32 %v1723, 1e-08
        %v1726 = vadd.f32 %v1724, 1e-08
        %v1727 = vsel %vm1697, %v1725, 0.0
        %1728 = vadd.xlane.f32.xlu0 %v1727
        %v1729 = vpop.xlane.xlu0 %1728
        %v1730 = vsel %vm1697, %v1726, 0.0
        %1731 = vadd.xlane.f32.xlu0 %v1730
        %v1732 = vpop.xlane.xlu0 %1731
        %v1733 = vrcp.pop %v1729
        %v1734 = vmul.f32 %v1729, %v1733
        %v1735 = vsub.f32 1.0, %v1734
        %v1736 = vmul.f32 %v1733, %v1735
        %v1737 = vadd.f32 %v1733, %v1736
        %vm1738 = vweird.f32 %v1729
        %vm1739 = vweird.f32 %v1733
        %vm1740 = vmor %vm1738, %vm1739
        %v1741 = vsel %vm1740, %v1733, %v1737
        %v1742 = vand.u32 2147483647, %v1729
        %vm1743 = vcmp.eq.f32.partialorder %v1742, 8.507059e+37
        %v1744 = vand.u32 %v1729, 2147483648
        %v1745 = vor.u32 1.1754944e-38, %v1744
        %v1746 = vsel %vm1743, %v1745, %v1741
        %v1747 = vmul.f32 %v1725, %v1746
        %v1748 = vrcp.pop %v1732
        %v1749 = vmul.f32 %v1732, %v1748
        %v1750 = vsub.f32 1.0, %v1749
        %v1751 = vmul.f32 %v1748, %v1750
        %v1752 = vadd.f32 %v1748, %v1751
        %vm1753 = vweird.f32 %v1732
        %vm1754 = vweird.f32 %v1748
        %vm1755 = vmor %vm1753, %vm1754
        %v1756 = vsel %vm1755, %v1748, %v1752
        %v1757 = vand.u32 2147483647, %v1732
        %vm1758 = vcmp.eq.f32.partialorder %v1757, 8.507059e+37
        %v1759 = vand.u32 %v1732, 2147483648
        %v1760 = vor.u32 1.1754944e-38, %v1759
        %v1761 = vsel %vm1758, %v1760, %v1756
        %v1762 = vmul.f32 %v1726, %v1761
        %v1763 = vpack.c.bf16 %v1747, %v1747
        %v1764 = vpack.c.bf16 %v1762, %v1762
        %v1767 = vunpack.c.l.b16 %v1763
        %v1768 = vunpack.c.l.b16 %v1764
        %v1769 = vpack.c.b16 %v1768, %v1767
        %1770 = vrot.lane.b32.xlu0 %v1664, 96
        %v1771 = vpop.permute.xlu0 %1770
        %1772 = vrot.lane.b32.xlu0 %v1665, 96
        %v1773 = vpop.permute.xlu0 %1772
        %1774 = vrot.lane.b32.xlu0 %v1666, 96
        %v1775 = vpop.permute.xlu0 %1774
        %1776 = vrot.lane.b32.xlu0 %v1667, 96
        %v1777 = vpop.permute.xlu0 %1776
        %v1783 = vsel %vm1697, %v1769, 0
        %1785 = vmatpush.bf16.msra.mxu0 0
        %1786 = vmatpush.bf16.msra.mxu0 0
        %1787 = vmatpush.bf16.msra.mxu0 0
        %1788 = vmatpush.bf16.msra.mxu0 0
        %1789 = vmatpush.bf16.msra.mxu0 %v1777
        %1790 = vmatpush.bf16.msra.mxu0 %v1775
        %1791 = vmatpush.bf16.msra.mxu0 %v1773
        %1792 = vmatpush.bf16.msra.mxu0 %v1771
        %1793 = vmatmul.bf16.gmra.mxu0 %v1783
        %v1794 = vpop.f32.mrf.mxu0
        %v1795 = vadd.f32 0.0, %v1794
        %v1796 = vpop.f32.mrf.mxu0
        %v1797 = vadd.f32 0.0, %v1796
        %1798 = vdwg.mxu0
        %1801 = vrot.lane.b32.xlu0 %v1547, 32
        %v1802 = vpop.permute.xlu0 %1801
        %1803 = vrot.lane.b32.xlu0 %v1548, 32
        %v1804 = vpop.permute.xlu0 %1803
        %v1807 = vsel %vm1284, %v1795, %v1802
        %v1808 = vsel %vm1284, %v1797, %v1804
        %v1809 = vpack.c.bf16 %v1808, %v1807
        %v1811 = vperm.slane %v1233, 0
        %v1821 = vunpack.c.l.b16 %v1245
        %v1822 = vunpack.c.l.b16 %v1246
        %v1823 = vunpack.c.l.b16 %v1247
        %v1824 = vunpack.c.l.b16 %v1248
        %v1825 = vunpack.c.l.b16 %v1249
        %v1826 = vunpack.c.l.b16 %v1250
        %v1827 = vunpack.c.l.b16 %v1251
        %v1828 = vunpack.c.l.b16 %v1252
        %v1829 = vpack.c.b16 %v1822, %v1821
        %v1830 = vpack.c.b16 %v1824, %v1823
        %v1831 = vpack.c.b16 %v1826, %v1825
        %v1832 = vpack.c.b16 %v1828, %v1827
        %v1838 = vsel %vm1697, %v1809, 0
        %1840 = vmatpush.bf16.msra.mxu0 0
        %1841 = vmatpush.bf16.msra.mxu0 0
        %1842 = vmatpush.bf16.msra.mxu0 0
        %1843 = vmatpush.bf16.msra.mxu0 0
        %1844 = vmatpush.bf16.msra.mxu0 %v1832
        %1845 = vmatpush.bf16.msra.mxu0 %v1831
        %1846 = vmatpush.bf16.msra.mxu0 %v1830
        %1847 = vmatpush.bf16.msra.mxu0 %v1829
        %1848 = vmatmul.bf16.gmra.mxu0 %v1838
        %v1849 = vpop.f32.mrf.mxu0
        %v1850 = vadd.f32 %v1811, %v1849
        %v1851 = vpop.f32.mrf.mxu0
        %v1852 = vadd.f32 %v1811, %v1851
        %1853 = vdwg.mxu0
        %v1854 = vxor.u32 %v1850, 2147483648
        %v1855 = vxor.u32 %v1852, 2147483648
        %v1856 = vmul.f32 %v1854, 1.442695
        %v1857 = vpow.pop %v1856
        %v1858 = vmul.f32 %v1855, 1.442695
        %v1859 = vpow.pop %v1858
        %v1860 = vadd.f32 %v1857, 1.0
        %v1861 = vadd.f32 %v1859, 1.0
        %v1862 = vrcp.pop %v1860
        %v1863 = vmul.f32 %v1860, %v1862
        %v1864 = vsub.f32 1.0, %v1863
        %v1865 = vmul.f32 %v1862, %v1864
        %v1866 = vadd.f32 %v1862, %v1865
        %vm1867 = vweird.f32 %v1860
        %vm1868 = vweird.f32 %v1862
        %vm1869 = vmor %vm1867, %vm1868
        %v1870 = vsel %vm1869, %v1862, %v1866
        %v1871 = vand.u32 2147483647, %v1860
        %vm1872 = vcmp.eq.f32.partialorder %v1871, 8.507059e+37
        %v1873 = vand.u32 %v1860, 2147483648
        %v1874 = vor.u32 1.1754944e-38, %v1873
        %v1875 = vsel %vm1872, %v1874, %v1870
        %v1876 = vmul.f32 1.0, %v1875
        %v1877 = vrcp.pop %v1861
        %v1878 = vmul.f32 %v1861, %v1877
        %v1879 = vsub.f32 1.0, %v1878
        %v1880 = vmul.f32 %v1877, %v1879
        %v1881 = vadd.f32 %v1877, %v1880
        %vm1882 = vweird.f32 %v1861
        %vm1883 = vweird.f32 %v1877
        %vm1884 = vmor %vm1882, %vm1883
        %v1885 = vsel %vm1884, %v1877, %v1881
        %v1886 = vand.u32 2147483647, %v1861
        %vm1887 = vcmp.eq.f32.partialorder %v1886, 8.507059e+37
        %v1888 = vand.u32 %v1861, 2147483648
        %v1889 = vor.u32 1.1754944e-38, %v1888
        %v1890 = vsel %vm1887, %v1889, %v1885
        %v1891 = vmul.f32 1.0, %v1890
        %1894 = vrot.lane.b32.xlu0 %v1850, 32
        %v1895 = vpop.permute.xlu0 %1894
        %1896 = vrot.lane.b32.xlu0 %v1852, 32
        %v1897 = vpop.permute.xlu0 %1896
        %v1900 = vmul.f32 %v1876, %v1895
        %v1901 = vmul.f32 %v1891, %v1897
        %1904 = vrot.lane.b32.xlu0 %v1900, 64
        %v1905 = vpop.permute.xlu0 %1904
        %1906 = vrot.lane.b32.xlu0 %v1901, 64
        %v1907 = vpop.permute.xlu0 %1906
        %v1910 = vadd.f32 %v1850, %v1905
        %v1911 = vadd.f32 %v1852, %v1907
        %v1912 = vtanh.pop %v1910
        %v1913 = vtanh.pop %v1911
        %v1914 = vsub.f32 1.0, %v1876
        %v1915 = vsub.f32 1.0, %v1891
        %1918 = vrot.lane.b32.xlu0 %v1912, 96
        %v1919 = vpop.permute.xlu0 %1918
        %1920 = vrot.lane.b32.xlu0 %v1913, 96
        %v1921 = vpop.permute.xlu0 %1920
        %v1924 = vmul.f32 %v1914, %v1919
        %v1925 = vmul.f32 %v1915, %v1921
        %v1926 = vmul.f32 %v1876, %v1802
        %v1927 = vmul.f32 %v1891, %v1804
        %v1928 = vadd.f32 %v1924, %v1926
        %v1929 = vadd.f32 %v1925, %v1927
        %1932 = vrot.lane.b32.xlu0 %v1928, 96
        %v1933 = vpop.permute.xlu0 %1932
        %1934 = vrot.lane.b32.xlu0 %v1929, 96
        %v1935 = vpop.permute.xlu0 %1934
        %v1938 = vsel %vm1284, %v1933, 0.0
        %1939 = vadd.xlane.f32.xlu0 %v1938
        %v1940 = vpop.xlane.xlu0 %1939
        %v1941 = vsel %vm1284, %v1935, 0.0
        %1942 = vadd.xlane.f32.xlu0 %v1941
        %v1943 = vpop.xlane.xlu0 %1942
        %v1944 = vmul.f32 %v1940, %v1315
        %v1945 = vmul.f32 %v1943, %v1315
        %v1946 = vsub.f32 %v1928, %v1944
        %v1947 = vsub.f32 %v1929, %v1945
        %v1948 = vmul.f32 %v1946, %v1946
        %v1949 = vmul.f32 %v1947, %v1947
        %1952 = vrot.lane.b32.xlu0 %v1948, 96
        %v1953 = vpop.permute.xlu0 %1952
        %1954 = vrot.lane.b32.xlu0 %v1949, 96
        %v1955 = vpop.permute.xlu0 %1954
        %v1958 = vsel %vm1284, %v1953, 0.0
        %1959 = vadd.xlane.f32.xlu0 %v1958
        %v1960 = vpop.xlane.xlu0 %1959
        %v1961 = vsel %vm1284, %v1955, 0.0
        %1962 = vadd.xlane.f32.xlu0 %v1961
        %v1963 = vpop.xlane.xlu0 %1962
        %v1964 = vmul.f32 %v1960, %v1315
        %v1965 = vmul.f32 %v1963, %v1315
        %v1966 = vadd.f32 %v1964, 1e-05
        %v1967 = vadd.f32 %v1965, 1e-05
        %v1968 = vrsqrt.pop %v1966
        %v1969 = vmul.f32 %v1968, %v1966
        %v1970 = vmul.f32 %v1969, %v1968
        %v1971 = vmul.f32 0.5, %v1970
        %v1972 = vsub.f32 1.5, %v1971
        %v1973 = vmul.f32 %v1968, %v1972
        %vm1974 = vweird.f32 %v1966
        %vm1975 = vweird.f32 %v1968
        %vm1976 = vmor %vm1974, %vm1975
        %v1977 = vsel %vm1976, %v1968, %v1973
        %v1978 = vrsqrt.pop %v1967
        %v1979 = vmul.f32 %v1978, %v1967
        %v1980 = vmul.f32 %v1979, %v1978
        %v1981 = vmul.f32 0.5, %v1980
        %v1982 = vsub.f32 1.5, %v1981
        %v1983 = vmul.f32 %v1978, %v1982
        %vm1984 = vweird.f32 %v1967
        %vm1985 = vweird.f32 %v1978
        %vm1986 = vmor %vm1984, %vm1985
        %v1987 = vsel %vm1986, %v1978, %v1983
        %v1988 = vmul.f32 %v1946, %v1977
        %v1989 = vmul.f32 %v1947, %v1987
        %v1991 = vperm.slane %v1231, 0
        %1992 = vrot.lane.b32.xlu0 %v1991, 32
        %v1993 = vpop.permute.xlu0 %1992
        %v1995 = vmul.f32 %v1988, %v1993
        %v1996 = vmul.f32 %v1989, %v1993
        %v1998 = vperm.slane %v1232, 0
        %1999 = vrot.lane.b32.xlu0 %v1998, 32
        %v2000 = vpop.permute.xlu0 %1999
        %v2002 = vadd.f32 %v1995, %v2000
        %v2003 = vadd.f32 %v1996, %v2000
        %v2004 = vpack.c.bf16 %v2003, %v2002
        %v2006 = vperm.slane %v1234, 0
        %2009 = vrot.lane.b32.xlu0 %v2004, 96
        %v2010 = vpop.permute.xlu0 %2009
        %v2015 = vunpack.c.l.b16 %v1253
        %v2016 = vunpack.c.l.b16 %v1254
        %v2017 = vunpack.c.l.b16 %v1255
        %v2018 = vunpack.c.l.b16 %v1256
        %v2019 = vpack.c.b16 %v2016, %v2015
        %v2020 = vpack.c.b16 %v2018, %v2017
        %v2024 = vsel %vm1284, %v2010, 0
        %2026 = vmatpush.bf16.msra.mxu0 0
        %2027 = vmatpush.bf16.msra.mxu0 0
        %2028 = vmatpush.bf16.msra.mxu0 0
        %2029 = vmatpush.bf16.msra.mxu0 0
        %2030 = vmatpush.bf16.msra.mxu0 0
        %2031 = vmatpush.bf16.msra.mxu0 0
        %2032 = vmatpush.bf16.msra.mxu0 %v2020
        %2033 = vmatpush.bf16.msra.mxu0 %v2019
        %2034 = vmatmul.bf16.gmra.mxu0 %v2024
        %v2035 = vpop.f32.mrf.mxu0
        %v2036 = vadd.f32 %v2006, %v2035
        %v2037 = vpop.f32.mrf.mxu0
        %v2038 = vadd.f32 %v2006, %v2037
        %2039 = vdwg.mxu0
        %v2040 = vmax.f32 %v2036, 0.0
        %v2041 = vmax.f32 %v2038, 0.0
        %v2042 = vpack.c.bf16 %v2041, %v2040
        %v2047 = vunpack.c.l.b16 %v1257
        %v2048 = vunpack.c.l.b16 %v1258
        %v2049 = vunpack.c.l.b16 %v1259
        %v2050 = vunpack.c.l.b16 %v1260
        %v2051 = vpack.c.b16 %v2048, %v2047
        %v2052 = vpack.c.b16 %v2050, %v2049
        %v2056 = vsel %vm1284, %v2042, 0
        %2058 = vmatpush.bf16.msra.mxu0 0
        %2059 = vmatpush.bf16.msra.mxu0 0
        %2060 = vmatpush.bf16.msra.mxu0 0
        %2061 = vmatpush.bf16.msra.mxu0 0
        %2062 = vmatpush.bf16.msra.mxu0 0
        %2063 = vmatpush.bf16.msra.mxu0 0
        %2064 = vmatpush.bf16.msra.mxu0 %v2052
        %2065 = vmatpush.bf16.msra.mxu0 %v2051
        %2066 = vmatmul.bf16.gmra.mxu0 %v2056
        %v2067 = vpop.f32.mrf.mxu0
        %v2068 = vadd.f32 0.0, %v2067
        %v2069 = vpop.f32.mrf.mxu0
        %v2070 = vadd.f32 0.0, %v2069
        %2071 = vdwg.mxu0
        %2074 = vrot.lane.b32.xlu0 %v2068, 32
        %v2075 = vpop.permute.xlu0 %2074
        %2076 = vrot.lane.b32.xlu0 %v2070, 32
        %v2077 = vpop.permute.xlu0 %2076
        %v2080 = vadd.f32 %v1928, %v2075
        %v2081 = vadd.f32 %v1929, %v2077
        %v2083 = vperm.slane %v1235, 0
        %2084 = vrot.lane.b32.xlu0 %v2083, 32
        %v2085 = vpop.permute.xlu0 %2084
        %v2087 = vadd.f32 %v2080, %v2085
        %v2088 = vadd.f32 %v2081, %v2085
        %2091 = vrot.lane.b32.xlu0 %v2087, 96
        %v2092 = vpop.permute.xlu0 %2091
        %2093 = vrot.lane.b32.xlu0 %v2088, 96
        %v2094 = vpop.permute.xlu0 %2093
        %v2097 = vsel %vm1284, %v2092, 0.0
        %2098 = vadd.xlane.f32.xlu0 %v2097
        %v2099 = vpop.xlane.xlu0 %2098
        %v2100 = vsel %vm1284, %v2094, 0.0
        %2101 = vadd.xlane.f32.xlu0 %v2100
        %v2102 = vpop.xlane.xlu0 %2101
        %v2103 = vmul.f32 %v2099, %v1315
        %v2104 = vmul.f32 %v2102, %v1315
        %v2105 = vsub.f32 %v2087, %v2103
        %v2106 = vsub.f32 %v2088, %v2104
        %v2107 = vmul.f32 %v2105, %v2105
        %v2108 = vmul.f32 %v2106, %v2106
        %2111 = vrot.lane.b32.xlu0 %v2107, 96
        %v2112 = vpop.permute.xlu0 %2111
        %2113 = vrot.lane.b32.xlu0 %v2108, 96
        %v2114 = vpop.permute.xlu0 %2113
        %v2117 = vsel %vm1284, %v2112, 0.0
        %2118 = vadd.xlane.f32.xlu0 %v2117
        %v2119 = vpop.xlane.xlu0 %2118
        %v2120 = vsel %vm1284, %v2114, 0.0
        %2121 = vadd.xlane.f32.xlu0 %v2120
        %v2122 = vpop.xlane.xlu0 %2121
        %v2123 = vmul.f32 %v2119, %v1315
        %v2124 = vmul.f32 %v2122, %v1315
        %v2125 = vadd.f32 %v2123, 1e-05
        %v2126 = vadd.f32 %v2124, 1e-05
        %v2127 = vrsqrt.pop %v2125
        %v2128 = vmul.f32 %v2127, %v2125
        %v2129 = vmul.f32 %v2128, %v2127
        %v2130 = vmul.f32 0.5, %v2129
        %v2131 = vsub.f32 1.5, %v2130
        %v2132 = vmul.f32 %v2127, %v2131
        %vm2133 = vweird.f32 %v2125
        %vm2134 = vweird.f32 %v2127
        %vm2135 = vmor %vm2133, %vm2134
        %v2136 = vsel %vm2135, %v2127, %v2132
        %v2137 = vrsqrt.pop %v2126
        %v2138 = vmul.f32 %v2137, %v2126
        %v2139 = vmul.f32 %v2138, %v2137
        %v2140 = vmul.f32 0.5, %v2139
        %v2141 = vsub.f32 1.5, %v2140
        %v2142 = vmul.f32 %v2137, %v2141
        %vm2143 = vweird.f32 %v2126
        %vm2144 = vweird.f32 %v2137
        %vm2145 = vmor %vm2143, %vm2144
        %v2146 = vsel %vm2145, %v2137, %v2142
        %v2147 = vmul.f32 %v2105, %v2136
        %v2148 = vmul.f32 %v2106, %v2146
        %2149 = vrot.lane.b32.xlu0 %v1594, 32
        %v2150 = vpop.permute.xlu0 %2149
        %v2152 = vmul.f32 %v2147, %v2150
        %v2153 = vmul.f32 %v2148, %v2150
        %2154 = vrot.lane.b32.xlu0 %v1599, 32
        %v2155 = vpop.permute.xlu0 %2154
        %v2157 = vadd.f32 %v2152, %v2155
        %v2158 = vadd.f32 %v2153, %v2155
        %v2159 = vpack.c.bf16 %v2158, %v2157
        %2161 = vrot.lane.b32.xlu0 %v2159, 96
        %v2162 = vpop.permute.xlu0 %2161
        %v2164 = vsel %vm1284, %v2162, 0
        %2166 = vmatpush.bf16.msra.mxu0 0
        %2167 = vmatpush.bf16.msra.mxu0 0
        %2168 = vmatpush.bf16.msra.mxu0 0
        %2169 = vmatpush.bf16.msra.mxu0 0
        %2170 = vmatpush.bf16.msra.mxu0 0
        %2171 = vmatpush.bf16.msra.mxu0 0
        %2172 = vmatpush.bf16.msra.mxu0 %v1613
        %2173 = vmatpush.bf16.msra.mxu0 %v1612
        %2174 = vmatmul.bf16.gmra.mxu0 %v2164
        %v2175 = vpop.f32.mrf.mxu0
        %v2176 = vadd.f32 0.0, %v2175
        %v2177 = vpop.f32.mrf.mxu0
        %v2178 = vadd.f32 0.0, %v2177
        %2179 = vdwg.mxu0
        %v2180 = vpack.c.bf16 %v2176, %v2176
        %v2181 = vpack.c.bf16 %v2178, %v2178
        %v2184 = vunpack.c.l.b16 %v2180
        %v2185 = vunpack.c.l.b16 %v2181
        %v2186 = vpack.c.b16 %v2185, %v2184
        %v2188 = vsel %vm1284, %v2186, 0
        %2190 = vmatpush.bf16.xpose.msra.mxu0 0
        %2191 = vmatpush.bf16.xpose.msra.mxu0 0
        %2192 = vmatpush.bf16.xpose.msra.mxu0 0
        %2193 = vmatpush.bf16.xpose.msra.mxu0 0
        %2194 = vmatpush.bf16.xpose.msra.mxu0 %v1681
        %2195 = vmatpush.bf16.xpose.msra.mxu0 %v1678
        %2196 = vmatpush.bf16.xpose.msra.mxu0 %v1675
        %2197 = vmatpush.bf16.xpose.msra.mxu0 %v1672
        %2198 = vmatmul.bf16.gmra.mxu0 %v2188
        %v2199 = vpop.f32.mrf.mxu0
        %v2200 = vadd.f32 %v1270, %v2199
        %v2201 = vpop.f32.mrf.mxu0
        %v2202 = vadd.f32 %v1271, %v2201
        %2203 = vdwg.mxu0
        %v2204 = vsel %vm1697, %v2200, -inf
        %v2205 = vsel %vm1697, %v2202, -inf
        %v2206 = vmax.f32 %v2204, %v2205
        %v2207 = vrot.slane %v2206, 4
        %v2208 = vmax.f32 %v2206, %v2207
        %v2209 = vrot.slane %v2208, 2
        %v2210 = vmax.f32 %v2208, %v2209
        %v2211 = vrot.slane %v2210, 1
        %v2212 = vmax.f32 %v2210, %v2211
        %v2213 = vsub.f32 %v2200, %v2212
        %v2214 = vsub.f32 %v2202, %v2212
        %v2215 = vmul.f32 %v2213, 1.442695
        %v2216 = vpow.pop %v2215
        %v2217 = vmul.f32 %v2214, 1.442695
        %v2218 = vpow.pop %v2217
        %v2219 = vsel %vm1697, %v2216, 0.0
        %v2220 = vsel %vm1697, %v2218, 0.0
        %v2221 = vadd.f32 %v2219, %v2220
        %v2222 = vrot.slane %v2221, 4
        %v2223 = vadd.f32 %v2221, %v2222
        %v2224 = vrot.slane %v2223, 2
        %v2225 = vadd.f32 %v2223, %v2224
        %v2226 = vrot.slane %v2225, 1
        %v2227 = vadd.f32 %v2225, %v2226
        %v2228 = vrcp.pop %v2227
        %v2229 = vmul.f32 %v2216, %v2228
        %v2230 = vmul.f32 %v2218, %v2228
        %v2231 = vadd.f32 %v2229, 1e-08
        %v2232 = vadd.f32 %v2230, 1e-08
        %v2233 = vsel %vm1697, %v2231, 0.0
        %2234 = vadd.xlane.f32.xlu0 %v2233
        %v2235 = vpop.xlane.xlu0 %2234
        %v2236 = vsel %vm1697, %v2232, 0.0
        %2237 = vadd.xlane.f32.xlu0 %v2236
        %v2238 = vpop.xlane.xlu0 %2237
        %v2239 = vrcp.pop %v2235
        %v2240 = vmul.f32 %v2235, %v2239
        %v2241 = vsub.f32 1.0, %v2240
        %v2242 = vmul.f32 %v2239, %v2241
        %v2243 = vadd.f32 %v2239, %v2242
        %vm2244 = vweird.f32 %v2235
        %vm2245 = vweird.f32 %v2239
        %vm2246 = vmor %vm2244, %vm2245
        %v2247 = vsel %vm2246, %v2239, %v2243
        %v2248 = vand.u32 2147483647, %v2235
        %vm2249 = vcmp.eq.f32.partialorder %v2248, 8.507059e+37
        %v2250 = vand.u32 %v2235, 2147483648
        %v2251 = vor.u32 1.1754944e-38, %v2250
        %v2252 = vsel %vm2249, %v2251, %v2247
        %v2253 = vmul.f32 %v2231, %v2252
        %v2254 = vrcp.pop %v2238
        %v2255 = vmul.f32 %v2238, %v2254
        %v2256 = vsub.f32 1.0, %v2255
        %v2257 = vmul.f32 %v2254, %v2256
        %v2258 = vadd.f32 %v2254, %v2257
        %vm2259 = vweird.f32 %v2238
        %vm2260 = vweird.f32 %v2254
        %vm2261 = vmor %vm2259, %vm2260
        %v2262 = vsel %vm2261, %v2254, %v2258
        %v2263 = vand.u32 2147483647, %v2238
        %vm2264 = vcmp.eq.f32.partialorder %v2263, 8.507059e+37
        %v2265 = vand.u32 %v2238, 2147483648
        %v2266 = vor.u32 1.1754944e-38, %v2265
        %v2267 = vsel %vm2264, %v2266, %v2262
        %v2268 = vmul.f32 %v2232, %v2267
        %v2269 = vpack.c.bf16 %v2253, %v2253
        %v2270 = vpack.c.bf16 %v2268, %v2268
        %v2273 = vunpack.c.l.b16 %v2269
        %v2274 = vunpack.c.l.b16 %v2270
        %v2275 = vpack.c.b16 %v2274, %v2273
        %v2277 = vsel %vm1697, %v2275, 0
        %2279 = vmatpush.bf16.msra.mxu0 0
        %2280 = vmatpush.bf16.msra.mxu0 0
        %2281 = vmatpush.bf16.msra.mxu0 0
        %2282 = vmatpush.bf16.msra.mxu0 0
        %2283 = vmatpush.bf16.msra.mxu0 %v1777
        %2284 = vmatpush.bf16.msra.mxu0 %v1775
        %2285 = vmatpush.bf16.msra.mxu0 %v1773
        %2286 = vmatpush.bf16.msra.mxu0 %v1771
        %2287 = vmatmul.bf16.gmra.mxu0 %v2277
        %v2288 = vpop.f32.mrf.mxu0
        %v2289 = vadd.f32 0.0, %v2288
        %v2290 = vpop.f32.mrf.mxu0
        %v2291 = vadd.f32 0.0, %v2290
        %2292 = vdwg.mxu0
        %v2293 = vsel %vm1284, %v2289, %v2087
        %v2294 = vsel %vm1284, %v2291, %v2088
        %v2295 = vpack.c.bf16 %v2294, %v2293
        %v2297 = vsel %vm1697, %v2295, 0
        %2299 = vmatpush.bf16.msra.mxu0 0
        %2300 = vmatpush.bf16.msra.mxu0 0
        %2301 = vmatpush.bf16.msra.mxu0 0
        %2302 = vmatpush.bf16.msra.mxu0 0
        %2303 = vmatpush.bf16.msra.mxu0 %v1832
        %2304 = vmatpush.bf16.msra.mxu0 %v1831
        %2305 = vmatpush.bf16.msra.mxu0 %v1830
        %2306 = vmatpush.bf16.msra.mxu0 %v1829
        %2307 = vmatmul.bf16.gmra.mxu0 %v2297
        %v2308 = vpop.f32.mrf.mxu0
        %v2309 = vadd.f32 %v1811, %v2308
        %v2310 = vpop.f32.mrf.mxu0
        %v2311 = vadd.f32 %v1811, %v2310
        %2312 = vdwg.mxu0
        %v2313 = vxor.u32 %v2309, 2147483648
        %v2314 = vxor.u32 %v2311, 2147483648
        %v2315 = vmul.f32 %v2313, 1.442695
        %v2316 = vpow.pop %v2315
        %v2317 = vmul.f32 %v2314, 1.442695
        %v2318 = vpow.pop %v2317
        %v2319 = vadd.f32 %v2316, 1.0
        %v2320 = vadd.f32 %v2318, 1.0
        %v2321 = vrcp.pop %v2319
        %v2322 = vmul.f32 %v2319, %v2321
        %v2323 = vsub.f32 1.0, %v2322
        %v2324 = vmul.f32 %v2321, %v2323
        %v2325 = vadd.f32 %v2321, %v2324
        %vm2326 = vweird.f32 %v2319
        %vm2327 = vweird.f32 %v2321
        %vm2328 = vmor %vm2326, %vm2327
        %v2329 = vsel %vm2328, %v2321, %v2325
        %v2330 = vand.u32 2147483647, %v2319
        %vm2331 = vcmp.eq.f32.partialorder %v2330, 8.507059e+37
        %v2332 = vand.u32 %v2319, 2147483648
        %v2333 = vor.u32 1.1754944e-38, %v2332
        %v2334 = vsel %vm2331, %v2333, %v2329
        %v2335 = vmul.f32 1.0, %v2334
        %v2336 = vrcp.pop %v2320
        %v2337 = vmul.f32 %v2320, %v2336
        %v2338 = vsub.f32 1.0, %v2337
        %v2339 = vmul.f32 %v2336, %v2338
        %v2340 = vadd.f32 %v2336, %v2339
        %vm2341 = vweird.f32 %v2320
        %vm2342 = vweird.f32 %v2336
        %vm2343 = vmor %vm2341, %vm2342
        %v2344 = vsel %vm2343, %v2336, %v2340
        %v2345 = vand.u32 2147483647, %v2320
        %vm2346 = vcmp.eq.f32.partialorder %v2345, 8.507059e+37
        %v2347 = vand.u32 %v2320, 2147483648
        %v2348 = vor.u32 1.1754944e-38, %v2347
        %v2349 = vsel %vm2346, %v2348, %v2344
        %v2350 = vmul.f32 1.0, %v2349
        %2353 = vrot.lane.b32.xlu0 %v2309, 32
        %v2354 = vpop.permute.xlu0 %2353
        %2355 = vrot.lane.b32.xlu0 %v2311, 32
        %v2356 = vpop.permute.xlu0 %2355
        %v2359 = vmul.f32 %v2335, %v2354
        %v2360 = vmul.f32 %v2350, %v2356
        %2363 = vrot.lane.b32.xlu0 %v2359, 64
        %v2364 = vpop.permute.xlu0 %2363
        %2365 = vrot.lane.b32.xlu0 %v2360, 64
        %v2366 = vpop.permute.xlu0 %2365
        %v2369 = vadd.f32 %v2309, %v2364
        %v2370 = vadd.f32 %v2311, %v2366
        %v2371 = vtanh.pop %v2369
        %v2372 = vtanh.pop %v2370
        %v2373 = vsub.f32 1.0, %v2335
        %v2374 = vsub.f32 1.0, %v2350
        %2377 = vrot.lane.b32.xlu0 %v2371, 96
        %v2378 = vpop.permute.xlu0 %2377
        %2379 = vrot.lane.b32.xlu0 %v2372, 96
        %v2380 = vpop.permute.xlu0 %2379
        %v2383 = vmul.f32 %v2373, %v2378
        %v2384 = vmul.f32 %v2374, %v2380
        %v2385 = vmul.f32 %v2335, %v2087
        %v2386 = vmul.f32 %v2350, %v2088
        %v2387 = vadd.f32 %v2383, %v2385
        %v2388 = vadd.f32 %v2384, %v2386
        %2391 = vrot.lane.b32.xlu0 %v2387, 96
        %v2392 = vpop.permute.xlu0 %2391
        %2393 = vrot.lane.b32.xlu0 %v2388, 96
        %v2394 = vpop.permute.xlu0 %2393
        %v2397 = vsel %vm1284, %v2392, 0.0
        %2398 = vadd.xlane.f32.xlu0 %v2397
        %v2399 = vpop.xlane.xlu0 %2398
        %v2400 = vsel %vm1284, %v2394, 0.0
        %2401 = vadd.xlane.f32.xlu0 %v2400
        %v2402 = vpop.xlane.xlu0 %2401
        %v2403 = vmul.f32 %v2399, %v1315
        %v2404 = vmul.f32 %v2402, %v1315
        %v2405 = vsub.f32 %v2387, %v2403
        %v2406 = vsub.f32 %v2388, %v2404
        %v2407 = vmul.f32 %v2405, %v2405
        %v2408 = vmul.f32 %v2406, %v2406
        %2411 = vrot.lane.b32.xlu0 %v2407, 96
        %v2412 = vpop.permute.xlu0 %2411
        %2413 = vrot.lane.b32.xlu0 %v2408, 96
        %v2414 = vpop.permute.xlu0 %2413
        %v2417 = vsel %vm1284, %v2412, 0.0
        %2418 = vadd.xlane.f32.xlu0 %v2417
        %v2419 = vpop.xlane.xlu0 %2418
        %v2420 = vsel %vm1284, %v2414, 0.0
        %2421 = vadd.xlane.f32.xlu0 %v2420
        %v2422 = vpop.xlane.xlu0 %2421
        %v2423 = vmul.f32 %v2419, %v1315
        %v2424 = vmul.f32 %v2422, %v1315
        %v2425 = vadd.f32 %v2423, 1e-05
        %v2426 = vadd.f32 %v2424, 1e-05
        %v2427 = vrsqrt.pop %v2425
        %v2428 = vmul.f32 %v2427, %v2425
        %v2429 = vmul.f32 %v2428, %v2427
        %v2430 = vmul.f32 0.5, %v2429
        %v2431 = vsub.f32 1.5, %v2430
        %v2432 = vmul.f32 %v2427, %v2431
        %vm2433 = vweird.f32 %v2425
        %vm2434 = vweird.f32 %v2427
        %vm2435 = vmor %vm2433, %vm2434
        %v2436 = vsel %vm2435, %v2427, %v2432
        %v2437 = vrsqrt.pop %v2426
        %v2438 = vmul.f32 %v2437, %v2426
        %v2439 = vmul.f32 %v2438, %v2437
        %v2440 = vmul.f32 0.5, %v2439
        %v2441 = vsub.f32 1.5, %v2440
        %v2442 = vmul.f32 %v2437, %v2441
        %vm2443 = vweird.f32 %v2426
        %vm2444 = vweird.f32 %v2437
        %vm2445 = vmor %vm2443, %vm2444
        %v2446 = vsel %vm2445, %v2437, %v2442
        %v2447 = vmul.f32 %v2405, %v2436
        %v2448 = vmul.f32 %v2406, %v2446
        %v2449 = vmul.f32 %v2447, %v1993
        %v2450 = vmul.f32 %v2448, %v1993
        %v2451 = vadd.f32 %v2449, %v2000
        %v2452 = vadd.f32 %v2450, %v2000
        %v2453 = vpack.c.bf16 %v2452, %v2451
        %2455 = vrot.lane.b32.xlu0 %v2453, 96
        %v2456 = vpop.permute.xlu0 %2455
        %v2458 = vsel %vm1284, %v2456, 0
        %2460 = vmatpush.bf16.msra.mxu0 0
        %2461 = vmatpush.bf16.msra.mxu0 0
        %2462 = vmatpush.bf16.msra.mxu0 0
        %2463 = vmatpush.bf16.msra.mxu0 0
        %2464 = vmatpush.bf16.msra.mxu0 0
        %2465 = vmatpush.bf16.msra.mxu0 0
        %2466 = vmatpush.bf16.msra.mxu0 %v2020
        %2467 = vmatpush.bf16.msra.mxu0 %v2019
        %2468 = vmatmul.bf16.gmra.mxu0 %v2458
        %v2469 = vpop.f32.mrf.mxu0
        %v2470 = vadd.f32 %v2006, %v2469
        %v2471 = vpop.f32.mrf.mxu0
        %v2472 = vadd.f32 %v2006, %v2471
        %2473 = vdwg.mxu0
        %v2474 = vmax.f32 %v2470, 0.0
        %v2475 = vmax.f32 %v2472, 0.0
        %v2476 = vpack.c.bf16 %v2475, %v2474
        %v2478 = vsel %vm1284, %v2476, 0
        %2480 = vmatpush.bf16.msra.mxu0 0
        %2481 = vmatpush.bf16.msra.mxu0 0
        %2482 = vmatpush.bf16.msra.mxu0 0
        %2483 = vmatpush.bf16.msra.mxu0 0
        %2484 = vmatpush.bf16.msra.mxu0 0
        %2485 = vmatpush.bf16.msra.mxu0 0
        %2486 = vmatpush.bf16.msra.mxu0 %v2052
        %2487 = vmatpush.bf16.msra.mxu0 %v2051
        %2488 = vmatmul.bf16.gmra.mxu0 %v2478
        %v2489 = vpop.f32.mrf.mxu0
        %v2490 = vadd.f32 0.0, %v2489
        %v2491 = vpop.f32.mrf.mxu0
        %v2492 = vadd.f32 0.0, %v2491
        %2493 = vdwg.mxu0
        %2496 = vrot.lane.b32.xlu0 %v2490, 32
        %v2497 = vpop.permute.xlu0 %2496
        %2498 = vrot.lane.b32.xlu0 %v2492, 32
        %v2499 = vpop.permute.xlu0 %2498
        %v2502 = vadd.f32 %v2387, %v2497
        %v2503 = vadd.f32 %v2388, %v2499
        %v2504 = vadd.f32 %v2502, %v2085
        %v2505 = vadd.f32 %v2503, %v2085
        %v2506 = vld [vmem:[%s1018] sm:$0xff]
        %v2507 = vld [vmem:[%s1018 + $0x8] sm:$0xff]
        %2510 = vrot.lane.b32.xlu0 %v2506, 32
        %v2511 = vpop.permute.xlu0 %2510
        %2512 = vrot.lane.b32.xlu0 %v2507, 32
        %v2513 = vpop.permute.xlu0 %2512
        %v2516 = vadd.f32 %v2504, %v2511
        %v2517 = vadd.f32 %v2505, %v2513
        %v2518 = vld [vmem:[%s1212] sm:$0xf]
        %v2519 = vld [vmem:[%s1212 + $0x4] sm:$0xf]
        %v2520 = vld [vmem:[%s1212 + $0x8] sm:$0xf]
        %v2521 = vld [vmem:[%s1212 + $0xc] sm:$0xf]
        %v2522 = vpack.c.bf16 %v1277, %v1276
        %v2523 = vpack.c.bf16 %v1279, %v1278
        %v2524 = vpack.c.bf16 %v1281, %v1280
        %v2525 = vpack.c.bf16 %v1283, %v1282
        %v2530 = vunpack.c.l.b16 %v2518
        %v2531 = vunpack.c.l.b16 %v2519
        %v2532 = vunpack.c.l.b16 %v2520
        %v2533 = vunpack.c.l.b16 %v2521
        %v2534 = vpack.c.b16 %v2531, %v2530
        %v2535 = vpack.c.b16 %v2533, %v2532
        %v2539 = vsel %vm1284, %v2522, 0
        %v2542 = vsel %vm1284, %v2523, 0
        %v2545 = vsel %vm1284, %v2524, 0
        %v2548 = vsel %vm1284, %v2525, 0
        %2550 = vmatpush.bf16.msra.mxu0 0
        %2551 = vmatpush.bf16.msra.mxu0 0
        %2552 = vmatpush.bf16.msra.mxu0 0
        %2553 = vmatpush.bf16.msra.mxu0 0
        %2554 = vmatpush.bf16.msra.mxu0 0
        %2555 = vmatpush.bf16.msra.mxu0 0
        %2556 = vmatpush.bf16.msra.mxu0 %v2535
        %2557 = vmatpush.bf16.msra.mxu0 %v2534
        %2558 = vmatmul.bf16.gmra.mxu0 %v2539
        %v2559 = vpop.f32.mrf.mxu0
        %v2560 = vadd.f32 0.0, %v2559
        %v2561 = vpop.f32.mrf.mxu0
        %v2562 = vadd.f32 0.0, %v2561
        %2563 = vmatmul.bf16.gmra.mxu0 %v2542
        %v2564 = vpop.f32.mrf.mxu0
        %v2565 = vadd.f32 0.0, %v2564
        %v2566 = vpop.f32.mrf.mxu0
        %v2567 = vadd.f32 0.0, %v2566
        %2568 = vmatmul.bf16.gmra.mxu0 %v2545
        %v2569 = vpop.f32.mrf.mxu0
        %v2570 = vadd.f32 0.0, %v2569
        %v2571 = vpop.f32.mrf.mxu0
        %v2572 = vadd.f32 0.0, %v2571
        %2573 = vmatmul.bf16.gmra.mxu0 %v2548
        %v2574 = vpop.f32.mrf.mxu0
        %v2575 = vadd.f32 0.0, %v2574
        %v2576 = vpop.f32.mrf.mxu0
        %v2577 = vadd.f32 0.0, %v2576
        %2578 = vdwg.mxu0
        %v2579 = vld [vmem:[%s1217] sm:$0xf]
        %v2580 = vld [vmem:[%s1217 + $0x4] sm:$0xf]
        %v2581 = vld [vmem:[%s1217 + $0x8] sm:$0xf]
        %v2582 = vld [vmem:[%s1217 + $0xc] sm:$0xf]
        %v2583 = vpack.c.bf16 %v2517, %v2516
        %2585 = vrot.lane.b32.xlu0 %v2583, 96
        %v2586 = vpop.permute.xlu0 %2585
        %v2591 = vunpack.c.l.b16 %v2579
        %v2592 = vunpack.c.l.b16 %v2580
        %v2593 = vunpack.c.l.b16 %v2581
        %v2594 = vunpack.c.l.b16 %v2582
        %v2595 = vpack.c.b16 %v2592, %v2591
        %v2596 = vpack.c.b16 %v2594, %v2593
        %v2600 = vsel %vm1284, %v2586, 0
        %2602 = vmatpush.bf16.msra.mxu0 0
        %2603 = vmatpush.bf16.msra.mxu0 0
        %2604 = vmatpush.bf16.msra.mxu0 0
        %2605 = vmatpush.bf16.msra.mxu0 0
        %2606 = vmatpush.bf16.msra.mxu0 0
        %2607 = vmatpush.bf16.msra.mxu0 0
        %2608 = vmatpush.bf16.msra.mxu0 %v2596
        %2609 = vmatpush.bf16.msra.mxu0 %v2595
        %2610 = vmatmul.bf16.gmra.mxu0 %v2600
        %v2611 = vpop.f32.mrf.mxu0
        %v2612 = vadd.f32 0.0, %v2611
        %v2613 = vpop.f32.mrf.mxu0
        %v2614 = vadd.f32 0.0, %v2613
        %2615 = vdwg.mxu0
        %v2616 = vpack.c.bf16 %v2560, %v2560
        %v2617 = vpack.c.bf16 %v2562, %v2562
        %v2618 = vpack.c.bf16 %v2565, %v2565
        %v2619 = vpack.c.bf16 %v2567, %v2567
        %v2620 = vpack.c.bf16 %v2570, %v2570
        %v2621 = vpack.c.bf16 %v2572, %v2572
        %v2622 = vpack.c.bf16 %v2575, %v2575
        %v2623 = vpack.c.bf16 %v2577, %v2577
        %v2624 = vpack.c.bf16 %v2612, %v2612
        %v2625 = vpack.c.bf16 %v2614, %v2614
        %v2634 = vunpack.c.l.b16 %v2616
        %v2635 = vunpack.c.l.b16 %v2617
        %v2636 = vunpack.c.l.b16 %v2618
        %v2637 = vunpack.c.l.b16 %v2619
        %v2638 = vunpack.c.l.b16 %v2620
        %v2639 = vunpack.c.l.b16 %v2621
        %v2640 = vunpack.c.l.b16 %v2622
        %v2641 = vunpack.c.l.b16 %v2623
        %v2642 = vpack.c.b16 %v2635, %v2634
        %v2643 = vpack.c.b16 %v2637, %v2636
        %v2644 = vpack.c.b16 %v2639, %v2638
        %v2645 = vpack.c.b16 %v2641, %v2640
        %v2648 = vunpack.c.l.b16 %v2624
        %v2649 = vunpack.c.l.b16 %v2625
        %v2650 = vpack.c.b16 %v2649, %v2648
        %vm2651 = vcmask 130048
        %v2653 = vsel %vm2651, %v2642, 0
        %v2656 = vsel %vm2651, %v2643, 0
        %v2659 = vsel %vm2651, %v2644, 0
        %v2662 = vsel %vm2651, %v2645, 0
        %v2665 = vsel %vm2651, %v2650, 0
        %2667 = vmatpush.bf16.xpose.msra.mxu0 0
        %2668 = vmatpush.bf16.xpose.msra.mxu0 0
        %2669 = vmatpush.bf16.xpose.msra.mxu0 0
        %2670 = vmatpush.bf16.xpose.msra.mxu0 0
        %2671 = vmatpush.bf16.xpose.msra.mxu0 0
        %2672 = vmatpush.bf16.xpose.msra.mxu0 0
        %2673 = vmatpush.bf16.xpose.msra.mxu0 0
        %2674 = vmatpush.bf16.xpose.msra.mxu0 %v2665
        %2675 = vmatmul.bf16.gmra.mxu0 %v2653
        %v2676 = vpop.f32.mrf.mxu0
        %v2677 = vadd.f32 %v1275, %v2676
        %v2678 = vpop.f32.mrf.mxu0
        %v2679 = vadd.f32 %v1275, %v2678
        %2680 = vmatmul.bf16.gmra.mxu0 %v2656
        %v2681 = vpop.f32.mrf.mxu0
        %v2682 = vadd.f32 %v1275, %v2681
        %v2683 = vpop.f32.mrf.mxu0
        %v2684 = vadd.f32 %v1275, %v2683
        %2685 = vmatmul.bf16.gmra.mxu0 %v2659
        %v2686 = vpop.f32.mrf.mxu0
        %v2687 = vadd.f32 %v1275, %v2686
        %v2688 = vpop.f32.mrf.mxu0
        %v2689 = vadd.f32 %v1275, %v2688
        %2690 = vmatmul.bf16.gmra.mxu0 %v2662
        %v2691 = vpop.f32.mrf.mxu0
        %v2692 = vadd.f32 %v1275, %v2691
        %v2693 = vpop.f32.mrf.mxu0
        %v2694 = vadd.f32 %v1275, %v2693
        %2695 = vdwg.mxu0
        %v2696 = vsel %vm2651, %v2677, -inf
        %2697 = vmax.xlane.f32.xlu0 %v2696
        %v2698 = vpop.xlane.xlu0 %2697
        %v2699 = vsel %vm2651, %v2679, -inf
        %2700 = vmax.xlane.f32.xlu0 %v2699
        %v2701 = vpop.xlane.xlu0 %2700
        %v2702 = vsel %vm2651, %v2682, -inf
        %2703 = vmax.xlane.f32.xlu0 %v2702
        %v2704 = vpop.xlane.xlu0 %2703
        %v2705 = vsel %vm2651, %v2684, -inf
        %2706 = vmax.xlane.f32.xlu0 %v2705
        %v2707 = vpop.xlane.xlu0 %2706
        %v2708 = vsel %vm2651, %v2687, -inf
        %2709 = vmax.xlane.f32.xlu0 %v2708
        %v2710 = vpop.xlane.xlu0 %2709
        %v2711 = vsel %vm2651, %v2689, -inf
        %2712 = vmax.xlane.f32.xlu0 %v2711
        %v2713 = vpop.xlane.xlu0 %2712
        %v2714 = vsel %vm2651, %v2692, -inf
        %2715 = vmax.xlane.f32.xlu0 %v2714
        %v2716 = vpop.xlane.xlu0 %2715
        %v2717 = vsel %vm2651, %v2694, -inf
        %2718 = vmax.xlane.f32.xlu0 %v2717
        %v2719 = vpop.xlane.xlu0 %2718
        %v2720 = vsub.f32 %v2677, %v2698
        %v2721 = vsub.f32 %v2679, %v2701
        %v2722 = vsub.f32 %v2682, %v2704
        %v2723 = vsub.f32 %v2684, %v2707
        %v2724 = vsub.f32 %v2687, %v2710
        %v2725 = vsub.f32 %v2689, %v2713
        %v2726 = vsub.f32 %v2692, %v2716
        %v2727 = vsub.f32 %v2694, %v2719
        %v2728 = vmul.f32 %v2720, 1.442695
        %v2729 = vpow.pop %v2728
        %v2730 = vmul.f32 %v2721, 1.442695
        %v2731 = vpow.pop %v2730
        %v2732 = vmul.f32 %v2722, 1.442695
        %v2733 = vpow.pop %v2732
        %v2734 = vmul.f32 %v2723, 1.442695
        %v2735 = vpow.pop %v2734
        %v2736 = vmul.f32 %v2724, 1.442695
        %v2737 = vpow.pop %v2736
        %v2738 = vmul.f32 %v2725, 1.442695
        %v2739 = vpow.pop %v2738
        %v2740 = vmul.f32 %v2726, 1.442695
        %v2741 = vpow.pop %v2740
        %v2742 = vmul.f32 %v2727, 1.442695
        %v2743 = vpow.pop %v2742
        %v2744 = vsel %vm2651, %v2729, 0.0
        %2745 = vadd.xlane.f32.xlu0 %v2744
        %v2746 = vpop.xlane.xlu0 %2745
        %v2747 = vsel %vm2651, %v2731, 0.0
        %2748 = vadd.xlane.f32.xlu0 %v2747
        %v2749 = vpop.xlane.xlu0 %2748
        %v2750 = vsel %vm2651, %v2733, 0.0
        %2751 = vadd.xlane.f32.xlu0 %v2750
        %v2752 = vpop.xlane.xlu0 %2751
        %v2753 = vsel %vm2651, %v2735, 0.0
        %2754 = vadd.xlane.f32.xlu0 %v2753
        %v2755 = vpop.xlane.xlu0 %2754
        %v2756 = vsel %vm2651, %v2737, 0.0
        %2757 = vadd.xlane.f32.xlu0 %v2756
        %v2758 = vpop.xlane.xlu0 %2757
        %v2759 = vsel %vm2651, %v2739, 0.0
        %2760 = vadd.xlane.f32.xlu0 %v2759
        %v2761 = vpop.xlane.xlu0 %2760
        %v2762 = vsel %vm2651, %v2741, 0.0
        %2763 = vadd.xlane.f32.xlu0 %v2762
        %v2764 = vpop.xlane.xlu0 %2763
        %v2765 = vsel %vm2651, %v2743, 0.0
        %2766 = vadd.xlane.f32.xlu0 %v2765
        %v2767 = vpop.xlane.xlu0 %2766
        %v2768 = vrcp.pop %v2746
        %v2769 = vrcp.pop %v2749
        %v2770 = vrcp.pop %v2752
        %v2771 = vrcp.pop %v2755
        %v2772 = vrcp.pop %v2758
        %v2773 = vrcp.pop %v2761
        %v2774 = vrcp.pop %v2764
        %v2775 = vrcp.pop %v2767
        %v2776 = vmul.f32 %v2729, %v2768
        %v2777 = vmul.f32 %v2731, %v2769
        %v2778 = vmul.f32 %v2733, %v2770
        %v2779 = vmul.f32 %v2735, %v2771
        %v2780 = vmul.f32 %v2737, %v2772
        %v2781 = vmul.f32 %v2739, %v2773
        %v2782 = vmul.f32 %v2741, %v2774
        %v2783 = vmul.f32 %v2743, %v2775
        %v2784 = vadd.f32 %v2776, 0.0
        %v2785 = vadd.f32 %v2777, 0.0
        %v2786 = vadd.f32 %v2778, 0.0
        %v2787 = vadd.f32 %v2779, 0.0
        %v2788 = vadd.f32 %v2780, 0.0
        %v2789 = vadd.f32 %v2781, 0.0
        %v2790 = vadd.f32 %v2782, 0.0
        %v2791 = vadd.f32 %v2783, 0.0
        %v2792 = vpack.c.bf16 %v2776, %v2776
        %v2793 = vpack.c.bf16 %v2777, %v2777
        %v2794 = vpack.c.bf16 %v2778, %v2778
        %v2795 = vpack.c.bf16 %v2779, %v2779
        %v2796 = vpack.c.bf16 %v2780, %v2780
        %v2797 = vpack.c.bf16 %v2781, %v2781
        %v2798 = vpack.c.bf16 %v2782, %v2782
        %v2799 = vpack.c.bf16 %v2783, %v2783
        %v2808 = vunpack.c.l.b16 %v2792
        %v2809 = vunpack.c.l.b16 %v2793
        %v2810 = vunpack.c.l.b16 %v2794
        %v2811 = vunpack.c.l.b16 %v2795
        %v2812 = vunpack.c.l.b16 %v2796
        %v2813 = vunpack.c.l.b16 %v2797
        %v2814 = vunpack.c.l.b16 %v2798
        %v2815 = vunpack.c.l.b16 %v2799
        %v2816 = vpack.c.b16 %v2809, %v2808
        %v2817 = vpack.c.b16 %v2811, %v2810
        %v2818 = vpack.c.b16 %v2813, %v2812
        %v2819 = vpack.c.b16 %v2815, %v2814
        %2820 = vrot.lane.b32.xlu0 %v2650, 112
        %v2821 = vpop.permute.xlu0 %2820
        %v2824 = vsel %vm2651, %v2816, 0
        %v2827 = vsel %vm2651, %v2817, 0
        %v2830 = vsel %vm2651, %v2818, 0
        %v2833 = vsel %vm2651, %v2819, 0
        %2835 = vmatpush.bf16.msra.mxu0 0
        %2836 = vmatpush.bf16.msra.mxu0 0
        %2837 = vmatpush.bf16.msra.mxu0 0
        %2838 = vmatpush.bf16.msra.mxu0 0
        %2839 = vmatpush.bf16.msra.mxu0 0
        %2840 = vmatpush.bf16.msra.mxu0 0
        %2841 = vmatpush.bf16.msra.mxu0 0
        %2842 = vmatpush.bf16.msra.mxu0 %v2821
        %2843 = vmatmul.bf16.gmra.mxu0 %v2824
        %v2844 = vpop.f32.mrf.mxu0
        %v2845 = vadd.f32 0.0, %v2844
        %v2846 = vpop.f32.mrf.mxu0
        %v2847 = vadd.f32 0.0, %v2846
        %2848 = vmatmul.bf16.gmra.mxu0 %v2827
        %v2849 = vpop.f32.mrf.mxu0
        %v2850 = vadd.f32 0.0, %v2849
        %v2851 = vpop.f32.mrf.mxu0
        %v2852 = vadd.f32 0.0, %v2851
        %2853 = vmatmul.bf16.gmra.mxu0 %v2830
        %v2854 = vpop.f32.mrf.mxu0
        %v2855 = vadd.f32 0.0, %v2854
        %v2856 = vpop.f32.mrf.mxu0
        %v2857 = vadd.f32 0.0, %v2856
        %2858 = vmatmul.bf16.gmra.mxu0 %v2833
        %v2859 = vpop.f32.mrf.mxu0
        %v2860 = vadd.f32 0.0, %v2859
        %v2861 = vpop.f32.mrf.mxu0
        %v2862 = vadd.f32 0.0, %v2861
        %2863 = vdwg.mxu0
        %v2864 = vsel %vm2651, %v2845, 0.0
        %v2865 = vsel %vm2651, %v2847, 0.0
        %v2866 = vadd.f32 %v2864, %v2865
        %v2867 = vsel %vm2651, %v2850, 0.0
        %v2868 = vadd.f32 %v2866, %v2867
        %v2869 = vsel %vm2651, %v2852, 0.0
        %v2870 = vadd.f32 %v2868, %v2869
        %v2871 = vsel %vm2651, %v2855, 0.0
        %v2872 = vadd.f32 %v2870, %v2871
        %v2873 = vsel %vm2651, %v2857, 0.0
        %v2874 = vadd.f32 %v2872, %v2873
        %v2875 = vsel %vm2651, %v2860, 0.0
        %v2876 = vadd.f32 %v2874, %v2875
        %v2877 = vsel %vm2651, %v2862, 0.0
        %v2878 = vadd.f32 %v2876, %v2877
        %v2879 = vrot.slane %v2878, 4
        %v2880 = vadd.f32 %v2878, %v2879
        %v2881 = vrot.slane %v2880, 2
        %v2882 = vadd.f32 %v2880, %v2881
        %v2883 = vrot.slane %v2882, 1
        %v2884 = vadd.f32 %v2882, %v2883
        %v2885 = vrcp.pop 64.0
        %v2886 = vmul.f32 64.0, %v2885
        %v2887 = vsub.f32 1.0, %v2886
        %v2888 = vmul.f32 %v2885, %v2887
        %v2889 = vadd.f32 %v2885, %v2888
        %vm2890 = vweird.f32 %v2885
        %v2891 = vsel %vm2890, %v2885, %v2889
        %v2892 = vmul.f32 %v2884, %v2891
        %s2893 = scalar_lea.vmem %s1212, 16
        %v2894 = vld [vmem:[%s2893] sm:$0xf]
        %v2895 = vld [vmem:[%s2893 + $0x4] sm:$0xf]
        %v2896 = vld [vmem:[%s2893 + $0x8] sm:$0xf]
        %v2897 = vld [vmem:[%s2893 + $0xc] sm:$0xf]
        %v2902 = vunpack.c.l.b16 %v2894
        %v2903 = vunpack.c.l.b16 %v2895
        %v2904 = vunpack.c.l.b16 %v2896
        %v2905 = vunpack.c.l.b16 %v2897
        %v2906 = vpack.c.b16 %v2903, %v2902
        %v2907 = vpack.c.b16 %v2905, %v2904
        %2910 = vmatpush.bf16.msra.mxu0 0
        %2911 = vmatpush.bf16.msra.mxu0 0
        %2912 = vmatpush.bf16.msra.mxu0 0
        %2913 = vmatpush.bf16.msra.mxu0 0
        %2914 = vmatpush.bf16.msra.mxu0 0
        %2915 = vmatpush.bf16.msra.mxu0 0
        %2916 = vmatpush.bf16.msra.mxu0 %v2907
        %2917 = vmatpush.bf16.msra.mxu0 %v2906
        %2918 = vmatmul.bf16.gmra.mxu0 %v2539
        %v2919 = vpop.f32.mrf.mxu0
        %v2920 = vadd.f32 0.0, %v2919
        %v2921 = vpop.f32.mrf.mxu0
        %v2922 = vadd.f32 0.0, %v2921
        %2923 = vmatmul.bf16.gmra.mxu0 %v2542
        %v2924 = vpop.f32.mrf.mxu0
        %v2925 = vadd.f32 0.0, %v2924
        %v2926 = vpop.f32.mrf.mxu0
        %v2927 = vadd.f32 0.0, %v2926
        %2928 = vmatmul.bf16.gmra.mxu0 %v2545
        %v2929 = vpop.f32.mrf.mxu0
        %v2930 = vadd.f32 0.0, %v2929
        %v2931 = vpop.f32.mrf.mxu0
        %v2932 = vadd.f32 0.0, %v2931
        %2933 = vmatmul.bf16.gmra.mxu0 %v2548
        %v2934 = vpop.f32.mrf.mxu0
        %v2935 = vadd.f32 0.0, %v2934
        %v2936 = vpop.f32.mrf.mxu0
        %v2937 = vadd.f32 0.0, %v2936
        %2938 = vdwg.mxu0
        %s2939 = scalar_lea.vmem %s1217, 16
        %v2940 = vld [vmem:[%s2939] sm:$0xf]
        %v2941 = vld [vmem:[%s2939 + $0x4] sm:$0xf]
        %v2942 = vld [vmem:[%s2939 + $0x8] sm:$0xf]
        %v2943 = vld [vmem:[%s2939 + $0xc] sm:$0xf]
        %v2948 = vunpack.c.l.b16 %v2940
        %v2949 = vunpack.c.l.b16 %v2941
        %v2950 = vunpack.c.l.b16 %v2942
        %v2951 = vunpack.c.l.b16 %v2943
        %v2952 = vpack.c.b16 %v2949, %v2948
        %v2953 = vpack.c.b16 %v2951, %v2950
        %2956 = vmatpush.bf16.msra.mxu0 0
        %2957 = vmatpush.bf16.msra.mxu0 0
        %2958 = vmatpush.bf16.msra.mxu0 0
        %2959 = vmatpush.bf16.msra.mxu0 0
        %2960 = vmatpush.bf16.msra.mxu0 0
        %2961 = vmatpush.bf16.msra.mxu0 0
        %2962 = vmatpush.bf16.msra.mxu0 %v2953
        %2963 = vmatpush.bf16.msra.mxu0 %v2952
        %2964 = vmatmul.bf16.gmra.mxu0 %v2600
        %v2965 = vpop.f32.mrf.mxu0
        %v2966 = vadd.f32 0.0, %v2965
        %v2967 = vpop.f32.mrf.mxu0
        %v2968 = vadd.f32 0.0, %v2967
        %2969 = vdwg.mxu0
        %v2970 = vpack.c.bf16 %v2920, %v2920
        %v2971 = vpack.c.bf16 %v2922, %v2922
        %v2972 = vpack.c.bf16 %v2925, %v2925
        %v2973 = vpack.c.bf16 %v2927, %v2927
        %v2974 = vpack.c.bf16 %v2930, %v2930
        %v2975 = vpack.c.bf16 %v2932, %v2932
        %v2976 = vpack.c.bf16 %v2935, %v2935
        %v2977 = vpack.c.bf16 %v2937, %v2937
        %v2978 = vpack.c.bf16 %v2966, %v2966
        %v2979 = vpack.c.bf16 %v2968, %v2968
        %v2988 = vunpack.c.l.b16 %v2970
        %v2989 = vunpack.c.l.b16 %v2971
        %v2990 = vunpack.c.l.b16 %v2972
        %v2991 = vunpack.c.l.b16 %v2973
        %v2992 = vunpack.c.l.b16 %v2974
        %v2993 = vunpack.c.l.b16 %v2975
        %v2994 = vunpack.c.l.b16 %v2976
        %v2995 = vunpack.c.l.b16 %v2977
        %v2996 = vpack.c.b16 %v2989, %v2988
        %v2997 = vpack.c.b16 %v2991, %v2990
        %v2998 = vpack.c.b16 %v2993, %v2992
        %v2999 = vpack.c.b16 %v2995, %v2994
        %v3002 = vunpack.c.l.b16 %v2978
        %v3003 = vunpack.c.l.b16 %v2979
        %v3004 = vpack.c.b16 %v3003, %v3002
        %v3006 = vsel %vm2651, %v2996, 0
        %v3009 = vsel %vm2651, %v2997, 0
        %v3012 = vsel %vm2651, %v2998, 0
        %v3015 = vsel %vm2651, %v2999, 0
        %v3018 = vsel %vm2651, %v3004, 0
        %3020 = vmatpush.bf16.xpose.msra.mxu0 0
        %3021 = vmatpush.bf16.xpose.msra.mxu0 0
        %3022 = vmatpush.bf16.xpose.msra.mxu0 0
        %3023 = vmatpush.bf16.xpose.msra.mxu0 0
        %3024 = vmatpush.bf16.xpose.msra.mxu0 0
        %3025 = vmatpush.bf16.xpose.msra.mxu0 0
        %3026 = vmatpush.bf16.xpose.msra.mxu0 0
        %3027 = vmatpush.bf16.xpose.msra.mxu0 %v3018
        %3028 = vmatmul.bf16.gmra.mxu0 %v3006
        %v3029 = vpop.f32.mrf.mxu0
        %v3030 = vadd.f32 %v1275, %v3029
        %v3031 = vpop.f32.mrf.mxu0
        %v3032 = vadd.f32 %v1275, %v3031
        %3033 = vmatmul.bf16.gmra.mxu0 %v3009
        %v3034 = vpop.f32.mrf.mxu0
        %v3035 = vadd.f32 %v1275, %v3034
        %v3036 = vpop.f32.mrf.mxu0
        %v3037 = vadd.f32 %v1275, %v3036
        %3038 = vmatmul.bf16.gmra.mxu0 %v3012
        %v3039 = vpop.f32.mrf.mxu0
        %v3040 = vadd.f32 %v1275, %v3039
        %v3041 = vpop.f32.mrf.mxu0
        %v3042 = vadd.f32 %v1275, %v3041
        %3043 = vmatmul.bf16.gmra.mxu0 %v3015
        %v3044 = vpop.f32.mrf.mxu0
        %v3045 = vadd.f32 %v1275, %v3044
        %v3046 = vpop.f32.mrf.mxu0
        %v3047 = vadd.f32 %v1275, %v3046
        %3048 = vdwg.mxu0
        %v3049 = vsel %vm2651, %v3030, -inf
        %3050 = vmax.xlane.f32.xlu0 %v3049
        %v3051 = vpop.xlane.xlu0 %3050
        %v3052 = vsel %vm2651, %v3032, -inf
        %3053 = vmax.xlane.f32.xlu0 %v3052
        %v3054 = vpop.xlane.xlu0 %3053
        %v3055 = vsel %vm2651, %v3035, -inf
        %3056 = vmax.xlane.f32.xlu0 %v3055
        %v3057 = vpop.xlane.xlu0 %3056
        %v3058 = vsel %vm2651, %v3037, -inf
        %3059 = vmax.xlane.f32.xlu0 %v3058
        %v3060 = vpop.xlane.xlu0 %3059
        %v3061 = vsel %vm2651, %v3040, -inf
        %3062 = vmax.xlane.f32.xlu0 %v3061
        %v3063 = vpop.xlane.xlu0 %3062
        %v3064 = vsel %vm2651, %v3042, -inf
        %3065 = vmax.xlane.f32.xlu0 %v3064
        %v3066 = vpop.xlane.xlu0 %3065
        %v3067 = vsel %vm2651, %v3045, -inf
        %3068 = vmax.xlane.f32.xlu0 %v3067
        %v3069 = vpop.xlane.xlu0 %3068
        %v3070 = vsel %vm2651, %v3047, -inf
        %3071 = vmax.xlane.f32.xlu0 %v3070
        %v3072 = vpop.xlane.xlu0 %3071
        %v3073 = vsub.f32 %v3030, %v3051
        %v3074 = vsub.f32 %v3032, %v3054
        %v3075 = vsub.f32 %v3035, %v3057
        %v3076 = vsub.f32 %v3037, %v3060
        %v3077 = vsub.f32 %v3040, %v3063
        %v3078 = vsub.f32 %v3042, %v3066
        %v3079 = vsub.f32 %v3045, %v3069
        %v3080 = vsub.f32 %v3047, %v3072
        %v3081 = vmul.f32 %v3073, 1.442695
        %v3082 = vpow.pop %v3081
        %v3083 = vmul.f32 %v3074, 1.442695
        %v3084 = vpow.pop %v3083
        %v3085 = vmul.f32 %v3075, 1.442695
        %v3086 = vpow.pop %v3085
        %v3087 = vmul.f32 %v3076, 1.442695
        %v3088 = vpow.pop %v3087
        %v3089 = vmul.f32 %v3077, 1.442695
        %v3090 = vpow.pop %v3089
        %v3091 = vmul.f32 %v3078, 1.442695
        %v3092 = vpow.pop %v3091
        %v3093 = vmul.f32 %v3079, 1.442695
        %v3094 = vpow.pop %v3093
        %v3095 = vmul.f32 %v3080, 1.442695
        %v3096 = vpow.pop %v3095
        %v3097 = vsel %vm2651, %v3082, 0.0
        %3098 = vadd.xlane.f32.xlu0 %v3097
        %v3099 = vpop.xlane.xlu0 %3098
        %v3100 = vsel %vm2651, %v3084, 0.0
        %3101 = vadd.xlane.f32.xlu0 %v3100
        %v3102 = vpop.xlane.xlu0 %3101
        %v3103 = vsel %vm2651, %v3086, 0.0
        %3104 = vadd.xlane.f32.xlu0 %v3103
        %v3105 = vpop.xlane.xlu0 %3104
        %v3106 = vsel %vm2651, %v3088, 0.0
        %3107 = vadd.xlane.f32.xlu0 %v3106
        %v3108 = vpop.xlane.xlu0 %3107
        %v3109 = vsel %vm2651, %v3090, 0.0
        %3110 = vadd.xlane.f32.xlu0 %v3109
        %v3111 = vpop.xlane.xlu0 %3110
        %v3112 = vsel %vm2651, %v3092, 0.0
        %3113 = vadd.xlane.f32.xlu0 %v3112
        %v3114 = vpop.xlane.xlu0 %3113
        %v3115 = vsel %vm2651, %v3094, 0.0
        %3116 = vadd.xlane.f32.xlu0 %v3115
        %v3117 = vpop.xlane.xlu0 %3116
        %v3118 = vsel %vm2651, %v3096, 0.0
        %3119 = vadd.xlane.f32.xlu0 %v3118
        %v3120 = vpop.xlane.xlu0 %3119
        %v3121 = vrcp.pop %v3099
        %v3122 = vrcp.pop %v3102
        %v3123 = vrcp.pop %v3105
        %v3124 = vrcp.pop %v3108
        %v3125 = vrcp.pop %v3111
        %v3126 = vrcp.pop %v3114
        %v3127 = vrcp.pop %v3117
        %v3128 = vrcp.pop %v3120
        %v3129 = vmul.f32 %v3082, %v3121
        %v3130 = vmul.f32 %v3084, %v3122
        %v3131 = vmul.f32 %v3086, %v3123
        %v3132 = vmul.f32 %v3088, %v3124
        %v3133 = vmul.f32 %v3090, %v3125
        %v3134 = vmul.f32 %v3092, %v3126
        %v3135 = vmul.f32 %v3094, %v3127
        %v3136 = vmul.f32 %v3096, %v3128
        %v3137 = vadd.f32 %v2784, %v3129
        %v3138 = vadd.f32 %v2785, %v3130
        %v3139 = vadd.f32 %v2786, %v3131
        %v3140 = vadd.f32 %v2787, %v3132
        %v3141 = vadd.f32 %v2788, %v3133
        %v3142 = vadd.f32 %v2789, %v3134
        %v3143 = vadd.f32 %v2790, %v3135
        %v3144 = vadd.f32 %v2791, %v3136
        %v3145 = vpack.c.bf16 %v3129, %v3129
        %v3146 = vpack.c.bf16 %v3130, %v3130
        %v3147 = vpack.c.bf16 %v3131, %v3131
        %v3148 = vpack.c.bf16 %v3132, %v3132
        %v3149 = vpack.c.bf16 %v3133, %v3133
        %v3150 = vpack.c.bf16 %v3134, %v3134
        %v3151 = vpack.c.bf16 %v3135, %v3135
        %v3152 = vpack.c.bf16 %v3136, %v3136
        %v3161 = vunpack.c.l.b16 %v3145
        %v3162 = vunpack.c.l.b16 %v3146
        %v3163 = vunpack.c.l.b16 %v3147
        %v3164 = vunpack.c.l.b16 %v3148
        %v3165 = vunpack.c.l.b16 %v3149
        %v3166 = vunpack.c.l.b16 %v3150
        %v3167 = vunpack.c.l.b16 %v3151
        %v3168 = vunpack.c.l.b16 %v3152
        %v3169 = vpack.c.b16 %v3162, %v3161
        %v3170 = vpack.c.b16 %v3164, %v3163
        %v3171 = vpack.c.b16 %v3166, %v3165
        %v3172 = vpack.c.b16 %v3168, %v3167
        %3173 = vrot.lane.b32.xlu0 %v3004, 112
        %v3174 = vpop.permute.xlu0 %3173
        %v3177 = vsel %vm2651, %v3169, 0
        %v3180 = vsel %vm2651, %v3170, 0
        %v3183 = vsel %vm2651, %v3171, 0
        %v3186 = vsel %vm2651, %v3172, 0
        %3188 = vmatpush.bf16.msra.mxu0 0
        %3189 = vmatpush.bf16.msra.mxu0 0
        %3190 = vmatpush.bf16.msra.mxu0 0
        %3191 = vmatpush.bf16.msra.mxu0 0
        %3192 = vmatpush.bf16.msra.mxu0 0
        %3193 = vmatpush.bf16.msra.mxu0 0
        %3194 = vmatpush.bf16.msra.mxu0 0
        %3195 = vmatpush.bf16.msra.mxu0 %v3174
        %3196 = vmatmul.bf16.gmra.mxu0 %v3177
        %v3197 = vpop.f32.mrf.mxu0
        %v3198 = vadd.f32 0.0, %v3197
        %v3199 = vpop.f32.mrf.mxu0
        %v3200 = vadd.f32 0.0, %v3199
        %3201 = vmatmul.bf16.gmra.mxu0 %v3180
        %v3202 = vpop.f32.mrf.mxu0
        %v3203 = vadd.f32 0.0, %v3202
        %v3204 = vpop.f32.mrf.mxu0
        %v3205 = vadd.f32 0.0, %v3204
        %3206 = vmatmul.bf16.gmra.mxu0 %v3183
        %v3207 = vpop.f32.mrf.mxu0
        %v3208 = vadd.f32 0.0, %v3207
        %v3209 = vpop.f32.mrf.mxu0
        %v3210 = vadd.f32 0.0, %v3209
        %3211 = vmatmul.bf16.gmra.mxu0 %v3186
        %v3212 = vpop.f32.mrf.mxu0
        %v3213 = vadd.f32 0.0, %v3212
        %v3214 = vpop.f32.mrf.mxu0
        %v3215 = vadd.f32 0.0, %v3214
        %3216 = vdwg.mxu0
        %v3217 = vsel %vm2651, %v3198, 0.0
        %v3218 = vsel %vm2651, %v3200, 0.0
        %v3219 = vadd.f32 %v3217, %v3218
        %v3220 = vsel %vm2651, %v3203, 0.0
        %v3221 = vadd.f32 %v3219, %v3220
        %v3222 = vsel %vm2651, %v3205, 0.0
        %v3223 = vadd.f32 %v3221, %v3222
        %v3224 = vsel %vm2651, %v3208, 0.0
        %v3225 = vadd.f32 %v3223, %v3224
        %v3226 = vsel %vm2651, %v3210, 0.0
        %v3227 = vadd.f32 %v3225, %v3226
        %v3228 = vsel %vm2651, %v3213, 0.0
        %v3229 = vadd.f32 %v3227, %v3228
        %v3230 = vsel %vm2651, %v3215, 0.0
        %v3231 = vadd.f32 %v3229, %v3230
        %v3232 = vrot.slane %v3231, 4
        %v3233 = vadd.f32 %v3231, %v3232
        %v3234 = vrot.slane %v3233, 2
        %v3235 = vadd.f32 %v3233, %v3234
        %v3236 = vrot.slane %v3235, 1
        %v3237 = vadd.f32 %v3235, %v3236
        %v3238 = vmul.f32 %v3237, %v2891
        %3240 = vrot.lane.b32.xlu0 %v3238, 16
        %v3241 = vpop.permute.xlu0 %3240
        %v3243 = vsel %vm2651, %v2892, %v3241
        %v3244 = vpack.c.bf16 %v3243, %v3243
        %v3249 = vunpack.c.l.b16 %v1261
        %v3250 = vunpack.c.l.b16 %v1262
        %v3251 = vunpack.c.l.b16 %v1263
        %v3252 = vunpack.c.l.b16 %v1264
        %v3253 = vpack.c.b16 %v3250, %v3249
        %v3254 = vpack.c.b16 %v3252, %v3251
        %v3258 = vsel %vm1284, %v3244, 0
        %3260 = vmatpush.bf16.msra.mxu0 0
        %3261 = vmatpush.bf16.msra.mxu0 0
        %3262 = vmatpush.bf16.msra.mxu0 0
        %3263 = vmatpush.bf16.msra.mxu0 0
        %3264 = vmatpush.bf16.msra.mxu0 0
        %3265 = vmatpush.bf16.msra.mxu0 0
        %3266 = vmatpush.bf16.msra.mxu0 %v3254
        %3267 = vmatpush.bf16.msra.mxu0 %v3253
        %3268 = vmatmul.bf16.gmra.mxu0 %v3258
        %v3269 = vpop.f32.mrf.mxu0
        %v3270 = vadd.f32 %v1236, %v3269
        %v3271 = vpop.f32.mrf.mxu0
        %3272 = vdwg.mxu0
        %vm3273 = vcmask 73728
        %3274 = vst.msk [vmem:[%s1163] sm:$0x1] %vm3273, %v3270
        %3275 = vxpose.xlu0.b32.start [1/16] %v3137, 128
        %3276 = vxpose.xlu0.b32.cont [2/16] %v3138, 128
        %3277 = vxpose.xlu0.b32.cont [3/16] %v3139, 128
        %3278 = vxpose.xlu0.b32.cont [4/16] %v3140, 128
        %3279 = vxpose.xlu0.b32.cont [5/16] %v3141, 128
        %3280 = vxpose.xlu0.b32.cont [6/16] %v3142, 128
        %3281 = vxpose.xlu0.b32.cont [7/16] %v3143, 128
        %3282 = vxpose.xlu0.b32.cont [8/16] %v3144, 128
        %3283 = vxpose.xlu0.b32.cont [9/16] 0.0, 128
        %3284 = vxpose.xlu0.b32.cont [10/16] 0.0, 128
        %3285 = vxpose.xlu0.b32.cont [11/16] 0.0, 128
        %3286 = vxpose.xlu0.b32.cont [12/16] 0.0, 128
        %3287 = vxpose.xlu0.b32.cont [13/16] 0.0, 128
        %3288 = vxpose.xlu0.b32.cont [14/16] 0.0, 128
        %3289 = vxpose.xlu0.b32.cont [15/16] 0.0, 128
        %3290 = vxpose.xlu0.b32.end [16/16] 0.0, 128
        %v3291 = vpop.trf.xlu0
        %v3292 = vpop.trf.xlu0
        %v3293 = vpop.trf.xlu0
        %v3294 = vpop.trf.xlu0
        %v3295 = vpop.trf.xlu0
        %v3296 = vpop.trf.xlu0
        %v3297 = vpop.trf.xlu0
        %v3298 = vpop.trf.xlu0
        %v3299 = vpop.trf.xlu0
        %v3300 = vpop.trf.xlu0
        %v3301 = vpop.trf.xlu0
        %v3302 = vpop.trf.xlu0
        %v3303 = vpop.trf.xlu0
        %v3304 = vpop.trf.xlu0
        %v3305 = vpop.trf.xlu0
        %v3306 = vpop.trf.xlu0
        %v3307 = vmul.f32 %v3291, 0.5
        %v3308 = vmul.f32 %v3292, 0.5
        %3309 = vst.msk [vmem:[%s1170] sm:$0xff] %vm1697, %v3307
        %3310 = vst.msk [vmem:[%s1170 + $0x8] sm:$0xff] %vm1697, %v3308
        %s3311 = sand.u32 %s625, 1
        %s3312 = scalar_lea.sflag [#allocation4], %s3311
        %s3313 = sand.u32 %s625, 1
        %s3314 = scalar_lea.vmem [#allocation16], %s3313
        %s3315 = sand.u32 %s653, 1
        %s3316 = scalar_lea.sflag [#allocation18], %s3315
        %s3317 = sand.u32 %s653, 1
        %s3318 = smul.addr %s3317, 16
        %s3319 = scalar_lea.vmem [#allocation17], %s3318
        // Predicated region
        $region137: #{tpu_custom_call.1} parent=103 // pred_check
          %p3320 = pneg %p635
        $region138: #{tpu_custom_call.1} parent=103 // pred_check_branch
          %3322 = sbr.rel (%p3320) target = $region140
        $region139: #{tpu_custom_call.1} parent=103 // pred_region
          %3324 = vsyncadd %s3312, 0
          %s3325 = smul.addr %s60, 2
          %s3326 = sadd.s32 %s59, %s3325
          %s3327 = scalar_lea.hbm %s21, %s3326
          %s3329 = sshll.u32 %s3314, 4
          %s3330 = int_to_ptr.vmem [resolvable:$true] %s3329
          %s3331 = sshll.u32 %s3327, 4
          %s3332 = int_to_ptr.hbm [resolvable:$true] %s3331
          %3334 = dma.vmem_to_hbm [thread:$0]  %s3330, 16, %s3332, %s3312
        $region140: #{tpu_custom_call.1} parent=103 // pred_fallthru
          _
        // Predicated region
        $region141: #{tpu_custom_call.1} parent=103 // pred_check
          %p3335 = pneg %p663
        $region142: #{tpu_custom_call.1} parent=103 // pred_check_branch
          %3337 = sbr.rel (%p3335) target = $region144
        $region143: #{tpu_custom_call.1} parent=103 // pred_region
          %3339 = vsyncadd %s3316, 0
          %s3340 = smul.addr %s59, 2
          %s3341 = smul.addr %s60, 4
          %s3342 = sadd.s32 %s3340, %s3341
          %s3343 = smul.addr %s3342, 8
          %s3344 = scalar_lea.hbm %s22, %s3343
          %s3345 = sshll.u32 %s3319, 4
          %s3346 = int_to_ptr.vmem [resolvable:$true] %s3345
          %s3347 = sshll.u32 %s3344, 4
          %s3348 = int_to_ptr.hbm [resolvable:$true] %s3347
          %3353 = dma.vmem_to_hbm [thread:$0]  %s3346, 256, %s3348, %s3316, 128, 128, 8
        $region144: #{tpu_custom_call.1} parent=103 // pred_fallthru
          _
      $region104: #{tpu_custom_call.1} parent=5 // pred_fallthru
        _
      %p3354 = scmp.le.s32.totalorder 2, %s50
      // Predicated region
      $region145: #{tpu_custom_call.1} parent=5 // pred_check
        %p3355 = pneg %p3354
      $region146: #{tpu_custom_call.1} parent=5 // pred_check_branch
        %3357 = sbr.rel (%p3355) target = $region148
      $region147: #{tpu_custom_call.1} parent=5 // pred_region
        %s3358 = ssub.s32 %s50, 2
        // Predicated region
        $region149: #{tpu_custom_call.1} parent=147 // pred_check
          %p3359 = pneg %p641
        $region150: #{tpu_custom_call.1} parent=147 // pred_check_branch
          %3361 = sbr.rel (%p3359) target = $region152
        $region151: #{tpu_custom_call.1} parent=147 // pred_region
          %s3362 = sand.u32 %s626, 1
          %s3363 = scalar_lea.sflag [#allocation4], %s3362
          %s3364 = sand.u32 %s626, 1
          %s3365 = scalar_lea.vmem [#allocation16], %s3364
          %3367 = dma.done %s3363, 16
        $region152: #{tpu_custom_call.1} parent=147 // pred_fallthru
          _
        // Predicated region
        $region153: #{tpu_custom_call.1} parent=147 // pred_check
          %p3368 = pneg %p669
        $region154: #{tpu_custom_call.1} parent=147 // pred_check_branch
          %3370 = sbr.rel (%p3368) target = $region156
        $region155: #{tpu_custom_call.1} parent=147 // pred_region
          %s3371 = sand.u32 %s654, 1
          %s3372 = scalar_lea.sflag [#allocation18], %s3371
          %s3373 = sand.u32 %s654, 1
          %s3374 = smul.addr %s3373, 16
          %s3375 = scalar_lea.vmem [#allocation17], %s3374
          %3377 = dma.done %s3372, 256
        $region156: #{tpu_custom_call.1} parent=147 // pred_fallthru
          _
      $region148: #{tpu_custom_call.1} parent=5 // pred_fallthru
        _
    $region6: #{tpu_custom_call.1} parent=1 // loop_footer
      %s54 = sadd.s32 1, %s50
    $region7: #{tpu_custom_call.1} parent=1 // loop_footer_branch
      %49 = sbr.rel target = $region3
    $region8: #{tpu_custom_call.1} parent=1 // loop_exit
      _
    %3378 = vsyncpa [#allocation3], 1
    %s3379 = scalar_lea.sflag [#allocation3], 1
    %3380 = vsyncpa %s3379, 1
    %3381 = vsyncpa [#allocation6], 1
    %s3382 = scalar_lea.sflag [#allocation6], 1
    %3383 = vsyncpa %s3382, 1
    %3384 = vsyncpa [#allocation9], 1
    %s3385 = scalar_lea.sflag [#allocation9], 1
    %3386 = vsyncpa %s3385, 1
    %3387 = vsyncpa [#allocation12], 1
    %s3388 = scalar_lea.sflag [#allocation12], 1
    %3389 = vsyncpa %s3388, 1
    %3390 = vsyncpa [#allocation15], 1
    %s3391 = scalar_lea.sflag [#allocation15], 1
    %3392 = vsyncpa %s3391, 1
    %3393 = vsyncpa [#allocation4], 1
    %s3394 = scalar_lea.sflag [#allocation4], 1
    %3395 = vsyncpa %s3394, 1
    %3396 = vsyncpa [#allocation18], 1
    %s3397 = scalar_lea.sflag [#allocation18], 1
    %3398 = vsyncpa %s3397, 1

</llo_original>
